<compile_context>
chip_gen: v6e
topology: v6e:2x2x1
jax: 0.10.0
libtpu: 0.0.40
codegen_flags: <defaults>
</compile_context>

<pallas_src>
import math

import jax
import jax.numpy as jnp
from jax import lax
from jax.experimental import pallas as pl
from jax.experimental.pallas import tpu as pltpu


def _round_up(x, m):
    return ((x + m - 1) // m) * m


def _discriminator_kernel(x_ref, w1_ref, b1_ref, w2_ref, b2_ref, w3_ref, b3_ref,
                          o_ref):
    """One batch tile of the forward pass.

    x:  (TB, D)    f32 (cast to bf16 in-kernel for the MXU)
    w1: (D, 512)   bf16    b1: (1, 512) f32
    w2: (512, 256) bf16    b2: (1, 256) f32
    w3: (1, 256)   bf16    b3: (1, 1)   f32
    o:  (1, TB)    f32 (lane-dense row; wrapper reshapes back to (N, 1))
    """
    x = x_ref[...].astype(jnp.bfloat16)

    # Layer 1: Linear (bf16 MXU, f32 accumulate) + LeakyReLU(0.2).
    h1 = jnp.dot(x, w1_ref[...], preferred_element_type=jnp.float32) + b1_ref[...]
    h1 = jnp.maximum(h1, 0.2 * h1)

    # Layer 2: same pattern.
    h2 = jnp.dot(h1.astype(jnp.bfloat16), w2_ref[...],
                 preferred_element_type=jnp.float32) + b2_ref[...]
    h2 = jnp.maximum(h2, 0.2 * h2)

    # Layer 3 (256 -> 1): contract the 256 axis with the batch axis landing on
    # lanes, i.e. z[0, b] = sum_k w3[0, k] * h2[b, k].  This produces a
    # lane-dense (1, TB) row directly (unmasked stores) instead of a 1-lane
    # (TB, 1) column.
    z = lax.dot_general(w3_ref[...], h2.astype(jnp.bfloat16),
                        dimension_numbers=(((1,), (1,)), ((), ())),
                        preferred_element_type=jnp.float32) + b3_ref[...]

    # Sigmoid: exp goes to the EUP; the divide is only (1, TB).
    o_ref[...] = 1.0 / (1.0 + jnp.exp(-z))


def _pick_batch_tile(n, block_batch):
    tb = _round_up(min(max(n, 16), block_batch), 16)
    # Guarantee >=2 grid steps for larger batches so the "parallel" batch axis
    # can shard across both TensorCores on v7x (no-op on single-TC v5e/v6e).
    if n >= 512 and -(-n // tb) < 2:
        tb = max(256, _round_up(-(-n // 2), 256))
    return tb


def _vmem_footprint_bytes(tb, d):
    # Conservative estimate: weights possibly double-buffered (fallback path),
    # x / out double-buffered, plus f32/bf16 intermediates.
    weights = 2 * ((d * 512 + 512 * 256 + 256) * 2 + (512 + 256 + 1) * 4)
    io = 2 * (tb * d * 4 + tb * 4)
    interm = tb * (d * 2 + 512 * 6 + 256 * 6)
    return weights + io + interm


def discriminator_forward(img, params, *, block_batch=1024):
    """img: (N, C, H, W) float32. Returns validity (N, 1) float32."""
    n = img.shape[0]
    x = img.reshape(n, -1)  # same semantics as torch .view(N, -1) on contiguous NCHW
    d = x.shape[1]

    w1, b1, w2, b2, w3, b3 = params
    # One-time casts of the small resident weights; x stays f32 and is cast to
    # bf16 inside the kernel (no extra HBM pass over the activation).
    w1 = w1.astype(jnp.bfloat16)
    w2 = w2.astype(jnp.bfloat16)
    b1 = b1.reshape(1, 512).astype(jnp.float32)
    b2 = b2.reshape(1, 256).astype(jnp.float32)
    w3_row = w3.reshape(1, 256).astype(jnp.bfloat16)
    b3 = b3.reshape(1, 1).astype(jnp.float32)

    tb = _pick_batch_tile(n, block_batch)

    # Generation-aware VMEM budget (v5e/v6e: 128 MiB, v7x: 64 MiB per core).
    try:
        vmem_cap = int(getattr(pltpu.get_tpu_info(), "vmem_capacity_bytes",
                               64 << 20))
    except Exception:
        vmem_cap = 64 << 20
    budget = (vmem_cap * 3) // 4
    # Shrink the batch tile if the footprint would not fit (large D on v7x).
    # TODO(synk): for very large D (~>40k flattened features) K-tile w1 over D
    # with an f32 accumulator scratch instead of shrinking the batch tile.
    while tb > 16 and _vmem_footprint_bytes(tb, d) > budget:
        tb = max(16, _round_up(tb // 2, 16))

    num_tiles = -(-n // tb)
    vmem_bytes = int(max(16 << 20,
                         min(_vmem_footprint_bytes(tb, d) + (4 << 20), budget)))

    cost = pl.CostEstimate(
        flops=2 * n * (d * 512 + 512 * 256 + 256),
        transcendentals=n,
        bytes_accessed=(n * d * 4 + (d * 512 + 512 * 256 + 256) * 2
                        + (512 + 256 + 1) * 4 + n * 4),
    )

    def build(single_buffer_weights):
        wkw = {"pipeline_mode": pl.Buffered(1)} if single_buffer_weights else {}
        const = lambda i: (0, 0)
        in_specs = [
            pl.BlockSpec((tb, d), lambda i: (i, 0)),   # x tile (pipelined per step)
            pl.BlockSpec((d, 512), const, **wkw),      # w1 (VMEM-resident)
            pl.BlockSpec((1, 512), const, **wkw),      # b1
            pl.BlockSpec((512, 256), const, **wkw),    # w2
            pl.BlockSpec((1, 256), const, **wkw),      # b2
            pl.BlockSpec((1, 256), const, **wkw),      # w3 as a row
            pl.BlockSpec((1, 1), const, **wkw),        # b3
        ]
        return pl.pallas_call(
            _discriminator_kernel,
            out_shape=jax.ShapeDtypeStruct((num_tiles, tb), jnp.float32),
            grid=(num_tiles,),
            in_specs=in_specs,
            out_specs=pl.BlockSpec((1, tb), lambda i: (i, 0)),  # lane-dense row
            compiler_params=pltpu.CompilerParams(
                dimension_semantics=("parallel",),
                vmem_limit_bytes=vmem_bytes,
            ),
            cost_estimate=cost,
        )

    args = (x, w1, b1, w2, b2, w3_row, b3)
    try:
        out = build(True)(*args)    # single-buffer the constant-index weights
    except Exception:
        out = build(False)(*args)   # fall back to default double buffering

    # Row-major (num_tiles, tb) == batch order; drop boundary-tile garbage rows.
    return out.reshape(-1)[:n].reshape(n, 1)


def init_params(key, in_features):
    """Deterministic synthetic parameters (shapes match the torch module)."""
    k1, k2, k3, k4, k5, k6 = jax.random.split(key, 6)
    # Weights stored as (in, out) — transpose of torch's (out, in) layout.
    w1 = jax.random.normal(k1, (in_features, 512), jnp.float32) * 0.02
    b1 = jax.random.normal(k2, (1, 512), jnp.float32) * 0.02
    w2 = jax.random.normal(k3, (512, 256), jnp.float32) * 0.02
    b2 = jax.random.normal(k4, (1, 256), jnp.float32) * 0.02
    w3 = jax.random.normal(k5, (256, 1), jnp.float32) * 0.02
    b3 = jax.random.normal(k6, (1, 1), jnp.float32) * 0.02
    return (w1, b1, w2, b2, w3, b3)


def reference_forward(img, params):
    """Pure-JAX reference with identical numerics (bf16 MXU operands, f32 accumulate)."""
    w1, b1, w2, b2, w3, b3 = params
    x = img.reshape(img.shape[0], -1).astype(jnp.bfloat16)
    h1 = jnp.dot(x, w1.astype(jnp.bfloat16),
                 preferred_element_type=jnp.float32) + b1.reshape(1, 512)
    h1 = jnp.maximum(h1, 0.2 * h1)
    h2 = jnp.dot(h1.astype(jnp.bfloat16), w2.astype(jnp.bfloat16),
                 preferred_element_type=jnp.float32) + b2.reshape(1, 256)
    h2 = jnp.maximum(h2, 0.2 * h2)
    z = jnp.dot(h2.astype(jnp.bfloat16), w3.astype(jnp.bfloat16),
                preferred_element_type=jnp.float32) + b3.reshape(1, 1)
    return jax.nn.sigmoid(z)


if __name__ == "__main__":
    key = jax.random.PRNGKey(0)
    k_img, k_par = jax.random.split(key)

    # img_shape = (C, H, W) = (4, 16, 16) -> in_features = 1024
    img_shape = (4, 16, 16)
    batch = 2
    img = jax.random.normal(k_img, (batch,) + img_shape, jnp.float32)

    params = init_params(k_par, math.prod(img_shape))

    validity = discriminator_forward(img, params)
    validity = jax.block_until_ready(validity)

    ref = reference_forward(img, params)
    assert validity.shape == (batch, 1)
    max_err = float(jnp.max(jnp.abs(validity - ref)))
    assert jnp.allclose(validity, ref, atol=2e-4, rtol=2e-4), (
        f"mismatch: max err {max_err}")

    print("KERNEL_OK")
</pallas_src>

<mosaic_0001>
module attributes {stable_mosaic.version = 11 : i64} {
  func.func @_discriminator_kernel(%arg0: i32, %arg1: memref<16x1024xf32, #tpu.memory_space<vmem>>, %arg2: memref<1024x512xbf16, #tpu.memory_space<vmem>>, %arg3: memref<1x512xf32, #tpu.memory_space<vmem>>, %arg4: memref<512x256xbf16, #tpu.memory_space<vmem>>, %arg5: memref<1x256xf32, #tpu.memory_space<vmem>>, %arg6: memref<1x256xbf16, #tpu.memory_space<vmem>>, %arg7: memref<1x1xf32, #tpu.memory_space<vmem>>, %arg8: memref<1x16xf32, #tpu.memory_space<vmem>>) attributes {dimension_semantics = [#tpu.dimension_semantics<parallel>], iteration_bounds = array<i64: 1>, scalar_prefetch = 0 : i64, scratch_operands = 0 : i64, tpu.core_type = #tpu.core_type<tc>, window_params = [{transform_indices = @transform_0, window_bounds = array<i64: 16, 1024>}, {pipeline_mode = #tpu.pipeline_mode<synchronous>, transform_indices = @transform_1, window_bounds = array<i64: 1024, 512>}, {pipeline_mode = #tpu.pipeline_mode<synchronous>, transform_indices = @transform_2, window_bounds = array<i64: 1, 512>}, {pipeline_mode = #tpu.pipeline_mode<synchronous>, transform_indices = @transform_3, window_bounds = array<i64: 512, 256>}, {pipeline_mode = #tpu.pipeline_mode<synchronous>, transform_indices = @transform_4, window_bounds = array<i64: 1, 256>}, {pipeline_mode = #tpu.pipeline_mode<synchronous>, transform_indices = @transform_5, window_bounds = array<i64: 1, 256>}, {pipeline_mode = #tpu.pipeline_mode<synchronous>, transform_indices = @transform_6, window_bounds = array<i64: 1, 1>}, {transform_indices = @transform_7, window_bounds = array<i64: 1, 16>}]} {
    %c0 = arith.constant 0 : index
    %c0_0 = arith.constant 0 : index
    %0 = vector.load %arg1[%c0, %c0_0] : memref<16x1024xf32, #tpu.memory_space<vmem>>, vector<16x1024xf32>
    %1 = arith.truncf %0 : vector<16x1024xf32> to vector<16x1024xbf16>
    %c0_1 = arith.constant 0 : index
    %c0_2 = arith.constant 0 : index
    %2 = vector.load %arg2[%c0_1, %c0_2] : memref<1024x512xbf16, #tpu.memory_space<vmem>>, vector<1024x512xbf16>
    %cst = arith.constant dense<0.000000e+00> : vector<16x512xf32>
    %3 = tpu.matmul %1, %2, %cst {dimension_numbers = #tpu.dot_dimension_numbers<[1], [0], [0], [1], [0, 0, 1, 1], [], []>} : vector<16x1024xbf16>, vector<1024x512xbf16>, vector<16x512xf32> -> vector<16x512xf32>
    %c0_3 = arith.constant 0 : index
    %c0_4 = arith.constant 0 : index
    %4 = vector.load %arg3[%c0_3, %c0_4] : memref<1x512xf32, #tpu.memory_space<vmem>>, vector<1x512xf32>
    %5 = vector.broadcast %4 : vector<1x512xf32> to vector<16x512xf32>
    %6 = arith.addf %3, %5 : vector<16x512xf32>
    %cst_5 = arith.constant 2.000000e-01 : f32
    %7 = vector.broadcast %cst_5 : f32 to vector<16x512xf32>
    %8 = arith.mulf %7, %6 : vector<16x512xf32>
    %9 = arith.maximumf %6, %8 : vector<16x512xf32>
    %10 = arith.truncf %9 : vector<16x512xf32> to vector<16x512xbf16>
    %c0_6 = arith.constant 0 : index
    %c0_7 = arith.constant 0 : index
    %11 = vector.load %arg4[%c0_6, %c0_7] : memref<512x256xbf16, #tpu.memory_space<vmem>>, vector<512x256xbf16>
    %cst_8 = arith.constant dense<0.000000e+00> : vector<16x256xf32>
    %12 = tpu.matmul %10, %11, %cst_8 {dimension_numbers = #tpu.dot_dimension_numbers<[1], [0], [0], [1], [0, 0, 1, 1], [], []>} : vector<16x512xbf16>, vector<512x256xbf16>, vector<16x256xf32> -> vector<16x256xf32>
    %c0_9 = arith.constant 0 : index
    %c0_10 = arith.constant 0 : index
    %13 = vector.load %arg5[%c0_9, %c0_10] : memref<1x256xf32, #tpu.memory_space<vmem>>, vector<1x256xf32>
    %14 = vector.broadcast %13 : vector<1x256xf32> to vector<16x256xf32>
    %15 = arith.addf %12, %14 : vector<16x256xf32>
    %cst_11 = arith.constant 2.000000e-01 : f32
    %16 = vector.broadcast %cst_11 : f32 to vector<16x256xf32>
    %17 = arith.mulf %16, %15 : vector<16x256xf32>
    %18 = arith.maximumf %15, %17 : vector<16x256xf32>
    %c0_12 = arith.constant 0 : index
    %c0_13 = arith.constant 0 : index
    %19 = vector.load %arg6[%c0_12, %c0_13] : memref<1x256xbf16, #tpu.memory_space<vmem>>, vector<1x256xbf16>
    %20 = arith.truncf %18 : vector<16x256xf32> to vector<16x256xbf16>
    %cst_14 = arith.constant dense<0.000000e+00> : vector<1x16xf32>
    %21 = tpu.matmul %19, %20, %cst_14 {dimension_numbers = #tpu.dot_dimension_numbers<[1], [1], [0], [0], [0, 0, 1, 0], [], []>} : vector<1x256xbf16>, vector<16x256xbf16>, vector<1x16xf32> -> vector<1x16xf32>
    %c0_15 = arith.constant 0 : index
    %c0_16 = arith.constant 0 : index
    %22 = vector.load %arg7[%c0_15, %c0_16] : memref<1x1xf32, #tpu.memory_space<vmem>>, vector<1x1xf32>
    %23 = vector.broadcast %22 : vector<1x1xf32> to vector<1x16xf32>
    %24 = arith.addf %21, %23 : vector<1x16xf32>
    %cst_17 = arith.constant 0.000000e+00 : f32
    %25 = vector.broadcast %cst_17 : f32 to vector<1x16xf32>
    %26 = arith.subf %25, %24 : vector<1x16xf32>
    %27 = math.exp %26 : vector<1x16xf32>
    %cst_18 = arith.constant 1.000000e+00 : f32
    %28 = vector.broadcast %cst_18 : f32 to vector<1x16xf32>
    %29 = arith.addf %28, %27 : vector<1x16xf32>
    %cst_19 = arith.constant 1.000000e+00 : f32
    %30 = vector.broadcast %cst_19 : f32 to vector<1x16xf32>
    %31 = arith.divf %30, %29 : vector<1x16xf32>
    %c0_20 = arith.constant 0 : index
    %c0_21 = arith.constant 0 : index
    %32 = vector.load %arg8[%c0_20, %c0_21] : memref<1x16xf32, #tpu.memory_space<vmem>>, vector<1x16xf32>
    tpu.vector_store %arg8[%c0_20, %c0_21], %31 {strides = array<i32>} : memref<1x16xf32, #tpu.memory_space<vmem>>, vector<1x16xf32>,
    return
  }
  func.func @transform_0(%arg0: i32) -> (i32, i32) {
    %c0_i32 = arith.constant 0 : i32
    %c0_i32_0 = arith.constant 0 : i32
    return %arg0, %c0_i32 : i32, i32
  }
  func.func @transform_1(%arg0: i32) -> (i32, i32) {
    %c0_i32 = arith.constant 0 : i32
    %c0_i32_0 = arith.constant 0 : i32
    %c0_i32_1 = arith.constant 0 : i32
    return %c0_i32, %c0_i32_0 : i32, i32
  }
  func.func @transform_2(%arg0: i32) -> (i32, i32) {
    %c0_i32 = arith.constant 0 : i32
    %c0_i32_0 = arith.constant 0 : i32
    %c0_i32_1 = arith.constant 0 : i32
    return %c0_i32, %c0_i32_0 : i32, i32
  }
  func.func @transform_3(%arg0: i32) -> (i32, i32) {
    %c0_i32 = arith.constant 0 : i32
    %c0_i32_0 = arith.constant 0 : i32
    %c0_i32_1 = arith.constant 0 : i32
    return %c0_i32, %c0_i32_0 : i32, i32
  }
  func.func @transform_4(%arg0: i32) -> (i32, i32) {
    %c0_i32 = arith.constant 0 : i32
    %c0_i32_0 = arith.constant 0 : i32
    %c0_i32_1 = arith.constant 0 : i32
    return %c0_i32, %c0_i32_0 : i32, i32
  }
  func.func @transform_5(%arg0: i32) -> (i32, i32) {
    %c0_i32 = arith.constant 0 : i32
    %c0_i32_0 = arith.constant 0 : i32
    %c0_i32_1 = arith.constant 0 : i32
    return %c0_i32, %c0_i32_0 : i32, i32
  }
  func.func @transform_6(%arg0: i32) -> (i32, i32) {
    %c0_i32 = arith.constant 0 : i32
    %c0_i32_0 = arith.constant 0 : i32
    %c0_i32_1 = arith.constant 0 : i32
    return %c0_i32, %c0_i32_0 : i32, i32
  }
  func.func @transform_7(%arg0: i32) -> (i32, i32) {
    %c0_i32 = arith.constant 0 : i32
    %c0_i32_0 = arith.constant 0 : i32
    return %arg0, %c0_i32 : i32, i32
  }
}

module attributes {stable_mosaic.version = 11 : i64} {
  func.func @_discriminator_kernel(%arg0: i32, %arg1: memref<16x1024xf32, #tpu.memory_space<vmem>>, %arg2: memref<1024x512xbf16, #tpu.memory_space<vmem>>, %arg3: memref<1x512xf32, #tpu.memory_space<vmem>>, %arg4: memref<512x256xbf16, #tpu.memory_space<vmem>>, %arg5: memref<1x256xf32, #tpu.memory_space<vmem>>, %arg6: memref<1x256xbf16, #tpu.memory_space<vmem>>, %arg7: memref<1x1xf32, #tpu.memory_space<vmem>>, %arg8: memref<1x16xf32, #tpu.memory_space<vmem>>) attributes {dimension_semantics = [#tpu.dimension_semantics<parallel>], iteration_bounds = array<i64: 1>, scalar_prefetch = 0 : i64, scratch_operands = 0 : i64, tpu.core_type = #tpu.core_type<tc>, window_params = [{transform_indices = @transform_0, window_bounds = array<i64: 16, 1024>}, {pipeline_mode = #tpu.pipeline_mode<synchronous>, transform_indices = @transform_1, window_bounds = array<i64: 1024, 512>}, {pipeline_mode = #tpu.pipeline_mode<synchronous>, transform_indices = @transform_2, window_bounds = array<i64: 1, 512>}, {pipeline_mode = #tpu.pipeline_mode<synchronous>, transform_indices = @transform_3, window_bounds = array<i64: 512, 256>}, {pipeline_mode = #tpu.pipeline_mode<synchronous>, transform_indices = @transform_4, window_bounds = array<i64: 1, 256>}, {pipeline_mode = #tpu.pipeline_mode<synchronous>, transform_indices = @transform_5, window_bounds = array<i64: 1, 256>}, {pipeline_mode = #tpu.pipeline_mode<synchronous>, transform_indices = @transform_6, window_bounds = array<i64: 1, 1>}, {transform_indices = @transform_7, window_bounds = array<i64: 1, 16>}]} {
    %c0 = arith.constant 0 : index
    %c0_0 = arith.constant 0 : index
    %0 = vector.load %arg1[%c0, %c0_0] : memref<16x1024xf32, #tpu.memory_space<vmem>>, vector<16x1024xf32>
    %1 = arith.truncf %0 : vector<16x1024xf32> to vector<16x1024xbf16>
    %c0_1 = arith.constant 0 : index
    %c0_2 = arith.constant 0 : index
    %2 = vector.load %arg2[%c0_1, %c0_2] : memref<1024x512xbf16, #tpu.memory_space<vmem>>, vector<1024x512xbf16>
    %cst = arith.constant dense<0.000000e+00> : vector<16x512xf32>
    %3 = tpu.matmul %1, %2, %cst {dimension_numbers = #tpu.dot_dimension_numbers<[1], [0], [0], [1], [0, 0, 1, 1], [], []>} : vector<16x1024xbf16>, vector<1024x512xbf16>, vector<16x512xf32> -> vector<16x512xf32>
    %c0_3 = arith.constant 0 : index
    %c0_4 = arith.constant 0 : index
    %4 = vector.load %arg3[%c0_3, %c0_4] : memref<1x512xf32, #tpu.memory_space<vmem>>, vector<1x512xf32>
    %5 = vector.broadcast %4 : vector<1x512xf32> to vector<16x512xf32>
    %6 = arith.addf %3, %5 : vector<16x512xf32>
    %cst_5 = arith.constant 2.000000e-01 : f32
    %7 = vector.broadcast %cst_5 : f32 to vector<16x512xf32>
    %8 = arith.mulf %7, %6 : vector<16x512xf32>
    %9 = arith.maximumf %6, %8 : vector<16x512xf32>
    %10 = arith.truncf %9 : vector<16x512xf32> to vector<16x512xbf16>
    %c0_6 = arith.constant 0 : index
    %c0_7 = arith.constant 0 : index
    %11 = vector.load %arg4[%c0_6, %c0_7] : memref<512x256xbf16, #tpu.memory_space<vmem>>, vector<512x256xbf16>
    %cst_8 = arith.constant dense<0.000000e+00> : vector<16x256xf32>
    %12 = tpu.matmul %10, %11, %cst_8 {dimension_numbers = #tpu.dot_dimension_numbers<[1], [0], [0], [1], [0, 0, 1, 1], [], []>} : vector<16x512xbf16>, vector<512x256xbf16>, vector<16x256xf32> -> vector<16x256xf32>
    %c0_9 = arith.constant 0 : index
    %c0_10 = arith.constant 0 : index
    %13 = vector.load %arg5[%c0_9, %c0_10] : memref<1x256xf32, #tpu.memory_space<vmem>>, vector<1x256xf32>
    %14 = vector.broadcast %13 : vector<1x256xf32> to vector<16x256xf32>
    %15 = arith.addf %12, %14 : vector<16x256xf32>
    %cst_11 = arith.constant 2.000000e-01 : f32
    %16 = vector.broadcast %cst_11 : f32 to vector<16x256xf32>
    %17 = arith.mulf %16, %15 : vector<16x256xf32>
    %18 = arith.maximumf %15, %17 : vector<16x256xf32>
    %c0_12 = arith.constant 0 : index
    %c0_13 = arith.constant 0 : index
    %19 = vector.load %arg6[%c0_12, %c0_13] : memref<1x256xbf16, #tpu.memory_space<vmem>>, vector<1x256xbf16>
    %20 = arith.truncf %18 : vector<16x256xf32> to vector<16x256xbf16>
    %cst_14 = arith.constant dense<0.000000e+00> : vector<1x16xf32>
    %21 = tpu.matmul %19, %20, %cst_14 {dimension_numbers = #tpu.dot_dimension_numbers<[1], [1], [0], [0], [0, 0, 1, 0], [], []>} : vector<1x256xbf16>, vector<16x256xbf16>, vector<1x16xf32> -> vector<1x16xf32>
    %c0_15 = arith.constant 0 : index
    %c0_16 = arith.constant 0 : index
    %22 = vector.load %arg7[%c0_15, %c0_16] : memref<1x1xf32, #tpu.memory_space<vmem>>, vector<1x1xf32>
    %23 = vector.broadcast %22 : vector<1x1xf32> to vector<1x16xf32>
    %24 = arith.addf %21, %23 : vector<1x16xf32>
    %cst_17 = arith.constant 0.000000e+00 : f32
    %25 = vector.broadcast %cst_17 : f32 to vector<1x16xf32>
    %26 = arith.subf %25, %24 : vector<1x16xf32>
    %27 = math.exp %26 : vector<1x16xf32>
    %cst_18 = arith.constant 1.000000e+00 : f32
    %28 = vector.broadcast %cst_18 : f32 to vector<1x16xf32>
    %29 = arith.addf %28, %27 : vector<1x16xf32>
    %cst_19 = arith.constant 1.000000e+00 : f32
    %30 = vector.broadcast %cst_19 : f32 to vector<1x16xf32>
    %31 = arith.divf %30, %29 : vector<1x16xf32>
    %c0_20 = arith.constant 0 : index
    %c0_21 = arith.constant 0 : index
    %32 = vector.load %arg8[%c0_20, %c0_21] : memref<1x16xf32, #tpu.memory_space<vmem>>, vector<1x16xf32>
    tpu.vector_store %arg8[%c0_20, %c0_21], %31 {strides = array<i32>} : memref<1x16xf32, #tpu.memory_space<vmem>>, vector<1x16xf32>,
    return
  }
  func.func @transform_0(%arg0: i32) -> (i32, i32) {
    %c0_i32 = arith.constant 0 : i32
    %c0_i32_0 = arith.constant 0 : i32
    return %arg0, %c0_i32 : i32, i32
  }
  func.func @transform_1(%arg0: i32) -> (i32, i32) {
    %c0_i32 = arith.constant 0 : i32
    %c0_i32_0 = arith.constant 0 : i32
    %c0_i32_1 = arith.constant 0 : i32
    return %c0_i32, %c0_i32_0 : i32, i32
  }
  func.func @transform_2(%arg0: i32) -> (i32, i32) {
    %c0_i32 = arith.constant 0 : i32
    %c0_i32_0 = arith.constant 0 : i32
    %c0_i32_1 = arith.constant 0 : i32
    return %c0_i32, %c0_i32_0 : i32, i32
  }
  func.func @transform_3(%arg0: i32) -> (i32, i32) {
    %c0_i32 = arith.constant 0 : i32
    %c0_i32_0 = arith.constant 0 : i32
    %c0_i32_1 = arith.constant 0 : i32
    return %c0_i32, %c0_i32_0 : i32, i32
  }
  func.func @transform_4(%arg0: i32) -> (i32, i32) {
    %c0_i32 = arith.constant 0 : i32
    %c0_i32_0 = arith.constant 0 : i32
    %c0_i32_1 = arith.constant 0 : i32
    return %c0_i32, %c0_i32_0 : i32, i32
  }
  func.func @transform_5(%arg0: i32) -> (i32, i32) {
    %c0_i32 = arith.constant 0 : i32
    %c0_i32_0 = arith.constant 0 : i32
    %c0_i32_1 = arith.constant 0 : i32
    return %c0_i32, %c0_i32_0 : i32, i32
  }
  func.func @transform_6(%arg0: i32) -> (i32, i32) {
    %c0_i32 = arith.constant 0 : i32
    %c0_i32_0 = arith.constant 0 : i32
    %c0_i32_1 = arith.constant 0 : i32
    return %c0_i32, %c0_i32_0 : i32, i32
  }
  func.func @transform_7(%arg0: i32) -> (i32, i32) {
    %c0_i32 = arith.constant 0 : i32
    %c0_i32_0 = arith.constant 0 : i32
    return %arg0, %c0_i32 : i32, i32
  }
}

</mosaic_0001>

<llo_original>
// kernel: tpu_custom_call.1
$region0: #{tpu_custom_call.1}
  #allocation0 [shape = 'u32[]', space=smem, size = 0x4, offset = 0x4, fixed_abs, tag = 'smem constant byte address 0x4 - core index']
  #allocation1 [shape = 'u32[144,128]{1,0:T(1,128)}', space=vmem, size = 0x12000, scoped, tag = 'internal scratch']
  #allocation2 [shape = 'f32[1,1]{1,0:T(1,128)S(1)}', space=vmem, size = 0x200, scoped, tag = 'scoped memory for tpu_custom_call.1']
  %s0 = inlined_call_operand.hbm [shape: f32[2,1024], index: 0, kind: input, shape index: {}]
  %s1 = inlined_call_operand.hbm [shape: bf16[1024,512], index: 1, kind: input, shape index: {}]
  %s2 = inlined_call_operand.vmem [shape: f32[1,512], index: 2, kind: input, shape index: {}]
  %s3 = inlined_call_operand.hbm [shape: bf16[512,256], index: 3, kind: input, shape index: {}]
  %s4 = inlined_call_operand.vmem [shape: f32[1,256], index: 4, kind: input, shape index: {}]
  %s5 = inlined_call_operand.vmem [shape: bf16[1,256], index: 5, kind: input, shape index: {}]
  %s6 = inlined_call_operand.<no memory space> [shape: f32[1,1], index: 6, kind: input, shape index: {}]
  %s7 = inlined_call_operand.hbm [shape: f32[1,16], index: 7, kind: output, shape index: {}]
  %s8 = sld [smem:[#allocation0]]
  $region50: #{tpu_custom_call.1} parent=0
    _
  %s10 = ssub.s32 1, %s8
  %s11 = scalar_select 0, %s10, %s8
  %v12 = vstv %s6
  %13 = vst [vmem:[#allocation2] sm:$0x1] %v12
  $region1: #{tpu_custom_call.1} parent=0
    #allocation3 [shape = 'u8[65536]{0}', space=vmem, size = 0x10000, scoped, tag = 'input window, operand 0, single buffered']
    #allocation4 [shape = 's32[1]{0}', space=sflag, size = 0x4, scoped, tag = 'scoped memory for tpu_custom_call.1']
    #allocation5 [shape = 's32[1]{0}', space=sflag, size = 0x4, scoped, tag = 'scoped memory for tpu_custom_call.1']
    #allocation6 [shape = 'u8[1048576]{0}', space=vmem, size = 0x100000, scoped, tag = 'input window, operand 1, single buffered']
    #allocation7 [shape = 's32[1]{0}', space=sflag, size = 0x4, scoped, tag = 'scoped memory for tpu_custom_call.1']
    #allocation8 [shape = 'u8[262144]{0}', space=vmem, size = 0x40000, scoped, tag = 'input window, operand 3, single buffered']
    #allocation9 [shape = 'u8[512]{0}', space=vmem, size = 0x400, scoped, tag = 'output window, operand 0, single buffered']
    %14 = vsyncpa [#allocation4], 0
    %15 = vsyncpa [#allocation7], 0
    %16 = vsyncpa [#allocation5], 0
    // Predicated region
    $region2: #{tpu_custom_call.1} parent=1 // pred_check
      _
    $region3: #{tpu_custom_call.1} parent=1 // pred_check_branch
      %18 = sbr.rel (0) target = $region5
    $region4: #{tpu_custom_call.1} parent=1 // pred_region
      %s20 = ssub.s32 2048, 256
      %21 = vsyncadd [#allocation4], %s20
      %s22 = sshll.u32 [#allocation3], 4
      %s23 = int_to_ptr.vmem [resolvable:$true] %s22
      %28 = dma.hbm_to_vmem [thread:$0]  %s0, 256, %s23, [#allocation4], 256, 256, 16
    $region5: #{tpu_custom_call.1} parent=1 // pred_fallthru
      _
    // Predicated region
    $region6: #{tpu_custom_call.1} parent=1 // pred_check
      _
    $region7: #{tpu_custom_call.1} parent=1 // pred_check_branch
      %30 = sbr.rel (0) target = $region9
    $region8: #{tpu_custom_call.1} parent=1 // pred_region
      %s32 = ssub.s32 32768, 32768
      %33 = vsyncadd [#allocation7], %s32
      %s34 = sshll.u32 [#allocation6], 4
      %s35 = int_to_ptr.vmem [resolvable:$true] %s34
      %40 = dma.hbm_to_vmem [thread:$0]  %s1, 32768, %s35, [#allocation7], 256, 256, 16
    $region9: #{tpu_custom_call.1} parent=1 // pred_fallthru
      _
    // Predicated region
    $region10: #{tpu_custom_call.1} parent=1 // pred_check
      _
    $region11: #{tpu_custom_call.1} parent=1 // pred_check_branch
      %42 = sbr.rel (0) target = $region13
    $region12: #{tpu_custom_call.1} parent=1 // pred_region
      _
    $region13: #{tpu_custom_call.1} parent=1 // pred_fallthru
      _
    // Predicated region
    $region14: #{tpu_custom_call.1} parent=1 // pred_check
      _
    $region15: #{tpu_custom_call.1} parent=1 // pred_check_branch
      %44 = sbr.rel (0) target = $region17
    $region16: #{tpu_custom_call.1} parent=1 // pred_region
      %s46 = ssub.s32 8192, 8192
      %47 = vsyncadd [#allocation7], %s46
      %s48 = sshll.u32 [#allocation8], 4
      %s49 = int_to_ptr.vmem [resolvable:$true] %s48
      %54 = dma.hbm_to_vmem [thread:$0]  %s3, 8192, %s49, [#allocation7], 128, 128, 8
    $region17: #{tpu_custom_call.1} parent=1 // pred_fallthru
      _
    // Predicated region
    $region18: #{tpu_custom_call.1} parent=1 // pred_check
      _
    $region19: #{tpu_custom_call.1} parent=1 // pred_check_branch
      %56 = sbr.rel (0) target = $region21
    $region20: #{tpu_custom_call.1} parent=1 // pred_region
      _
    $region21: #{tpu_custom_call.1} parent=1 // pred_fallthru
      _
    // Predicated region
    $region22: #{tpu_custom_call.1} parent=1 // pred_check
      _
    $region23: #{tpu_custom_call.1} parent=1 // pred_check_branch
      %58 = sbr.rel (0) target = $region25
    $region24: #{tpu_custom_call.1} parent=1 // pred_region
      _
    $region25: #{tpu_custom_call.1} parent=1 // pred_fallthru
      _
    // Predicated region
    $region26: #{tpu_custom_call.1} parent=1 // pred_check
      _
    $region27: #{tpu_custom_call.1} parent=1 // pred_check_branch
      %60 = sbr.rel (0) target = $region29
    $region28: #{tpu_custom_call.1} parent=1 // pred_region
      _
    $region29: #{tpu_custom_call.1} parent=1 // pred_fallthru
      _
    // Predicated region
    $region30: #{tpu_custom_call.1} parent=1 // pred_check
      _
    $region31: #{tpu_custom_call.1} parent=1 // pred_check_branch
      %62 = sbr.rel (0) target = $region33
    $region32: #{tpu_custom_call.1} parent=1 // pred_region
      %63 = dma.done [#allocation4], 2048
    $region33: #{tpu_custom_call.1} parent=1 // pred_fallthru
      _
    // Predicated region
    $region34: #{tpu_custom_call.1} parent=1 // pred_check
      _
    $region35: #{tpu_custom_call.1} parent=1 // pred_check_branch
      %65 = sbr.rel (0) target = $region37
    $region36: #{tpu_custom_call.1} parent=1 // pred_region
      %66 = dma.done [#allocation7], 32768
    $region37: #{tpu_custom_call.1} parent=1 // pred_fallthru
      _
    // Predicated region
    $region38: #{tpu_custom_call.1} parent=1 // pred_check
      _
    $region39: #{tpu_custom_call.1} parent=1 // pred_check_branch
      %68 = sbr.rel (0) target = $region41
    $region40: #{tpu_custom_call.1} parent=1 // pred_region
      %69 = dma.done [#allocation7], 8192
    $region41: #{tpu_custom_call.1} parent=1 // pred_fallthru
      _
    %v71 = vld [vmem:[#allocation3] sm:$0xff]
    %v72 = vld [vmem:[#allocation3 + $0x8] sm:$0xff]
    %v73 = vld [vmem:[#allocation3 + $0x10] sm:$0xff]
    %v74 = vld [vmem:[#allocation3 + $0x18] sm:$0xff]
    %v75 = vld [vmem:[#allocation3 + $0x20] sm:$0xff]
    %v76 = vld [vmem:[#allocation3 + $0x28] sm:$0xff]
    %v77 = vld [vmem:[#allocation3 + $0x30] sm:$0xff]
    %v78 = vld [vmem:[#allocation3 + $0x38] sm:$0xff]
    %v79 = vld [vmem:[#allocation3 + $0x40] sm:$0xff]
    %v80 = vld [vmem:[#allocation3 + $0x48] sm:$0xff]
    %v81 = vld [vmem:[#allocation3 + $0x50] sm:$0xff]
    %v82 = vld [vmem:[#allocation3 + $0x58] sm:$0xff]
    %v83 = vld [vmem:[#allocation3 + $0x60] sm:$0xff]
    %v84 = vld [vmem:[#allocation3 + $0x68] sm:$0xff]
    %v85 = vld [vmem:[#allocation3 + $0x70] sm:$0xff]
    %v86 = vld [vmem:[#allocation3 + $0x78] sm:$0xff]
    %v103 = vcombine.low %v71, %v73
    %v104 = vcombine.high %v71, %v73
    %v105 = vcombine.low %v75, %v77
    %v106 = vcombine.high %v75, %v77
    %v108 = vunpack.c.l.s4 1983009808
    %v109 = vunpack.c.0.s8 %v108
    %v110 = vlaneseq
    %v111 = vshrl.u32 %v110, 7
    %v112 = vsub.s32 %v109, %v111
    %v113 = vrot.slane %v103, %v112
    %v115 = vunpack.c.l.s4 1983009808
    %v116 = vunpack.c.0.s8 %v115
    %v117 = vlaneseq
    %v118 = vshrl.u32 %v117, 7
    %v119 = vsub.s32 %v116, %v118
    %v120 = vrot.slane %v104, %v119
    %v122 = vunpack.c.l.s4 1983009808
    %v123 = vunpack.c.0.s8 %v122
    %v124 = vlaneseq
    %v125 = vshrl.u32 %v124, 7
    %v126 = vsub.s32 %v123, %v125
    %v127 = vrot.slane %v105, %v126
    %v129 = vunpack.c.l.s4 1983009808
    %v130 = vunpack.c.0.s8 %v129
    %v131 = vlaneseq
    %v132 = vshrl.u32 %v131, 7
    %v133 = vsub.s32 %v130, %v132
    %v134 = vrot.slane %v106, %v133
    %v135 = vcombine.low %v113, %v127
    %v136 = vcombine.high %v113, %v127
    %v137 = vcombine.low %v120, %v134
    %v138 = vcombine.high %v120, %v134
    %v139 = vcombine.low %v72, %v74
    %v140 = vcombine.high %v72, %v74
    %v141 = vcombine.low %v76, %v78
    %v142 = vcombine.high %v76, %v78
    %v144 = vunpack.c.l.s4 1983009808
    %v145 = vunpack.c.0.s8 %v144
    %v146 = vlaneseq
    %v147 = vshrl.u32 %v146, 7
    %v148 = vsub.s32 %v145, %v147
    %v149 = vrot.slane %v139, %v148
    %v151 = vunpack.c.l.s4 1983009808
    %v152 = vunpack.c.0.s8 %v151
    %v153 = vlaneseq
    %v154 = vshrl.u32 %v153, 7
    %v155 = vsub.s32 %v152, %v154
    %v156 = vrot.slane %v140, %v155
    %v158 = vunpack.c.l.s4 1983009808
    %v159 = vunpack.c.0.s8 %v158
    %v160 = vlaneseq
    %v161 = vshrl.u32 %v160, 7
    %v162 = vsub.s32 %v159, %v161
    %v163 = vrot.slane %v141, %v162
    %v165 = vunpack.c.l.s4 1983009808
    %v166 = vunpack.c.0.s8 %v165
    %v167 = vlaneseq
    %v168 = vshrl.u32 %v167, 7
    %v169 = vsub.s32 %v166, %v168
    %v170 = vrot.slane %v142, %v169
    %v171 = vcombine.low %v149, %v163
    %v172 = vcombine.high %v149, %v163
    %v173 = vcombine.low %v156, %v170
    %v174 = vcombine.high %v156, %v170
    %v175 = vcombine.low %v79, %v81
    %v176 = vcombine.high %v79, %v81
    %v177 = vcombine.low %v83, %v85
    %v178 = vcombine.high %v83, %v85
    %v180 = vunpack.c.l.s4 1983009808
    %v181 = vunpack.c.0.s8 %v180
    %v182 = vlaneseq
    %v183 = vshrl.u32 %v182, 7
    %v184 = vsub.s32 %v181, %v183
    %v185 = vrot.slane %v175, %v184
    %v187 = vunpack.c.l.s4 1983009808
    %v188 = vunpack.c.0.s8 %v187
    %v189 = vlaneseq
    %v190 = vshrl.u32 %v189, 7
    %v191 = vsub.s32 %v188, %v190
    %v192 = vrot.slane %v176, %v191
    %v194 = vunpack.c.l.s4 1983009808
    %v195 = vunpack.c.0.s8 %v194
    %v196 = vlaneseq
    %v197 = vshrl.u32 %v196, 7
    %v198 = vsub.s32 %v195, %v197
    %v199 = vrot.slane %v177, %v198
    %v201 = vunpack.c.l.s4 1983009808
    %v202 = vunpack.c.0.s8 %v201
    %v203 = vlaneseq
    %v204 = vshrl.u32 %v203, 7
    %v205 = vsub.s32 %v202, %v204
    %v206 = vrot.slane %v178, %v205
    %v207 = vcombine.low %v185, %v199
    %v208 = vcombine.high %v185, %v199
    %v209 = vcombine.low %v192, %v206
    %v210 = vcombine.high %v192, %v206
    %v211 = vcombine.low %v80, %v82
    %v212 = vcombine.high %v80, %v82
    %v213 = vcombine.low %v84, %v86
    %v214 = vcombine.high %v84, %v86
    %v216 = vunpack.c.l.s4 1983009808
    %v217 = vunpack.c.0.s8 %v216
    %v218 = vlaneseq
    %v219 = vshrl.u32 %v218, 7
    %v220 = vsub.s32 %v217, %v219
    %v221 = vrot.slane %v211, %v220
    %v223 = vunpack.c.l.s4 1983009808
    %v224 = vunpack.c.0.s8 %v223
    %v225 = vlaneseq
    %v226 = vshrl.u32 %v225, 7
    %v227 = vsub.s32 %v224, %v226
    %v228 = vrot.slane %v212, %v227
    %v230 = vunpack.c.l.s4 1983009808
    %v231 = vunpack.c.0.s8 %v230
    %v232 = vlaneseq
    %v233 = vshrl.u32 %v232, 7
    %v234 = vsub.s32 %v231, %v233
    %v235 = vrot.slane %v213, %v234
    %v237 = vunpack.c.l.s4 1983009808
    %v238 = vunpack.c.0.s8 %v237
    %v239 = vlaneseq
    %v240 = vshrl.u32 %v239, 7
    %v241 = vsub.s32 %v238, %v240
    %v242 = vrot.slane %v214, %v241
    %v243 = vcombine.low %v221, %v235
    %v244 = vcombine.high %v221, %v235
    %v245 = vcombine.low %v228, %v242
    %v246 = vcombine.high %v228, %v242
    %v263 = vpack.c.bf16 %v207, %v135
    %v264 = vpack.c.bf16 %v208, %v136
    %v265 = vpack.c.bf16 %v209, %v137
    %v266 = vpack.c.bf16 %v210, %v138
    %v267 = vpack.c.bf16 %v243, %v171
    %v268 = vpack.c.bf16 %v244, %v172
    %v269 = vpack.c.bf16 %v245, %v173
    %v270 = vpack.c.bf16 %v246, %v174
    %v271 = vld [vmem:[#allocation6] sm:$0xff]
    %v272 = vld [vmem:[#allocation6 + $0x8] sm:$0xff]
    %v273 = vld [vmem:[#allocation6 + $0x10] sm:$0xff]
    %v274 = vld [vmem:[#allocation6 + $0x18] sm:$0xff]
    %v275 = vld [vmem:[#allocation6 + $0x20] sm:$0xff]
    %v276 = vld [vmem:[#allocation6 + $0x28] sm:$0xff]
    %v277 = vld [vmem:[#allocation6 + $0x30] sm:$0xff]
    %v278 = vld [vmem:[#allocation6 + $0x38] sm:$0xff]
    %v279 = vld [vmem:[#allocation6 + $0x40] sm:$0xff]
    %v280 = vld [vmem:[#allocation6 + $0x48] sm:$0xff]
    %v281 = vld [vmem:[#allocation6 + $0x50] sm:$0xff]
    %v282 = vld [vmem:[#allocation6 + $0x58] sm:$0xff]
    %v283 = vld [vmem:[#allocation6 + $0x60] sm:$0xff]
    %v284 = vld [vmem:[#allocation6 + $0x68] sm:$0xff]
    %v285 = vld [vmem:[#allocation6 + $0x70] sm:$0xff]
    %v286 = vld [vmem:[#allocation6 + $0x78] sm:$0xff]
    %v287 = vld [vmem:[#allocation6 + $0x80] sm:$0xff]
    %v288 = vld [vmem:[#allocation6 + $0x88] sm:$0xff]
    %v289 = vld [vmem:[#allocation6 + $0x90] sm:$0xff]
    %v290 = vld [vmem:[#allocation6 + $0x98] sm:$0xff]
    %v291 = vld [vmem:[#allocation6 + $0xa0] sm:$0xff]
    %v292 = vld [vmem:[#allocation6 + $0xa8] sm:$0xff]
    %v293 = vld [vmem:[#allocation6 + $0xb0] sm:$0xff]
    %v294 = vld [vmem:[#allocation6 + $0xb8] sm:$0xff]
    %v295 = vld [vmem:[#allocation6 + $0xc0] sm:$0xff]
    %v296 = vld [vmem:[#allocation6 + $0xc8] sm:$0xff]
    %v297 = vld [vmem:[#allocation6 + $0xd0] sm:$0xff]
    %v298 = vld [vmem:[#allocation6 + $0xd8] sm:$0xff]
    %v299 = vld [vmem:[#allocation6 + $0xe0] sm:$0xff]
    %v300 = vld [vmem:[#allocation6 + $0xe8] sm:$0xff]
    %v301 = vld [vmem:[#allocation6 + $0xf0] sm:$0xff]
    %v302 = vld [vmem:[#allocation6 + $0xf8] sm:$0xff]
    %v303 = vld [vmem:[#allocation6 + $0x100] sm:$0xff]
    %v304 = vld [vmem:[#allocation6 + $0x108] sm:$0xff]
    %v305 = vld [vmem:[#allocation6 + $0x110] sm:$0xff]
    %v306 = vld [vmem:[#allocation6 + $0x118] sm:$0xff]
    %v307 = vld [vmem:[#allocation6 + $0x120] sm:$0xff]
    %v308 = vld [vmem:[#allocation6 + $0x128] sm:$0xff]
    %v309 = vld [vmem:[#allocation6 + $0x130] sm:$0xff]
    %v310 = vld [vmem:[#allocation6 + $0x138] sm:$0xff]
    %v311 = vld [vmem:[#allocation6 + $0x140] sm:$0xff]
    %v312 = vld [vmem:[#allocation6 + $0x148] sm:$0xff]
    %v313 = vld [vmem:[#allocation6 + $0x150] sm:$0xff]
    %v314 = vld [vmem:[#allocation6 + $0x158] sm:$0xff]
    %v315 = vld [vmem:[#allocation6 + $0x160] sm:$0xff]
    %v316 = vld [vmem:[#allocation6 + $0x168] sm:$0xff]
    %v317 = vld [vmem:[#allocation6 + $0x170] sm:$0xff]
    %v318 = vld [vmem:[#allocation6 + $0x178] sm:$0xff]
    %v319 = vld [vmem:[#allocation6 + $0x180] sm:$0xff]
    %v320 = vld [vmem:[#allocation6 + $0x188] sm:$0xff]
    %v321 = vld [vmem:[#allocation6 + $0x190] sm:$0xff]
    %v322 = vld [vmem:[#allocation6 + $0x198] sm:$0xff]
    %v323 = vld [vmem:[#allocation6 + $0x1a0] sm:$0xff]
    %v324 = vld [vmem:[#allocation6 + $0x1a8] sm:$0xff]
    %v325 = vld [vmem:[#allocation6 + $0x1b0] sm:$0xff]
    %v326 = vld [vmem:[#allocation6 + $0x1b8] sm:$0xff]
    %v327 = vld [vmem:[#allocation6 + $0x1c0] sm:$0xff]
    %v328 = vld [vmem:[#allocation6 + $0x1c8] sm:$0xff]
    %v329 = vld [vmem:[#allocation6 + $0x1d0] sm:$0xff]
    %v330 = vld [vmem:[#allocation6 + $0x1d8] sm:$0xff]
    %v331 = vld [vmem:[#allocation6 + $0x1e0] sm:$0xff]
    %v332 = vld [vmem:[#allocation6 + $0x1e8] sm:$0xff]
    %v333 = vld [vmem:[#allocation6 + $0x1f0] sm:$0xff]
    %v334 = vld [vmem:[#allocation6 + $0x1f8] sm:$0xff]
    %v335 = vld [vmem:[#allocation6 + $0x200] sm:$0xff]
    %v336 = vld [vmem:[#allocation6 + $0x208] sm:$0xff]
    %v337 = vld [vmem:[#allocation6 + $0x210] sm:$0xff]
    %v338 = vld [vmem:[#allocation6 + $0x218] sm:$0xff]
    %v339 = vld [vmem:[#allocation6 + $0x220] sm:$0xff]
    %v340 = vld [vmem:[#allocation6 + $0x228] sm:$0xff]
    %v341 = vld [vmem:[#allocation6 + $0x230] sm:$0xff]
    %v342 = vld [vmem:[#allocation6 + $0x238] sm:$0xff]
    %v343 = vld [vmem:[#allocation6 + $0x240] sm:$0xff]
    %v344 = vld [vmem:[#allocation6 + $0x248] sm:$0xff]
    %v345 = vld [vmem:[#allocation6 + $0x250] sm:$0xff]
    %v346 = vld [vmem:[#allocation6 + $0x258] sm:$0xff]
    %v347 = vld [vmem:[#allocation6 + $0x260] sm:$0xff]
    %v348 = vld [vmem:[#allocation6 + $0x268] sm:$0xff]
    %v349 = vld [vmem:[#allocation6 + $0x270] sm:$0xff]
    %v350 = vld [vmem:[#allocation6 + $0x278] sm:$0xff]
    %v351 = vld [vmem:[#allocation6 + $0x280] sm:$0xff]
    %v352 = vld [vmem:[#allocation6 + $0x288] sm:$0xff]
    %v353 = vld [vmem:[#allocation6 + $0x290] sm:$0xff]
    %v354 = vld [vmem:[#allocation6 + $0x298] sm:$0xff]
    %v355 = vld [vmem:[#allocation6 + $0x2a0] sm:$0xff]
    %v356 = vld [vmem:[#allocation6 + $0x2a8] sm:$0xff]
    %v357 = vld [vmem:[#allocation6 + $0x2b0] sm:$0xff]
    %v358 = vld [vmem:[#allocation6 + $0x2b8] sm:$0xff]
    %v359 = vld [vmem:[#allocation6 + $0x2c0] sm:$0xff]
    %v360 = vld [vmem:[#allocation6 + $0x2c8] sm:$0xff]
    %v361 = vld [vmem:[#allocation6 + $0x2d0] sm:$0xff]
    %v362 = vld [vmem:[#allocation6 + $0x2d8] sm:$0xff]
    %v363 = vld [vmem:[#allocation6 + $0x2e0] sm:$0xff]
    %v364 = vld [vmem:[#allocation6 + $0x2e8] sm:$0xff]
    %v365 = vld [vmem:[#allocation6 + $0x2f0] sm:$0xff]
    %v366 = vld [vmem:[#allocation6 + $0x2f8] sm:$0xff]
    %v367 = vld [vmem:[#allocation6 + $0x300] sm:$0xff]
    %v368 = vld [vmem:[#allocation6 + $0x308] sm:$0xff]
    %v369 = vld [vmem:[#allocation6 + $0x310] sm:$0xff]
    %v370 = vld [vmem:[#allocation6 + $0x318] sm:$0xff]
    %v371 = vld [vmem:[#allocation6 + $0x320] sm:$0xff]
    %v372 = vld [vmem:[#allocation6 + $0x328] sm:$0xff]
    %v373 = vld [vmem:[#allocation6 + $0x330] sm:$0xff]
    %v374 = vld [vmem:[#allocation6 + $0x338] sm:$0xff]
    %v375 = vld [vmem:[#allocation6 + $0x340] sm:$0xff]
    %v376 = vld [vmem:[#allocation6 + $0x348] sm:$0xff]
    %v377 = vld [vmem:[#allocation6 + $0x350] sm:$0xff]
    %v378 = vld [vmem:[#allocation6 + $0x358] sm:$0xff]
    %v379 = vld [vmem:[#allocation6 + $0x360] sm:$0xff]
    %v380 = vld [vmem:[#allocation6 + $0x368] sm:$0xff]
    %v381 = vld [vmem:[#allocation6 + $0x370] sm:$0xff]
    %v382 = vld [vmem:[#allocation6 + $0x378] sm:$0xff]
    %v383 = vld [vmem:[#allocation6 + $0x380] sm:$0xff]
    %v384 = vld [vmem:[#allocation6 + $0x388] sm:$0xff]
    %v385 = vld [vmem:[#allocation6 + $0x390] sm:$0xff]
    %v386 = vld [vmem:[#allocation6 + $0x398] sm:$0xff]
    %v387 = vld [vmem:[#allocation6 + $0x3a0] sm:$0xff]
    %v388 = vld [vmem:[#allocation6 + $0x3a8] sm:$0xff]
    %v389 = vld [vmem:[#allocation6 + $0x3b0] sm:$0xff]
    %v390 = vld [vmem:[#allocation6 + $0x3b8] sm:$0xff]
    %v391 = vld [vmem:[#allocation6 + $0x3c0] sm:$0xff]
    %v392 = vld [vmem:[#allocation6 + $0x3c8] sm:$0xff]
    %v393 = vld [vmem:[#allocation6 + $0x3d0] sm:$0xff]
    %v394 = vld [vmem:[#allocation6 + $0x3d8] sm:$0xff]
    %v395 = vld [vmem:[#allocation6 + $0x3e0] sm:$0xff]
    %v396 = vld [vmem:[#allocation6 + $0x3e8] sm:$0xff]
    %v397 = vld [vmem:[#allocation6 + $0x3f0] sm:$0xff]
    %v398 = vld [vmem:[#allocation6 + $0x3f8] sm:$0xff]
    %v399 = vld [vmem:[#allocation6 + $0x400] sm:$0xff]
    %v400 = vld [vmem:[#allocation6 + $0x408] sm:$0xff]
    %v401 = vld [vmem:[#allocation6 + $0x410] sm:$0xff]
    %v402 = vld [vmem:[#allocation6 + $0x418] sm:$0xff]
    %v403 = vld [vmem:[#allocation6 + $0x420] sm:$0xff]
    %v404 = vld [vmem:[#allocation6 + $0x428] sm:$0xff]
    %v405 = vld [vmem:[#allocation6 + $0x430] sm:$0xff]
    %v406 = vld [vmem:[#allocation6 + $0x438] sm:$0xff]
    %v407 = vld [vmem:[#allocation6 + $0x440] sm:$0xff]
    %v408 = vld [vmem:[#allocation6 + $0x448] sm:$0xff]
    %v409 = vld [vmem:[#allocation6 + $0x450] sm:$0xff]
    %v410 = vld [vmem:[#allocation6 + $0x458] sm:$0xff]
    %v411 = vld [vmem:[#allocation6 + $0x460] sm:$0xff]
    %v412 = vld [vmem:[#allocation6 + $0x468] sm:$0xff]
    %v413 = vld [vmem:[#allocation6 + $0x470] sm:$0xff]
    %v414 = vld [vmem:[#allocation6 + $0x478] sm:$0xff]
    %v415 = vld [vmem:[#allocation6 + $0x480] sm:$0xff]
    %v416 = vld [vmem:[#allocation6 + $0x488] sm:$0xff]
    %v417 = vld [vmem:[#allocation6 + $0x490] sm:$0xff]
    %v418 = vld [vmem:[#allocation6 + $0x498] sm:$0xff]
    %v419 = vld [vmem:[#allocation6 + $0x4a0] sm:$0xff]
    %v420 = vld [vmem:[#allocation6 + $0x4a8] sm:$0xff]
    %v421 = vld [vmem:[#allocation6 + $0x4b0] sm:$0xff]
    %v422 = vld [vmem:[#allocation6 + $0x4b8] sm:$0xff]
    %v423 = vld [vmem:[#allocation6 + $0x4c0] sm:$0xff]
    %v424 = vld [vmem:[#allocation6 + $0x4c8] sm:$0xff]
    %v425 = vld [vmem:[#allocation6 + $0x4d0] sm:$0xff]
    %v426 = vld [vmem:[#allocation6 + $0x4d8] sm:$0xff]
    %v427 = vld [vmem:[#allocation6 + $0x4e0] sm:$0xff]
    %v428 = vld [vmem:[#allocation6 + $0x4e8] sm:$0xff]
    %v429 = vld [vmem:[#allocation6 + $0x4f0] sm:$0xff]
    %v430 = vld [vmem:[#allocation6 + $0x4f8] sm:$0xff]
    %v431 = vld [vmem:[#allocation6 + $0x500] sm:$0xff]
    %v432 = vld [vmem:[#allocation6 + $0x508] sm:$0xff]
    %v433 = vld [vmem:[#allocation6 + $0x510] sm:$0xff]
    %v434 = vld [vmem:[#allocation6 + $0x518] sm:$0xff]
    %v435 = vld [vmem:[#allocation6 + $0x520] sm:$0xff]
    %v436 = vld [vmem:[#allocation6 + $0x528] sm:$0xff]
    %v437 = vld [vmem:[#allocation6 + $0x530] sm:$0xff]
    %v438 = vld [vmem:[#allocation6 + $0x538] sm:$0xff]
    %v439 = vld [vmem:[#allocation6 + $0x540] sm:$0xff]
    %v440 = vld [vmem:[#allocation6 + $0x548] sm:$0xff]
    %v441 = vld [vmem:[#allocation6 + $0x550] sm:$0xff]
    %v442 = vld [vmem:[#allocation6 + $0x558] sm:$0xff]
    %v443 = vld [vmem:[#allocation6 + $0x560] sm:$0xff]
    %v444 = vld [vmem:[#allocation6 + $0x568] sm:$0xff]
    %v445 = vld [vmem:[#allocation6 + $0x570] sm:$0xff]
    %v446 = vld [vmem:[#allocation6 + $0x578] sm:$0xff]
    %v447 = vld [vmem:[#allocation6 + $0x580] sm:$0xff]
    %v448 = vld [vmem:[#allocation6 + $0x588] sm:$0xff]
    %v449 = vld [vmem:[#allocation6 + $0x590] sm:$0xff]
    %v450 = vld [vmem:[#allocation6 + $0x598] sm:$0xff]
    %v451 = vld [vmem:[#allocation6 + $0x5a0] sm:$0xff]
    %v452 = vld [vmem:[#allocation6 + $0x5a8] sm:$0xff]
    %v453 = vld [vmem:[#allocation6 + $0x5b0] sm:$0xff]
    %v454 = vld [vmem:[#allocation6 + $0x5b8] sm:$0xff]
    %v455 = vld [vmem:[#allocation6 + $0x5c0] sm:$0xff]
    %v456 = vld [vmem:[#allocation6 + $0x5c8] sm:$0xff]
    %v457 = vld [vmem:[#allocation6 + $0x5d0] sm:$0xff]
    %v458 = vld [vmem:[#allocation6 + $0x5d8] sm:$0xff]
    %v459 = vld [vmem:[#allocation6 + $0x5e0] sm:$0xff]
    %v460 = vld [vmem:[#allocation6 + $0x5e8] sm:$0xff]
    %v461 = vld [vmem:[#allocation6 + $0x5f0] sm:$0xff]
    %v462 = vld [vmem:[#allocation6 + $0x5f8] sm:$0xff]
    %v463 = vld [vmem:[#allocation6 + $0x600] sm:$0xff]
    %v464 = vld [vmem:[#allocation6 + $0x608] sm:$0xff]
    %v465 = vld [vmem:[#allocation6 + $0x610] sm:$0xff]
    %v466 = vld [vmem:[#allocation6 + $0x618] sm:$0xff]
    %v467 = vld [vmem:[#allocation6 + $0x620] sm:$0xff]
    %v468 = vld [vmem:[#allocation6 + $0x628] sm:$0xff]
    %v469 = vld [vmem:[#allocation6 + $0x630] sm:$0xff]
    %v470 = vld [vmem:[#allocation6 + $0x638] sm:$0xff]
    %v471 = vld [vmem:[#allocation6 + $0x640] sm:$0xff]
    %v472 = vld [vmem:[#allocation6 + $0x648] sm:$0xff]
    %v473 = vld [vmem:[#allocation6 + $0x650] sm:$0xff]
    %v474 = vld [vmem:[#allocation6 + $0x658] sm:$0xff]
    %v475 = vld [vmem:[#allocation6 + $0x660] sm:$0xff]
    %v476 = vld [vmem:[#allocation6 + $0x668] sm:$0xff]
    %v477 = vld [vmem:[#allocation6 + $0x670] sm:$0xff]
    %v478 = vld [vmem:[#allocation6 + $0x678] sm:$0xff]
    %v479 = vld [vmem:[#allocation6 + $0x680] sm:$0xff]
    %v480 = vld [vmem:[#allocation6 + $0x688] sm:$0xff]
    %v481 = vld [vmem:[#allocation6 + $0x690] sm:$0xff]
    %v482 = vld [vmem:[#allocation6 + $0x698] sm:$0xff]
    %v483 = vld [vmem:[#allocation6 + $0x6a0] sm:$0xff]
    %v484 = vld [vmem:[#allocation6 + $0x6a8] sm:$0xff]
    %v485 = vld [vmem:[#allocation6 + $0x6b0] sm:$0xff]
    %v486 = vld [vmem:[#allocation6 + $0x6b8] sm:$0xff]
    %v487 = vld [vmem:[#allocation6 + $0x6c0] sm:$0xff]
    %v488 = vld [vmem:[#allocation6 + $0x6c8] sm:$0xff]
    %v489 = vld [vmem:[#allocation6 + $0x6d0] sm:$0xff]
    %v490 = vld [vmem:[#allocation6 + $0x6d8] sm:$0xff]
    %v491 = vld [vmem:[#allocation6 + $0x6e0] sm:$0xff]
    %v492 = vld [vmem:[#allocation6 + $0x6e8] sm:$0xff]
    %v493 = vld [vmem:[#allocation6 + $0x6f0] sm:$0xff]
    %v494 = vld [vmem:[#allocation6 + $0x6f8] sm:$0xff]
    %v495 = vld [vmem:[#allocation6 + $0x700] sm:$0xff]
    %v496 = vld [vmem:[#allocation6 + $0x708] sm:$0xff]
    %v497 = vld [vmem:[#allocation6 + $0x710] sm:$0xff]
    %v498 = vld [vmem:[#allocation6 + $0x718] sm:$0xff]
    %v499 = vld [vmem:[#allocation6 + $0x720] sm:$0xff]
    %v500 = vld [vmem:[#allocation6 + $0x728] sm:$0xff]
    %v501 = vld [vmem:[#allocation6 + $0x730] sm:$0xff]
    %v502 = vld [vmem:[#allocation6 + $0x738] sm:$0xff]
    %v503 = vld [vmem:[#allocation6 + $0x740] sm:$0xff]
    %v504 = vld [vmem:[#allocation6 + $0x748] sm:$0xff]
    %v505 = vld [vmem:[#allocation6 + $0x750] sm:$0xff]
    %v506 = vld [vmem:[#allocation6 + $0x758] sm:$0xff]
    %v507 = vld [vmem:[#allocation6 + $0x760] sm:$0xff]
    %v508 = vld [vmem:[#allocation6 + $0x768] sm:$0xff]
    %v509 = vld [vmem:[#allocation6 + $0x770] sm:$0xff]
    %v510 = vld [vmem:[#allocation6 + $0x778] sm:$0xff]
    %v511 = vld [vmem:[#allocation6 + $0x780] sm:$0xff]
    %v512 = vld [vmem:[#allocation6 + $0x788] sm:$0xff]
    %v513 = vld [vmem:[#allocation6 + $0x790] sm:$0xff]
    %v514 = vld [vmem:[#allocation6 + $0x798] sm:$0xff]
    %v515 = vld [vmem:[#allocation6 + $0x7a0] sm:$0xff]
    %v516 = vld [vmem:[#allocation6 + $0x7a8] sm:$0xff]
    %v517 = vld [vmem:[#allocation6 + $0x7b0] sm:$0xff]
    %v518 = vld [vmem:[#allocation6 + $0x7b8] sm:$0xff]
    %v519 = vld [vmem:[#allocation6 + $0x7c0] sm:$0xff]
    %v520 = vld [vmem:[#allocation6 + $0x7c8] sm:$0xff]
    %v521 = vld [vmem:[#allocation6 + $0x7d0] sm:$0xff]
    %v522 = vld [vmem:[#allocation6 + $0x7d8] sm:$0xff]
    %v523 = vld [vmem:[#allocation6 + $0x7e0] sm:$0xff]
    %v524 = vld [vmem:[#allocation6 + $0x7e8] sm:$0xff]
    %v525 = vld [vmem:[#allocation6 + $0x7f0] sm:$0xff]
    %v526 = vld [vmem:[#allocation6 + $0x7f8] sm:$0xff]
    %v527 = vld [vmem:[%s2] sm:$0xf]
    %v529 = vlaneseq
    %v530 = vshrl.u32 %v529, 7
    %v531 = vsub.s32 0, %v530
    %v532 = vrot.slane %v527, %v531
    %v533 = vlaneseq
    %v534 = vshrl.u32 %v533, 7
    %v535 = vsub.s32 1, %v534
    %v536 = vrot.slane %v527, %v535
    %v537 = vlaneseq
    %v538 = vshrl.u32 %v537, 7
    %v539 = vsub.s32 2, %v538
    %v540 = vrot.slane %v527, %v539
    %v541 = vlaneseq
    %v542 = vshrl.u32 %v541, 7
    %v543 = vsub.s32 3, %v542
    %v544 = vrot.slane %v527, %v543
    %v805 = vunpack.c.l.b16 %v271
    %v806 = vunpack.c.h.b16 %v271
    %v807 = vunpack.c.l.b16 %v272
    %v808 = vunpack.c.h.b16 %v272
    %v809 = vunpack.c.l.b16 %v273
    %v810 = vunpack.c.h.b16 %v273
    %v811 = vunpack.c.l.b16 %v274
    %v812 = vunpack.c.h.b16 %v274
    %v813 = vunpack.c.l.b16 %v275
    %v814 = vunpack.c.h.b16 %v275
    %v815 = vunpack.c.l.b16 %v276
    %v816 = vunpack.c.h.b16 %v276
    %v817 = vunpack.c.l.b16 %v277
    %v818 = vunpack.c.h.b16 %v277
    %v819 = vunpack.c.l.b16 %v278
    %v820 = vunpack.c.h.b16 %v278
    %v821 = vunpack.c.l.b16 %v279
    %v822 = vunpack.c.h.b16 %v279
    %v823 = vunpack.c.l.b16 %v280
    %v824 = vunpack.c.h.b16 %v280
    %v825 = vunpack.c.l.b16 %v281
    %v826 = vunpack.c.h.b16 %v281
    %v827 = vunpack.c.l.b16 %v282
    %v828 = vunpack.c.h.b16 %v282
    %v829 = vunpack.c.l.b16 %v283
    %v830 = vunpack.c.h.b16 %v283
    %v831 = vunpack.c.l.b16 %v284
    %v832 = vunpack.c.h.b16 %v284
    %v833 = vunpack.c.l.b16 %v285
    %v834 = vunpack.c.h.b16 %v285
    %v835 = vunpack.c.l.b16 %v286
    %v836 = vunpack.c.h.b16 %v286
    %v837 = vunpack.c.l.b16 %v287
    %v838 = vunpack.c.h.b16 %v287
    %v839 = vunpack.c.l.b16 %v288
    %v840 = vunpack.c.h.b16 %v288
    %v841 = vunpack.c.l.b16 %v289
    %v842 = vunpack.c.h.b16 %v289
    %v843 = vunpack.c.l.b16 %v290
    %v844 = vunpack.c.h.b16 %v290
    %v845 = vunpack.c.l.b16 %v291
    %v846 = vunpack.c.h.b16 %v291
    %v847 = vunpack.c.l.b16 %v292
    %v848 = vunpack.c.h.b16 %v292
    %v849 = vunpack.c.l.b16 %v293
    %v850 = vunpack.c.h.b16 %v293
    %v851 = vunpack.c.l.b16 %v294
    %v852 = vunpack.c.h.b16 %v294
    %v853 = vunpack.c.l.b16 %v295
    %v854 = vunpack.c.h.b16 %v295
    %v855 = vunpack.c.l.b16 %v296
    %v856 = vunpack.c.h.b16 %v296
    %v857 = vunpack.c.l.b16 %v297
    %v858 = vunpack.c.h.b16 %v297
    %v859 = vunpack.c.l.b16 %v298
    %v860 = vunpack.c.h.b16 %v298
    %v861 = vunpack.c.l.b16 %v299
    %v862 = vunpack.c.h.b16 %v299
    %v863 = vunpack.c.l.b16 %v300
    %v864 = vunpack.c.h.b16 %v300
    %v865 = vunpack.c.l.b16 %v301
    %v866 = vunpack.c.h.b16 %v301
    %v867 = vunpack.c.l.b16 %v302
    %v868 = vunpack.c.h.b16 %v302
    %v869 = vunpack.c.l.b16 %v303
    %v870 = vunpack.c.h.b16 %v303
    %v871 = vunpack.c.l.b16 %v304
    %v872 = vunpack.c.h.b16 %v304
    %v873 = vunpack.c.l.b16 %v305
    %v874 = vunpack.c.h.b16 %v305
    %v875 = vunpack.c.l.b16 %v306
    %v876 = vunpack.c.h.b16 %v306
    %v877 = vunpack.c.l.b16 %v307
    %v878 = vunpack.c.h.b16 %v307
    %v879 = vunpack.c.l.b16 %v308
    %v880 = vunpack.c.h.b16 %v308
    %v881 = vunpack.c.l.b16 %v309
    %v882 = vunpack.c.h.b16 %v309
    %v883 = vunpack.c.l.b16 %v310
    %v884 = vunpack.c.h.b16 %v310
    %v885 = vunpack.c.l.b16 %v311
    %v886 = vunpack.c.h.b16 %v311
    %v887 = vunpack.c.l.b16 %v312
    %v888 = vunpack.c.h.b16 %v312
    %v889 = vunpack.c.l.b16 %v313
    %v890 = vunpack.c.h.b16 %v313
    %v891 = vunpack.c.l.b16 %v314
    %v892 = vunpack.c.h.b16 %v314
    %v893 = vunpack.c.l.b16 %v315
    %v894 = vunpack.c.h.b16 %v315
    %v895 = vunpack.c.l.b16 %v316
    %v896 = vunpack.c.h.b16 %v316
    %v897 = vunpack.c.l.b16 %v317
    %v898 = vunpack.c.h.b16 %v317
    %v899 = vunpack.c.l.b16 %v318
    %v900 = vunpack.c.h.b16 %v318
    %v901 = vunpack.c.l.b16 %v319
    %v902 = vunpack.c.h.b16 %v319
    %v903 = vunpack.c.l.b16 %v320
    %v904 = vunpack.c.h.b16 %v320
    %v905 = vunpack.c.l.b16 %v321
    %v906 = vunpack.c.h.b16 %v321
    %v907 = vunpack.c.l.b16 %v322
    %v908 = vunpack.c.h.b16 %v322
    %v909 = vunpack.c.l.b16 %v323
    %v910 = vunpack.c.h.b16 %v323
    %v911 = vunpack.c.l.b16 %v324
    %v912 = vunpack.c.h.b16 %v324
    %v913 = vunpack.c.l.b16 %v325
    %v914 = vunpack.c.h.b16 %v325
    %v915 = vunpack.c.l.b16 %v326
    %v916 = vunpack.c.h.b16 %v326
    %v917 = vunpack.c.l.b16 %v327
    %v918 = vunpack.c.h.b16 %v327
    %v919 = vunpack.c.l.b16 %v328
    %v920 = vunpack.c.h.b16 %v328
    %v921 = vunpack.c.l.b16 %v329
    %v922 = vunpack.c.h.b16 %v329
    %v923 = vunpack.c.l.b16 %v330
    %v924 = vunpack.c.h.b16 %v330
    %v925 = vunpack.c.l.b16 %v331
    %v926 = vunpack.c.h.b16 %v331
    %v927 = vunpack.c.l.b16 %v332
    %v928 = vunpack.c.h.b16 %v332
    %v929 = vunpack.c.l.b16 %v333
    %v930 = vunpack.c.h.b16 %v333
    %v931 = vunpack.c.l.b16 %v334
    %v932 = vunpack.c.h.b16 %v334
    %v933 = vunpack.c.l.b16 %v335
    %v934 = vunpack.c.h.b16 %v335
    %v935 = vunpack.c.l.b16 %v336
    %v936 = vunpack.c.h.b16 %v336
    %v937 = vunpack.c.l.b16 %v337
    %v938 = vunpack.c.h.b16 %v337
    %v939 = vunpack.c.l.b16 %v338
    %v940 = vunpack.c.h.b16 %v338
    %v941 = vunpack.c.l.b16 %v339
    %v942 = vunpack.c.h.b16 %v339
    %v943 = vunpack.c.l.b16 %v340
    %v944 = vunpack.c.h.b16 %v340
    %v945 = vunpack.c.l.b16 %v341
    %v946 = vunpack.c.h.b16 %v341
    %v947 = vunpack.c.l.b16 %v342
    %v948 = vunpack.c.h.b16 %v342
    %v949 = vunpack.c.l.b16 %v343
    %v950 = vunpack.c.h.b16 %v343
    %v951 = vunpack.c.l.b16 %v344
    %v952 = vunpack.c.h.b16 %v344
    %v953 = vunpack.c.l.b16 %v345
    %v954 = vunpack.c.h.b16 %v345
    %v955 = vunpack.c.l.b16 %v346
    %v956 = vunpack.c.h.b16 %v346
    %v957 = vunpack.c.l.b16 %v347
    %v958 = vunpack.c.h.b16 %v347
    %v959 = vunpack.c.l.b16 %v348
    %v960 = vunpack.c.h.b16 %v348
    %v961 = vunpack.c.l.b16 %v349
    %v962 = vunpack.c.h.b16 %v349
    %v963 = vunpack.c.l.b16 %v350
    %v964 = vunpack.c.h.b16 %v350
    %v965 = vunpack.c.l.b16 %v351
    %v966 = vunpack.c.h.b16 %v351
    %v967 = vunpack.c.l.b16 %v352
    %v968 = vunpack.c.h.b16 %v352
    %v969 = vunpack.c.l.b16 %v353
    %v970 = vunpack.c.h.b16 %v353
    %v971 = vunpack.c.l.b16 %v354
    %v972 = vunpack.c.h.b16 %v354
    %v973 = vunpack.c.l.b16 %v355
    %v974 = vunpack.c.h.b16 %v355
    %v975 = vunpack.c.l.b16 %v356
    %v976 = vunpack.c.h.b16 %v356
    %v977 = vunpack.c.l.b16 %v357
    %v978 = vunpack.c.h.b16 %v357
    %v979 = vunpack.c.l.b16 %v358
    %v980 = vunpack.c.h.b16 %v358
    %v981 = vunpack.c.l.b16 %v359
    %v982 = vunpack.c.h.b16 %v359
    %v983 = vunpack.c.l.b16 %v360
    %v984 = vunpack.c.h.b16 %v360
    %v985 = vunpack.c.l.b16 %v361
    %v986 = vunpack.c.h.b16 %v361
    %v987 = vunpack.c.l.b16 %v362
    %v988 = vunpack.c.h.b16 %v362
    %v989 = vunpack.c.l.b16 %v363
    %v990 = vunpack.c.h.b16 %v363
    %v991 = vunpack.c.l.b16 %v364
    %v992 = vunpack.c.h.b16 %v364
    %v993 = vunpack.c.l.b16 %v365
    %v994 = vunpack.c.h.b16 %v365
    %v995 = vunpack.c.l.b16 %v366
    %v996 = vunpack.c.h.b16 %v366
    %v997 = vunpack.c.l.b16 %v367
    %v998 = vunpack.c.h.b16 %v367
    %v999 = vunpack.c.l.b16 %v368
    %v1000 = vunpack.c.h.b16 %v368
    %v1001 = vunpack.c.l.b16 %v369
    %v1002 = vunpack.c.h.b16 %v369
    %v1003 = vunpack.c.l.b16 %v370
    %v1004 = vunpack.c.h.b16 %v370
    %v1005 = vunpack.c.l.b16 %v371
    %v1006 = vunpack.c.h.b16 %v371
    %v1007 = vunpack.c.l.b16 %v372
    %v1008 = vunpack.c.h.b16 %v372
    %v1009 = vunpack.c.l.b16 %v373
    %v1010 = vunpack.c.h.b16 %v373
    %v1011 = vunpack.c.l.b16 %v374
    %v1012 = vunpack.c.h.b16 %v374
    %v1013 = vunpack.c.l.b16 %v375
    %v1014 = vunpack.c.h.b16 %v375
    %v1015 = vunpack.c.l.b16 %v376
    %v1016 = vunpack.c.h.b16 %v376
    %v1017 = vunpack.c.l.b16 %v377
    %v1018 = vunpack.c.h.b16 %v377
    %v1019 = vunpack.c.l.b16 %v378
    %v1020 = vunpack.c.h.b16 %v378
    %v1021 = vunpack.c.l.b16 %v379
    %v1022 = vunpack.c.h.b16 %v379
    %v1023 = vunpack.c.l.b16 %v380
    %v1024 = vunpack.c.h.b16 %v380
    %v1025 = vunpack.c.l.b16 %v381
    %v1026 = vunpack.c.h.b16 %v381
    %v1027 = vunpack.c.l.b16 %v382
    %v1028 = vunpack.c.h.b16 %v382
    %v1029 = vunpack.c.l.b16 %v383
    %v1030 = vunpack.c.h.b16 %v383
    %v1031 = vunpack.c.l.b16 %v384
    %v1032 = vunpack.c.h.b16 %v384
    %v1033 = vunpack.c.l.b16 %v385
    %v1034 = vunpack.c.h.b16 %v385
    %v1035 = vunpack.c.l.b16 %v386
    %v1036 = vunpack.c.h.b16 %v386
    %v1037 = vunpack.c.l.b16 %v387
    %v1038 = vunpack.c.h.b16 %v387
    %v1039 = vunpack.c.l.b16 %v388
    %v1040 = vunpack.c.h.b16 %v388
    %v1041 = vunpack.c.l.b16 %v389
    %v1042 = vunpack.c.h.b16 %v389
    %v1043 = vunpack.c.l.b16 %v390
    %v1044 = vunpack.c.h.b16 %v390
    %v1045 = vunpack.c.l.b16 %v391
    %v1046 = vunpack.c.h.b16 %v391
    %v1047 = vunpack.c.l.b16 %v392
    %v1048 = vunpack.c.h.b16 %v392
    %v1049 = vunpack.c.l.b16 %v393
    %v1050 = vunpack.c.h.b16 %v393
    %v1051 = vunpack.c.l.b16 %v394
    %v1052 = vunpack.c.h.b16 %v394
    %v1053 = vunpack.c.l.b16 %v395
    %v1054 = vunpack.c.h.b16 %v395
    %v1055 = vunpack.c.l.b16 %v396
    %v1056 = vunpack.c.h.b16 %v396
    %v1057 = vunpack.c.l.b16 %v397
    %v1058 = vunpack.c.h.b16 %v397
    %v1059 = vunpack.c.l.b16 %v398
    %v1060 = vunpack.c.h.b16 %v398
    %v1061 = vunpack.c.l.b16 %v399
    %v1062 = vunpack.c.h.b16 %v399
    %v1063 = vunpack.c.l.b16 %v400
    %v1064 = vunpack.c.h.b16 %v400
    %v1065 = vunpack.c.l.b16 %v401
    %v1066 = vunpack.c.h.b16 %v401
    %v1067 = vunpack.c.l.b16 %v402
    %v1068 = vunpack.c.h.b16 %v402
    %v1069 = vunpack.c.l.b16 %v403
    %v1070 = vunpack.c.h.b16 %v403
    %v1071 = vunpack.c.l.b16 %v404
    %v1072 = vunpack.c.h.b16 %v404
    %v1073 = vunpack.c.l.b16 %v405
    %v1074 = vunpack.c.h.b16 %v405
    %v1075 = vunpack.c.l.b16 %v406
    %v1076 = vunpack.c.h.b16 %v406
    %v1077 = vunpack.c.l.b16 %v407
    %v1078 = vunpack.c.h.b16 %v407
    %v1079 = vunpack.c.l.b16 %v408
    %v1080 = vunpack.c.h.b16 %v408
    %v1081 = vunpack.c.l.b16 %v409
    %v1082 = vunpack.c.h.b16 %v409
    %v1083 = vunpack.c.l.b16 %v410
    %v1084 = vunpack.c.h.b16 %v410
    %v1085 = vunpack.c.l.b16 %v411
    %v1086 = vunpack.c.h.b16 %v411
    %v1087 = vunpack.c.l.b16 %v412
    %v1088 = vunpack.c.h.b16 %v412
    %v1089 = vunpack.c.l.b16 %v413
    %v1090 = vunpack.c.h.b16 %v413
    %v1091 = vunpack.c.l.b16 %v414
    %v1092 = vunpack.c.h.b16 %v414
    %v1093 = vunpack.c.l.b16 %v415
    %v1094 = vunpack.c.h.b16 %v415
    %v1095 = vunpack.c.l.b16 %v416
    %v1096 = vunpack.c.h.b16 %v416
    %v1097 = vunpack.c.l.b16 %v417
    %v1098 = vunpack.c.h.b16 %v417
    %v1099 = vunpack.c.l.b16 %v418
    %v1100 = vunpack.c.h.b16 %v418
    %v1101 = vunpack.c.l.b16 %v419
    %v1102 = vunpack.c.h.b16 %v419
    %v1103 = vunpack.c.l.b16 %v420
    %v1104 = vunpack.c.h.b16 %v420
    %v1105 = vunpack.c.l.b16 %v421
    %v1106 = vunpack.c.h.b16 %v421
    %v1107 = vunpack.c.l.b16 %v422
    %v1108 = vunpack.c.h.b16 %v422
    %v1109 = vunpack.c.l.b16 %v423
    %v1110 = vunpack.c.h.b16 %v423
    %v1111 = vunpack.c.l.b16 %v424
    %v1112 = vunpack.c.h.b16 %v424
    %v1113 = vunpack.c.l.b16 %v425
    %v1114 = vunpack.c.h.b16 %v425
    %v1115 = vunpack.c.l.b16 %v426
    %v1116 = vunpack.c.h.b16 %v426
    %v1117 = vunpack.c.l.b16 %v427
    %v1118 = vunpack.c.h.b16 %v427
    %v1119 = vunpack.c.l.b16 %v428
    %v1120 = vunpack.c.h.b16 %v428
    %v1121 = vunpack.c.l.b16 %v429
    %v1122 = vunpack.c.h.b16 %v429
    %v1123 = vunpack.c.l.b16 %v430
    %v1124 = vunpack.c.h.b16 %v430
    %v1125 = vunpack.c.l.b16 %v431
    %v1126 = vunpack.c.h.b16 %v431
    %v1127 = vunpack.c.l.b16 %v432
    %v1128 = vunpack.c.h.b16 %v432
    %v1129 = vunpack.c.l.b16 %v433
    %v1130 = vunpack.c.h.b16 %v433
    %v1131 = vunpack.c.l.b16 %v434
    %v1132 = vunpack.c.h.b16 %v434
    %v1133 = vunpack.c.l.b16 %v435
    %v1134 = vunpack.c.h.b16 %v435
    %v1135 = vunpack.c.l.b16 %v436
    %v1136 = vunpack.c.h.b16 %v436
    %v1137 = vunpack.c.l.b16 %v437
    %v1138 = vunpack.c.h.b16 %v437
    %v1139 = vunpack.c.l.b16 %v438
    %v1140 = vunpack.c.h.b16 %v438
    %v1141 = vunpack.c.l.b16 %v439
    %v1142 = vunpack.c.h.b16 %v439
    %v1143 = vunpack.c.l.b16 %v440
    %v1144 = vunpack.c.h.b16 %v440
    %v1145 = vunpack.c.l.b16 %v441
    %v1146 = vunpack.c.h.b16 %v441
    %v1147 = vunpack.c.l.b16 %v442
    %v1148 = vunpack.c.h.b16 %v442
    %v1149 = vunpack.c.l.b16 %v443
    %v1150 = vunpack.c.h.b16 %v443
    %v1151 = vunpack.c.l.b16 %v444
    %v1152 = vunpack.c.h.b16 %v444
    %v1153 = vunpack.c.l.b16 %v445
    %v1154 = vunpack.c.h.b16 %v445
    %v1155 = vunpack.c.l.b16 %v446
    %v1156 = vunpack.c.h.b16 %v446
    %v1157 = vunpack.c.l.b16 %v447
    %v1158 = vunpack.c.h.b16 %v447
    %v1159 = vunpack.c.l.b16 %v448
    %v1160 = vunpack.c.h.b16 %v448
    %v1161 = vunpack.c.l.b16 %v449
    %v1162 = vunpack.c.h.b16 %v449
    %v1163 = vunpack.c.l.b16 %v450
    %v1164 = vunpack.c.h.b16 %v450
    %v1165 = vunpack.c.l.b16 %v451
    %v1166 = vunpack.c.h.b16 %v451
    %v1167 = vunpack.c.l.b16 %v452
    %v1168 = vunpack.c.h.b16 %v452
    %v1169 = vunpack.c.l.b16 %v453
    %v1170 = vunpack.c.h.b16 %v453
    %v1171 = vunpack.c.l.b16 %v454
    %v1172 = vunpack.c.h.b16 %v454
    %v1173 = vunpack.c.l.b16 %v455
    %v1174 = vunpack.c.h.b16 %v455
    %v1175 = vunpack.c.l.b16 %v456
    %v1176 = vunpack.c.h.b16 %v456
    %v1177 = vunpack.c.l.b16 %v457
    %v1178 = vunpack.c.h.b16 %v457
    %v1179 = vunpack.c.l.b16 %v458
    %v1180 = vunpack.c.h.b16 %v458
    %v1181 = vunpack.c.l.b16 %v459
    %v1182 = vunpack.c.h.b16 %v459
    %v1183 = vunpack.c.l.b16 %v460
    %v1184 = vunpack.c.h.b16 %v460
    %v1185 = vunpack.c.l.b16 %v461
    %v1186 = vunpack.c.h.b16 %v461
    %v1187 = vunpack.c.l.b16 %v462
    %v1188 = vunpack.c.h.b16 %v462
    %v1189 = vunpack.c.l.b16 %v463
    %v1190 = vunpack.c.h.b16 %v463
    %v1191 = vunpack.c.l.b16 %v464
    %v1192 = vunpack.c.h.b16 %v464
    %v1193 = vunpack.c.l.b16 %v465
    %v1194 = vunpack.c.h.b16 %v465
    %v1195 = vunpack.c.l.b16 %v466
    %v1196 = vunpack.c.h.b16 %v466
    %v1197 = vunpack.c.l.b16 %v467
    %v1198 = vunpack.c.h.b16 %v467
    %v1199 = vunpack.c.l.b16 %v468
    %v1200 = vunpack.c.h.b16 %v468
    %v1201 = vunpack.c.l.b16 %v469
    %v1202 = vunpack.c.h.b16 %v469
    %v1203 = vunpack.c.l.b16 %v470
    %v1204 = vunpack.c.h.b16 %v470
    %v1205 = vunpack.c.l.b16 %v471
    %v1206 = vunpack.c.h.b16 %v471
    %v1207 = vunpack.c.l.b16 %v472
    %v1208 = vunpack.c.h.b16 %v472
    %v1209 = vunpack.c.l.b16 %v473
    %v1210 = vunpack.c.h.b16 %v473
    %v1211 = vunpack.c.l.b16 %v474
    %v1212 = vunpack.c.h.b16 %v474
    %v1213 = vunpack.c.l.b16 %v475
    %v1214 = vunpack.c.h.b16 %v475
    %v1215 = vunpack.c.l.b16 %v476
    %v1216 = vunpack.c.h.b16 %v476
    %v1217 = vunpack.c.l.b16 %v477
    %v1218 = vunpack.c.h.b16 %v477
    %v1219 = vunpack.c.l.b16 %v478
    %v1220 = vunpack.c.h.b16 %v478
    %v1221 = vunpack.c.l.b16 %v479
    %v1222 = vunpack.c.h.b16 %v479
    %v1223 = vunpack.c.l.b16 %v480
    %v1224 = vunpack.c.h.b16 %v480
    %v1225 = vunpack.c.l.b16 %v481
    %v1226 = vunpack.c.h.b16 %v481
    %v1227 = vunpack.c.l.b16 %v482
    %v1228 = vunpack.c.h.b16 %v482
    %v1229 = vunpack.c.l.b16 %v483
    %v1230 = vunpack.c.h.b16 %v483
    %v1231 = vunpack.c.l.b16 %v484
    %v1232 = vunpack.c.h.b16 %v484
    %v1233 = vunpack.c.l.b16 %v485
    %v1234 = vunpack.c.h.b16 %v485
    %v1235 = vunpack.c.l.b16 %v486
    %v1236 = vunpack.c.h.b16 %v486
    %v1237 = vunpack.c.l.b16 %v487
    %v1238 = vunpack.c.h.b16 %v487
    %v1239 = vunpack.c.l.b16 %v488
    %v1240 = vunpack.c.h.b16 %v488
    %v1241 = vunpack.c.l.b16 %v489
    %v1242 = vunpack.c.h.b16 %v489
    %v1243 = vunpack.c.l.b16 %v490
    %v1244 = vunpack.c.h.b16 %v490
    %v1245 = vunpack.c.l.b16 %v491
    %v1246 = vunpack.c.h.b16 %v491
    %v1247 = vunpack.c.l.b16 %v492
    %v1248 = vunpack.c.h.b16 %v492
    %v1249 = vunpack.c.l.b16 %v493
    %v1250 = vunpack.c.h.b16 %v493
    %v1251 = vunpack.c.l.b16 %v494
    %v1252 = vunpack.c.h.b16 %v494
    %v1253 = vunpack.c.l.b16 %v495
    %v1254 = vunpack.c.h.b16 %v495
    %v1255 = vunpack.c.l.b16 %v496
    %v1256 = vunpack.c.h.b16 %v496
    %v1257 = vunpack.c.l.b16 %v497
    %v1258 = vunpack.c.h.b16 %v497
    %v1259 = vunpack.c.l.b16 %v498
    %v1260 = vunpack.c.h.b16 %v498
    %v1261 = vunpack.c.l.b16 %v499
    %v1262 = vunpack.c.h.b16 %v499
    %v1263 = vunpack.c.l.b16 %v500
    %v1264 = vunpack.c.h.b16 %v500
    %v1265 = vunpack.c.l.b16 %v501
    %v1266 = vunpack.c.h.b16 %v501
    %v1267 = vunpack.c.l.b16 %v502
    %v1268 = vunpack.c.h.b16 %v502
    %v1269 = vunpack.c.l.b16 %v503
    %v1270 = vunpack.c.h.b16 %v503
    %v1271 = vunpack.c.l.b16 %v504
    %v1272 = vunpack.c.h.b16 %v504
    %v1273 = vunpack.c.l.b16 %v505
    %v1274 = vunpack.c.h.b16 %v505
    %v1275 = vunpack.c.l.b16 %v506
    %v1276 = vunpack.c.h.b16 %v506
    %v1277 = vunpack.c.l.b16 %v507
    %v1278 = vunpack.c.h.b16 %v507
    %v1279 = vunpack.c.l.b16 %v508
    %v1280 = vunpack.c.h.b16 %v508
    %v1281 = vunpack.c.l.b16 %v509
    %v1282 = vunpack.c.h.b16 %v509
    %v1283 = vunpack.c.l.b16 %v510
    %v1284 = vunpack.c.h.b16 %v510
    %v1285 = vunpack.c.l.b16 %v511
    %v1286 = vunpack.c.h.b16 %v511
    %v1287 = vunpack.c.l.b16 %v512
    %v1288 = vunpack.c.h.b16 %v512
    %v1289 = vunpack.c.l.b16 %v513
    %v1290 = vunpack.c.h.b16 %v513
    %v1291 = vunpack.c.l.b16 %v514
    %v1292 = vunpack.c.h.b16 %v514
    %v1293 = vunpack.c.l.b16 %v515
    %v1294 = vunpack.c.h.b16 %v515
    %v1295 = vunpack.c.l.b16 %v516
    %v1296 = vunpack.c.h.b16 %v516
    %v1297 = vunpack.c.l.b16 %v517
    %v1298 = vunpack.c.h.b16 %v517
    %v1299 = vunpack.c.l.b16 %v518
    %v1300 = vunpack.c.h.b16 %v518
    %v1301 = vunpack.c.l.b16 %v519
    %v1302 = vunpack.c.h.b16 %v519
    %v1303 = vunpack.c.l.b16 %v520
    %v1304 = vunpack.c.h.b16 %v520
    %v1305 = vunpack.c.l.b16 %v521
    %v1306 = vunpack.c.h.b16 %v521
    %v1307 = vunpack.c.l.b16 %v522
    %v1308 = vunpack.c.h.b16 %v522
    %v1309 = vunpack.c.l.b16 %v523
    %v1310 = vunpack.c.h.b16 %v523
    %v1311 = vunpack.c.l.b16 %v524
    %v1312 = vunpack.c.h.b16 %v524
    %v1313 = vunpack.c.l.b16 %v525
    %v1314 = vunpack.c.h.b16 %v525
    %v1315 = vunpack.c.l.b16 %v526
    %v1316 = vunpack.c.h.b16 %v526
    %v1317 = vpack.c.b16 %v809, %v805
    %v1318 = vpack.c.b16 %v810, %v806
    %v1319 = vpack.c.b16 %v811, %v807
    %v1320 = vpack.c.b16 %v812, %v808
    %v1321 = vpack.c.b16 %v817, %v813
    %v1322 = vpack.c.b16 %v818, %v814
    %v1323 = vpack.c.b16 %v819, %v815
    %v1324 = vpack.c.b16 %v820, %v816
    %v1325 = vpack.c.b16 %v825, %v821
    %v1326 = vpack.c.b16 %v826, %v822
    %v1327 = vpack.c.b16 %v827, %v823
    %v1328 = vpack.c.b16 %v828, %v824
    %v1329 = vpack.c.b16 %v833, %v829
    %v1330 = vpack.c.b16 %v834, %v830
    %v1331 = vpack.c.b16 %v835, %v831
    %v1332 = vpack.c.b16 %v836, %v832
    %v1333 = vpack.c.b16 %v841, %v837
    %v1334 = vpack.c.b16 %v842, %v838
    %v1335 = vpack.c.b16 %v843, %v839
    %v1336 = vpack.c.b16 %v844, %v840
    %v1337 = vpack.c.b16 %v849, %v845
    %v1338 = vpack.c.b16 %v850, %v846
    %v1339 = vpack.c.b16 %v851, %v847
    %v1340 = vpack.c.b16 %v852, %v848
    %v1341 = vpack.c.b16 %v857, %v853
    %v1342 = vpack.c.b16 %v858, %v854
    %v1343 = vpack.c.b16 %v859, %v855
    %v1344 = vpack.c.b16 %v860, %v856
    %v1345 = vpack.c.b16 %v865, %v861
    %v1346 = vpack.c.b16 %v866, %v862
    %v1347 = vpack.c.b16 %v867, %v863
    %v1348 = vpack.c.b16 %v868, %v864
    %v1349 = vpack.c.b16 %v873, %v869
    %v1350 = vpack.c.b16 %v874, %v870
    %v1351 = vpack.c.b16 %v875, %v871
    %v1352 = vpack.c.b16 %v876, %v872
    %v1353 = vpack.c.b16 %v881, %v877
    %v1354 = vpack.c.b16 %v882, %v878
    %v1355 = vpack.c.b16 %v883, %v879
    %v1356 = vpack.c.b16 %v884, %v880
    %v1357 = vpack.c.b16 %v889, %v885
    %v1358 = vpack.c.b16 %v890, %v886
    %v1359 = vpack.c.b16 %v891, %v887
    %v1360 = vpack.c.b16 %v892, %v888
    %v1361 = vpack.c.b16 %v897, %v893
    %v1362 = vpack.c.b16 %v898, %v894
    %v1363 = vpack.c.b16 %v899, %v895
    %v1364 = vpack.c.b16 %v900, %v896
    %v1365 = vpack.c.b16 %v905, %v901
    %v1366 = vpack.c.b16 %v906, %v902
    %v1367 = vpack.c.b16 %v907, %v903
    %v1368 = vpack.c.b16 %v908, %v904
    %v1369 = vpack.c.b16 %v913, %v909
    %v1370 = vpack.c.b16 %v914, %v910
    %v1371 = vpack.c.b16 %v915, %v911
    %v1372 = vpack.c.b16 %v916, %v912
    %v1373 = vpack.c.b16 %v921, %v917
    %v1374 = vpack.c.b16 %v922, %v918
    %v1375 = vpack.c.b16 %v923, %v919
    %v1376 = vpack.c.b16 %v924, %v920
    %v1377 = vpack.c.b16 %v929, %v925
    %v1378 = vpack.c.b16 %v930, %v926
    %v1379 = vpack.c.b16 %v931, %v927
    %v1380 = vpack.c.b16 %v932, %v928
    %v1381 = vpack.c.b16 %v937, %v933
    %v1382 = vpack.c.b16 %v938, %v934
    %v1383 = vpack.c.b16 %v939, %v935
    %v1384 = vpack.c.b16 %v940, %v936
    %v1385 = vpack.c.b16 %v945, %v941
    %v1386 = vpack.c.b16 %v946, %v942
    %v1387 = vpack.c.b16 %v947, %v943
    %v1388 = vpack.c.b16 %v948, %v944
    %v1389 = vpack.c.b16 %v953, %v949
    %v1390 = vpack.c.b16 %v954, %v950
    %v1391 = vpack.c.b16 %v955, %v951
    %v1392 = vpack.c.b16 %v956, %v952
    %v1393 = vpack.c.b16 %v961, %v957
    %v1394 = vpack.c.b16 %v962, %v958
    %v1395 = vpack.c.b16 %v963, %v959
    %v1396 = vpack.c.b16 %v964, %v960
    %v1397 = vpack.c.b16 %v969, %v965
    %v1398 = vpack.c.b16 %v970, %v966
    %v1399 = vpack.c.b16 %v971, %v967
    %v1400 = vpack.c.b16 %v972, %v968
    %v1401 = vpack.c.b16 %v977, %v973
    %v1402 = vpack.c.b16 %v978, %v974
    %v1403 = vpack.c.b16 %v979, %v975
    %v1404 = vpack.c.b16 %v980, %v976
    %v1405 = vpack.c.b16 %v985, %v981
    %v1406 = vpack.c.b16 %v986, %v982
    %v1407 = vpack.c.b16 %v987, %v983
    %v1408 = vpack.c.b16 %v988, %v984
    %v1409 = vpack.c.b16 %v993, %v989
    %v1410 = vpack.c.b16 %v994, %v990
    %v1411 = vpack.c.b16 %v995, %v991
    %v1412 = vpack.c.b16 %v996, %v992
    %v1413 = vpack.c.b16 %v1001, %v997
    %v1414 = vpack.c.b16 %v1002, %v998
    %v1415 = vpack.c.b16 %v1003, %v999
    %v1416 = vpack.c.b16 %v1004, %v1000
    %v1417 = vpack.c.b16 %v1009, %v1005
    %v1418 = vpack.c.b16 %v1010, %v1006
    %v1419 = vpack.c.b16 %v1011, %v1007
    %v1420 = vpack.c.b16 %v1012, %v1008
    %v1421 = vpack.c.b16 %v1017, %v1013
    %v1422 = vpack.c.b16 %v1018, %v1014
    %v1423 = vpack.c.b16 %v1019, %v1015
    %v1424 = vpack.c.b16 %v1020, %v1016
    %v1425 = vpack.c.b16 %v1025, %v1021
    %v1426 = vpack.c.b16 %v1026, %v1022
    %v1427 = vpack.c.b16 %v1027, %v1023
    %v1428 = vpack.c.b16 %v1028, %v1024
    %v1429 = vpack.c.b16 %v1033, %v1029
    %v1430 = vpack.c.b16 %v1034, %v1030
    %v1431 = vpack.c.b16 %v1035, %v1031
    %v1432 = vpack.c.b16 %v1036, %v1032
    %v1433 = vpack.c.b16 %v1041, %v1037
    %v1434 = vpack.c.b16 %v1042, %v1038
    %v1435 = vpack.c.b16 %v1043, %v1039
    %v1436 = vpack.c.b16 %v1044, %v1040
    %v1437 = vpack.c.b16 %v1049, %v1045
    %v1438 = vpack.c.b16 %v1050, %v1046
    %v1439 = vpack.c.b16 %v1051, %v1047
    %v1440 = vpack.c.b16 %v1052, %v1048
    %v1441 = vpack.c.b16 %v1057, %v1053
    %v1442 = vpack.c.b16 %v1058, %v1054
    %v1443 = vpack.c.b16 %v1059, %v1055
    %v1444 = vpack.c.b16 %v1060, %v1056
    %v1445 = vpack.c.b16 %v1065, %v1061
    %v1446 = vpack.c.b16 %v1066, %v1062
    %v1447 = vpack.c.b16 %v1067, %v1063
    %v1448 = vpack.c.b16 %v1068, %v1064
    %v1449 = vpack.c.b16 %v1073, %v1069
    %v1450 = vpack.c.b16 %v1074, %v1070
    %v1451 = vpack.c.b16 %v1075, %v1071
    %v1452 = vpack.c.b16 %v1076, %v1072
    %v1453 = vpack.c.b16 %v1081, %v1077
    %v1454 = vpack.c.b16 %v1082, %v1078
    %v1455 = vpack.c.b16 %v1083, %v1079
    %v1456 = vpack.c.b16 %v1084, %v1080
    %v1457 = vpack.c.b16 %v1089, %v1085
    %v1458 = vpack.c.b16 %v1090, %v1086
    %v1459 = vpack.c.b16 %v1091, %v1087
    %v1460 = vpack.c.b16 %v1092, %v1088
    %v1461 = vpack.c.b16 %v1097, %v1093
    %v1462 = vpack.c.b16 %v1098, %v1094
    %v1463 = vpack.c.b16 %v1099, %v1095
    %v1464 = vpack.c.b16 %v1100, %v1096
    %v1465 = vpack.c.b16 %v1105, %v1101
    %v1466 = vpack.c.b16 %v1106, %v1102
    %v1467 = vpack.c.b16 %v1107, %v1103
    %v1468 = vpack.c.b16 %v1108, %v1104
    %v1469 = vpack.c.b16 %v1113, %v1109
    %v1470 = vpack.c.b16 %v1114, %v1110
    %v1471 = vpack.c.b16 %v1115, %v1111
    %v1472 = vpack.c.b16 %v1116, %v1112
    %v1473 = vpack.c.b16 %v1121, %v1117
    %v1474 = vpack.c.b16 %v1122, %v1118
    %v1475 = vpack.c.b16 %v1123, %v1119
    %v1476 = vpack.c.b16 %v1124, %v1120
    %v1477 = vpack.c.b16 %v1129, %v1125
    %v1478 = vpack.c.b16 %v1130, %v1126
    %v1479 = vpack.c.b16 %v1131, %v1127
    %v1480 = vpack.c.b16 %v1132, %v1128
    %v1481 = vpack.c.b16 %v1137, %v1133
    %v1482 = vpack.c.b16 %v1138, %v1134
    %v1483 = vpack.c.b16 %v1139, %v1135
    %v1484 = vpack.c.b16 %v1140, %v1136
    %v1485 = vpack.c.b16 %v1145, %v1141
    %v1486 = vpack.c.b16 %v1146, %v1142
    %v1487 = vpack.c.b16 %v1147, %v1143
    %v1488 = vpack.c.b16 %v1148, %v1144
    %v1489 = vpack.c.b16 %v1153, %v1149
    %v1490 = vpack.c.b16 %v1154, %v1150
    %v1491 = vpack.c.b16 %v1155, %v1151
    %v1492 = vpack.c.b16 %v1156, %v1152
    %v1493 = vpack.c.b16 %v1161, %v1157
    %v1494 = vpack.c.b16 %v1162, %v1158
    %v1495 = vpack.c.b16 %v1163, %v1159
    %v1496 = vpack.c.b16 %v1164, %v1160
    %v1497 = vpack.c.b16 %v1169, %v1165
    %v1498 = vpack.c.b16 %v1170, %v1166
    %v1499 = vpack.c.b16 %v1171, %v1167
    %v1500 = vpack.c.b16 %v1172, %v1168
    %v1501 = vpack.c.b16 %v1177, %v1173
    %v1502 = vpack.c.b16 %v1178, %v1174
    %v1503 = vpack.c.b16 %v1179, %v1175
    %v1504 = vpack.c.b16 %v1180, %v1176
    %v1505 = vpack.c.b16 %v1185, %v1181
    %v1506 = vpack.c.b16 %v1186, %v1182
    %v1507 = vpack.c.b16 %v1187, %v1183
    %v1508 = vpack.c.b16 %v1188, %v1184
    %v1509 = vpack.c.b16 %v1193, %v1189
    %v1510 = vpack.c.b16 %v1194, %v1190
    %v1511 = vpack.c.b16 %v1195, %v1191
    %v1512 = vpack.c.b16 %v1196, %v1192
    %v1513 = vpack.c.b16 %v1201, %v1197
    %v1514 = vpack.c.b16 %v1202, %v1198
    %v1515 = vpack.c.b16 %v1203, %v1199
    %v1516 = vpack.c.b16 %v1204, %v1200
    %v1517 = vpack.c.b16 %v1209, %v1205
    %v1518 = vpack.c.b16 %v1210, %v1206
    %v1519 = vpack.c.b16 %v1211, %v1207
    %v1520 = vpack.c.b16 %v1212, %v1208
    %v1521 = vpack.c.b16 %v1217, %v1213
    %v1522 = vpack.c.b16 %v1218, %v1214
    %v1523 = vpack.c.b16 %v1219, %v1215
    %v1524 = vpack.c.b16 %v1220, %v1216
    %v1525 = vpack.c.b16 %v1225, %v1221
    %v1526 = vpack.c.b16 %v1226, %v1222
    %v1527 = vpack.c.b16 %v1227, %v1223
    %v1528 = vpack.c.b16 %v1228, %v1224
    %v1529 = vpack.c.b16 %v1233, %v1229
    %v1530 = vpack.c.b16 %v1234, %v1230
    %v1531 = vpack.c.b16 %v1235, %v1231
    %v1532 = vpack.c.b16 %v1236, %v1232
    %v1533 = vpack.c.b16 %v1241, %v1237
    %v1534 = vpack.c.b16 %v1242, %v1238
    %v1535 = vpack.c.b16 %v1243, %v1239
    %v1536 = vpack.c.b16 %v1244, %v1240
    %v1537 = vpack.c.b16 %v1249, %v1245
    %v1538 = vpack.c.b16 %v1250, %v1246
    %v1539 = vpack.c.b16 %v1251, %v1247
    %v1540 = vpack.c.b16 %v1252, %v1248
    %v1541 = vpack.c.b16 %v1257, %v1253
    %v1542 = vpack.c.b16 %v1258, %v1254
    %v1543 = vpack.c.b16 %v1259, %v1255
    %v1544 = vpack.c.b16 %v1260, %v1256
    %v1545 = vpack.c.b16 %v1265, %v1261
    %v1546 = vpack.c.b16 %v1266, %v1262
    %v1547 = vpack.c.b16 %v1267, %v1263
    %v1548 = vpack.c.b16 %v1268, %v1264
    %v1549 = vpack.c.b16 %v1273, %v1269
    %v1550 = vpack.c.b16 %v1274, %v1270
    %v1551 = vpack.c.b16 %v1275, %v1271
    %v1552 = vpack.c.b16 %v1276, %v1272
    %v1553 = vpack.c.b16 %v1281, %v1277
    %v1554 = vpack.c.b16 %v1282, %v1278
    %v1555 = vpack.c.b16 %v1283, %v1279
    %v1556 = vpack.c.b16 %v1284, %v1280
    %v1557 = vpack.c.b16 %v1289, %v1285
    %v1558 = vpack.c.b16 %v1290, %v1286
    %v1559 = vpack.c.b16 %v1291, %v1287
    %v1560 = vpack.c.b16 %v1292, %v1288
    %v1561 = vpack.c.b16 %v1297, %v1293
    %v1562 = vpack.c.b16 %v1298, %v1294
    %v1563 = vpack.c.b16 %v1299, %v1295
    %v1564 = vpack.c.b16 %v1300, %v1296
    %v1565 = vpack.c.b16 %v1305, %v1301
    %v1566 = vpack.c.b16 %v1306, %v1302
    %v1567 = vpack.c.b16 %v1307, %v1303
    %v1568 = vpack.c.b16 %v1308, %v1304
    %v1569 = vpack.c.b16 %v1313, %v1309
    %v1570 = vpack.c.b16 %v1314, %v1310
    %v1571 = vpack.c.b16 %v1315, %v1311
    %v1572 = vpack.c.b16 %v1316, %v1312
    %1829 = vmatprep.subr.bf16.mxu0 %v1346
    %1830 = vmatpush1.bf16.msra.mxu0 %v1345
    %1831 = vmatprep.subr.bf16.mxu0 %v1342
    %1832 = vmatpush1.bf16.msra.mxu0 %v1341
    %1833 = vmatprep.subr.bf16.mxu0 %v1338
    %1834 = vmatpush1.bf16.msra.mxu0 %v1337
    %1835 = vmatprep.subr.bf16.mxu0 %v1334
    %1836 = vmatpush1.bf16.msra.mxu0 %v1333
    %1837 = vmatprep.subr.bf16.mxu0 %v1330
    %1838 = vmatpush1.bf16.msra.mxu0 %v1329
    %1839 = vmatprep.subr.bf16.mxu0 %v1326
    %1840 = vmatpush1.bf16.msra.mxu0 %v1325
    %1841 = vmatprep.subr.bf16.mxu0 %v1322
    %1842 = vmatpush1.bf16.msra.mxu0 %v1321
    %1843 = vmatprep.subr.bf16.mxu0 %v1318
    %1844 = vmatpush1.bf16.msra.mxu0 %v1317
    %1845 = vmatprep.subr.bf16.mxu0 %v1378
    %1846 = vmatpush2.bf16.msra.mxu0 %v1377
    %1847 = vmatprep.subr.bf16.mxu0 %v1374
    %1848 = vmatpush2.bf16.msra.mxu0 %v1373
    %1849 = vmatprep.subr.bf16.mxu0 %v1370
    %1850 = vmatpush2.bf16.msra.mxu0 %v1369
    %1851 = vmatprep.subr.bf16.mxu0 %v1366
    %1852 = vmatpush2.bf16.msra.mxu0 %v1365
    %1853 = vmatprep.subr.bf16.mxu0 %v1362
    %1854 = vmatpush2.bf16.msra.mxu0 %v1361
    %1855 = vmatprep.subr.bf16.mxu0 %v1358
    %1856 = vmatpush2.bf16.msra.mxu0 %v1357
    %1857 = vmatprep.subr.bf16.mxu0 %v1354
    %1858 = vmatpush2.bf16.msra.mxu0 %v1353
    %1859 = vmatprep.subr.bf16.mxu0 %v1350
    %1860 = vmatpush2.bf16.msra.mxu0 %v1349
    %1861 = vmatprep.mubr.bf16.mxu0 %v264
    %1862 = vmatmul.mubr.bf16.gmra.mxu0 %v263
    %v1863 = vpop.f32.mrf.mxu0
    %v1864 = vadd.f32 %v532, %v1863
    %v1865 = vpop.f32.mrf.mxu0
    %v1866 = vadd.f32 %v536, %v1865
    %v1867 = vpop.f32.mrf.mxu0
    %v1868 = vadd.f32 %v532, %v1867
    %v1869 = vpop.f32.mrf.mxu0
    %v1870 = vadd.f32 %v536, %v1869
    %1871 = vdwg.mxu0
    %1872 = vmatprep.subr.bf16.mxu0 %v1410
    %1873 = vmatpush1.bf16.msra.mxu0 %v1409
    %1874 = vmatprep.subr.bf16.mxu0 %v1406
    %1875 = vmatpush1.bf16.msra.mxu0 %v1405
    %1876 = vmatprep.subr.bf16.mxu0 %v1402
    %1877 = vmatpush1.bf16.msra.mxu0 %v1401
    %1878 = vmatprep.subr.bf16.mxu0 %v1398
    %1879 = vmatpush1.bf16.msra.mxu0 %v1397
    %1880 = vmatprep.subr.bf16.mxu0 %v1394
    %1881 = vmatpush1.bf16.msra.mxu0 %v1393
    %1882 = vmatprep.subr.bf16.mxu0 %v1390
    %1883 = vmatpush1.bf16.msra.mxu0 %v1389
    %1884 = vmatprep.subr.bf16.mxu0 %v1386
    %1885 = vmatpush1.bf16.msra.mxu0 %v1385
    %1886 = vmatprep.subr.bf16.mxu0 %v1382
    %1887 = vmatpush1.bf16.msra.mxu0 %v1381
    %1888 = vmatprep.subr.bf16.mxu0 %v1442
    %1889 = vmatpush2.bf16.msra.mxu0 %v1441
    %1890 = vmatprep.subr.bf16.mxu0 %v1438
    %1891 = vmatpush2.bf16.msra.mxu0 %v1437
    %1892 = vmatprep.subr.bf16.mxu0 %v1434
    %1893 = vmatpush2.bf16.msra.mxu0 %v1433
    %1894 = vmatprep.subr.bf16.mxu0 %v1430
    %1895 = vmatpush2.bf16.msra.mxu0 %v1429
    %1896 = vmatprep.subr.bf16.mxu0 %v1426
    %1897 = vmatpush2.bf16.msra.mxu0 %v1425
    %1898 = vmatprep.subr.bf16.mxu0 %v1422
    %1899 = vmatpush2.bf16.msra.mxu0 %v1421
    %1900 = vmatprep.subr.bf16.mxu0 %v1418
    %1901 = vmatpush2.bf16.msra.mxu0 %v1417
    %1902 = vmatprep.subr.bf16.mxu0 %v1414
    %1903 = vmatpush2.bf16.msra.mxu0 %v1413
    %1904 = vmatprep.mubr.bf16.mxu0 %v266
    %1905 = vmatmul.mubr.bf16.gmra.mxu0 %v265
    %v1906 = vpop.f32.mrf.mxu0
    %v1907 = vadd.f32 %v1864, %v1906
    %v1908 = vpop.f32.mrf.mxu0
    %v1909 = vadd.f32 %v1866, %v1908
    %v1910 = vpop.f32.mrf.mxu0
    %v1911 = vadd.f32 %v1868, %v1910
    %v1912 = vpop.f32.mrf.mxu0
    %v1913 = vadd.f32 %v1870, %v1912
    %1914 = vdwg.mxu0
    %1915 = vmatprep.subr.bf16.mxu0 %v1474
    %1916 = vmatpush1.bf16.msra.mxu0 %v1473
    %1917 = vmatprep.subr.bf16.mxu0 %v1470
    %1918 = vmatpush1.bf16.msra.mxu0 %v1469
    %1919 = vmatprep.subr.bf16.mxu0 %v1466
    %1920 = vmatpush1.bf16.msra.mxu0 %v1465
    %1921 = vmatprep.subr.bf16.mxu0 %v1462
    %1922 = vmatpush1.bf16.msra.mxu0 %v1461
    %1923 = vmatprep.subr.bf16.mxu0 %v1458
    %1924 = vmatpush1.bf16.msra.mxu0 %v1457
    %1925 = vmatprep.subr.bf16.mxu0 %v1454
    %1926 = vmatpush1.bf16.msra.mxu0 %v1453
    %1927 = vmatprep.subr.bf16.mxu0 %v1450
    %1928 = vmatpush1.bf16.msra.mxu0 %v1449
    %1929 = vmatprep.subr.bf16.mxu0 %v1446
    %1930 = vmatpush1.bf16.msra.mxu0 %v1445
    %1931 = vmatprep.subr.bf16.mxu0 %v1506
    %1932 = vmatpush2.bf16.msra.mxu0 %v1505
    %1933 = vmatprep.subr.bf16.mxu0 %v1502
    %1934 = vmatpush2.bf16.msra.mxu0 %v1501
    %1935 = vmatprep.subr.bf16.mxu0 %v1498
    %1936 = vmatpush2.bf16.msra.mxu0 %v1497
    %1937 = vmatprep.subr.bf16.mxu0 %v1494
    %1938 = vmatpush2.bf16.msra.mxu0 %v1493
    %1939 = vmatprep.subr.bf16.mxu0 %v1490
    %1940 = vmatpush2.bf16.msra.mxu0 %v1489
    %1941 = vmatprep.subr.bf16.mxu0 %v1486
    %1942 = vmatpush2.bf16.msra.mxu0 %v1485
    %1943 = vmatprep.subr.bf16.mxu0 %v1482
    %1944 = vmatpush2.bf16.msra.mxu0 %v1481
    %1945 = vmatprep.subr.bf16.mxu0 %v1478
    %1946 = vmatpush2.bf16.msra.mxu0 %v1477
    %1947 = vmatprep.mubr.bf16.mxu0 %v268
    %1948 = vmatmul.mubr.bf16.gmra.mxu0 %v267
    %v1949 = vpop.f32.mrf.mxu0
    %v1950 = vadd.f32 %v1907, %v1949
    %v1951 = vpop.f32.mrf.mxu0
    %v1952 = vadd.f32 %v1909, %v1951
    %v1953 = vpop.f32.mrf.mxu0
    %v1954 = vadd.f32 %v1911, %v1953
    %v1955 = vpop.f32.mrf.mxu0
    %v1956 = vadd.f32 %v1913, %v1955
    %1957 = vdwg.mxu0
    %1958 = vmatprep.subr.bf16.mxu0 %v1538
    %1959 = vmatpush1.bf16.msra.mxu0 %v1537
    %1960 = vmatprep.subr.bf16.mxu0 %v1534
    %1961 = vmatpush1.bf16.msra.mxu0 %v1533
    %1962 = vmatprep.subr.bf16.mxu0 %v1530
    %1963 = vmatpush1.bf16.msra.mxu0 %v1529
    %1964 = vmatprep.subr.bf16.mxu0 %v1526
    %1965 = vmatpush1.bf16.msra.mxu0 %v1525
    %1966 = vmatprep.subr.bf16.mxu0 %v1522
    %1967 = vmatpush1.bf16.msra.mxu0 %v1521
    %1968 = vmatprep.subr.bf16.mxu0 %v1518
    %1969 = vmatpush1.bf16.msra.mxu0 %v1517
    %1970 = vmatprep.subr.bf16.mxu0 %v1514
    %1971 = vmatpush1.bf16.msra.mxu0 %v1513
    %1972 = vmatprep.subr.bf16.mxu0 %v1510
    %1973 = vmatpush1.bf16.msra.mxu0 %v1509
    %1974 = vmatprep.subr.bf16.mxu0 %v1570
    %1975 = vmatpush2.bf16.msra.mxu0 %v1569
    %1976 = vmatprep.subr.bf16.mxu0 %v1566
    %1977 = vmatpush2.bf16.msra.mxu0 %v1565
    %1978 = vmatprep.subr.bf16.mxu0 %v1562
    %1979 = vmatpush2.bf16.msra.mxu0 %v1561
    %1980 = vmatprep.subr.bf16.mxu0 %v1558
    %1981 = vmatpush2.bf16.msra.mxu0 %v1557
    %1982 = vmatprep.subr.bf16.mxu0 %v1554
    %1983 = vmatpush2.bf16.msra.mxu0 %v1553
    %1984 = vmatprep.subr.bf16.mxu0 %v1550
    %1985 = vmatpush2.bf16.msra.mxu0 %v1549
    %1986 = vmatprep.subr.bf16.mxu0 %v1546
    %1987 = vmatpush2.bf16.msra.mxu0 %v1545
    %1988 = vmatprep.subr.bf16.mxu0 %v1542
    %1989 = vmatpush2.bf16.msra.mxu0 %v1541
    %1990 = vmatprep.mubr.bf16.mxu0 %v270
    %1991 = vmatmul.mubr.bf16.gmra.mxu0 %v269
    %v1992 = vpop.f32.mrf.mxu0
    %v1993 = vadd.f32 %v1950, %v1992
    %v1994 = vpop.f32.mrf.mxu0
    %v1995 = vadd.f32 %v1952, %v1994
    %v1996 = vpop.f32.mrf.mxu0
    %v1997 = vadd.f32 %v1954, %v1996
    %v1998 = vpop.f32.mrf.mxu0
    %v1999 = vadd.f32 %v1956, %v1998
    %2000 = vdwg.mxu0
    %2001 = vmatprep.subr.bf16.mxu0 %v1348
    %2002 = vmatpush1.bf16.msra.mxu0 %v1347
    %2003 = vmatprep.subr.bf16.mxu0 %v1344
    %2004 = vmatpush1.bf16.msra.mxu0 %v1343
    %2005 = vmatprep.subr.bf16.mxu0 %v1340
    %2006 = vmatpush1.bf16.msra.mxu0 %v1339
    %2007 = vmatprep.subr.bf16.mxu0 %v1336
    %2008 = vmatpush1.bf16.msra.mxu0 %v1335
    %2009 = vmatprep.subr.bf16.mxu0 %v1332
    %2010 = vmatpush1.bf16.msra.mxu0 %v1331
    %2011 = vmatprep.subr.bf16.mxu0 %v1328
    %2012 = vmatpush1.bf16.msra.mxu0 %v1327
    %2013 = vmatprep.subr.bf16.mxu0 %v1324
    %2014 = vmatpush1.bf16.msra.mxu0 %v1323
    %2015 = vmatprep.subr.bf16.mxu0 %v1320
    %2016 = vmatpush1.bf16.msra.mxu0 %v1319
    %2017 = vmatprep.subr.bf16.mxu0 %v1380
    %2018 = vmatpush2.bf16.msra.mxu0 %v1379
    %2019 = vmatprep.subr.bf16.mxu0 %v1376
    %2020 = vmatpush2.bf16.msra.mxu0 %v1375
    %2021 = vmatprep.subr.bf16.mxu0 %v1372
    %2022 = vmatpush2.bf16.msra.mxu0 %v1371
    %2023 = vmatprep.subr.bf16.mxu0 %v1368
    %2024 = vmatpush2.bf16.msra.mxu0 %v1367
    %2025 = vmatprep.subr.bf16.mxu0 %v1364
    %2026 = vmatpush2.bf16.msra.mxu0 %v1363
    %2027 = vmatprep.subr.bf16.mxu0 %v1360
    %2028 = vmatpush2.bf16.msra.mxu0 %v1359
    %2029 = vmatprep.subr.bf16.mxu0 %v1356
    %2030 = vmatpush2.bf16.msra.mxu0 %v1355
    %2031 = vmatprep.subr.bf16.mxu0 %v1352
    %2032 = vmatpush2.bf16.msra.mxu0 %v1351
    %2033 = vmatprep.mubr.bf16.mxu0 %v264
    %2034 = vmatmul.mubr.bf16.gmra.mxu0 %v263
    %v2035 = vpop.f32.mrf.mxu0
    %v2036 = vadd.f32 %v540, %v2035
    %v2037 = vpop.f32.mrf.mxu0
    %v2038 = vadd.f32 %v544, %v2037
    %v2039 = vpop.f32.mrf.mxu0
    %v2040 = vadd.f32 %v540, %v2039
    %v2041 = vpop.f32.mrf.mxu0
    %v2042 = vadd.f32 %v544, %v2041
    %2043 = vdwg.mxu0
    %2044 = vmatprep.subr.bf16.mxu0 %v1412
    %2045 = vmatpush1.bf16.msra.mxu0 %v1411
    %2046 = vmatprep.subr.bf16.mxu0 %v1408
    %2047 = vmatpush1.bf16.msra.mxu0 %v1407
    %2048 = vmatprep.subr.bf16.mxu0 %v1404
    %2049 = vmatpush1.bf16.msra.mxu0 %v1403
    %2050 = vmatprep.subr.bf16.mxu0 %v1400
    %2051 = vmatpush1.bf16.msra.mxu0 %v1399
    %2052 = vmatprep.subr.bf16.mxu0 %v1396
    %2053 = vmatpush1.bf16.msra.mxu0 %v1395
    %2054 = vmatprep.subr.bf16.mxu0 %v1392
    %2055 = vmatpush1.bf16.msra.mxu0 %v1391
    %2056 = vmatprep.subr.bf16.mxu0 %v1388
    %2057 = vmatpush1.bf16.msra.mxu0 %v1387
    %2058 = vmatprep.subr.bf16.mxu0 %v1384
    %2059 = vmatpush1.bf16.msra.mxu0 %v1383
    %2060 = vmatprep.subr.bf16.mxu0 %v1444
    %2061 = vmatpush2.bf16.msra.mxu0 %v1443
    %2062 = vmatprep.subr.bf16.mxu0 %v1440
    %2063 = vmatpush2.bf16.msra.mxu0 %v1439
    %2064 = vmatprep.subr.bf16.mxu0 %v1436
    %2065 = vmatpush2.bf16.msra.mxu0 %v1435
    %2066 = vmatprep.subr.bf16.mxu0 %v1432
    %2067 = vmatpush2.bf16.msra.mxu0 %v1431
    %2068 = vmatprep.subr.bf16.mxu0 %v1428
    %2069 = vmatpush2.bf16.msra.mxu0 %v1427
    %2070 = vmatprep.subr.bf16.mxu0 %v1424
    %2071 = vmatpush2.bf16.msra.mxu0 %v1423
    %2072 = vmatprep.subr.bf16.mxu0 %v1420
    %2073 = vmatpush2.bf16.msra.mxu0 %v1419
    %2074 = vmatprep.subr.bf16.mxu0 %v1416
    %2075 = vmatpush2.bf16.msra.mxu0 %v1415
    %2076 = vmatprep.mubr.bf16.mxu0 %v266
    %2077 = vmatmul.mubr.bf16.gmra.mxu0 %v265
    %v2078 = vpop.f32.mrf.mxu0
    %v2079 = vadd.f32 %v2036, %v2078
    %v2080 = vpop.f32.mrf.mxu0
    %v2081 = vadd.f32 %v2038, %v2080
    %v2082 = vpop.f32.mrf.mxu0
    %v2083 = vadd.f32 %v2040, %v2082
    %v2084 = vpop.f32.mrf.mxu0
    %v2085 = vadd.f32 %v2042, %v2084
    %2086 = vdwg.mxu0
    %2087 = vmatprep.subr.bf16.mxu0 %v1476
    %2088 = vmatpush1.bf16.msra.mxu0 %v1475
    %2089 = vmatprep.subr.bf16.mxu0 %v1472
    %2090 = vmatpush1.bf16.msra.mxu0 %v1471
    %2091 = vmatprep.subr.bf16.mxu0 %v1468
    %2092 = vmatpush1.bf16.msra.mxu0 %v1467
    %2093 = vmatprep.subr.bf16.mxu0 %v1464
    %2094 = vmatpush1.bf16.msra.mxu0 %v1463
    %2095 = vmatprep.subr.bf16.mxu0 %v1460
    %2096 = vmatpush1.bf16.msra.mxu0 %v1459
    %2097 = vmatprep.subr.bf16.mxu0 %v1456
    %2098 = vmatpush1.bf16.msra.mxu0 %v1455
    %2099 = vmatprep.subr.bf16.mxu0 %v1452
    %2100 = vmatpush1.bf16.msra.mxu0 %v1451
    %2101 = vmatprep.subr.bf16.mxu0 %v1448
    %2102 = vmatpush1.bf16.msra.mxu0 %v1447
    %2103 = vmatprep.subr.bf16.mxu0 %v1508
    %2104 = vmatpush2.bf16.msra.mxu0 %v1507
    %2105 = vmatprep.subr.bf16.mxu0 %v1504
    %2106 = vmatpush2.bf16.msra.mxu0 %v1503
    %2107 = vmatprep.subr.bf16.mxu0 %v1500
    %2108 = vmatpush2.bf16.msra.mxu0 %v1499
    %2109 = vmatprep.subr.bf16.mxu0 %v1496
    %2110 = vmatpush2.bf16.msra.mxu0 %v1495
    %2111 = vmatprep.subr.bf16.mxu0 %v1492
    %2112 = vmatpush2.bf16.msra.mxu0 %v1491
    %2113 = vmatprep.subr.bf16.mxu0 %v1488
    %2114 = vmatpush2.bf16.msra.mxu0 %v1487
    %2115 = vmatprep.subr.bf16.mxu0 %v1484
    %2116 = vmatpush2.bf16.msra.mxu0 %v1483
    %2117 = vmatprep.subr.bf16.mxu0 %v1480
    %2118 = vmatpush2.bf16.msra.mxu0 %v1479
    %2119 = vmatprep.mubr.bf16.mxu0 %v268
    %2120 = vmatmul.mubr.bf16.gmra.mxu0 %v267
    %v2121 = vpop.f32.mrf.mxu0
    %v2122 = vadd.f32 %v2079, %v2121
    %v2123 = vpop.f32.mrf.mxu0
    %v2124 = vadd.f32 %v2081, %v2123
    %v2125 = vpop.f32.mrf.mxu0
    %v2126 = vadd.f32 %v2083, %v2125
    %v2127 = vpop.f32.mrf.mxu0
    %v2128 = vadd.f32 %v2085, %v2127
    %2129 = vdwg.mxu0
    %2130 = vmatprep.subr.bf16.mxu0 %v1540
    %2131 = vmatpush1.bf16.msra.mxu0 %v1539
    %2132 = vmatprep.subr.bf16.mxu0 %v1536
    %2133 = vmatpush1.bf16.msra.mxu0 %v1535
    %2134 = vmatprep.subr.bf16.mxu0 %v1532
    %2135 = vmatpush1.bf16.msra.mxu0 %v1531
    %2136 = vmatprep.subr.bf16.mxu0 %v1528
    %2137 = vmatpush1.bf16.msra.mxu0 %v1527
    %2138 = vmatprep.subr.bf16.mxu0 %v1524
    %2139 = vmatpush1.bf16.msra.mxu0 %v1523
    %2140 = vmatprep.subr.bf16.mxu0 %v1520
    %2141 = vmatpush1.bf16.msra.mxu0 %v1519
    %2142 = vmatprep.subr.bf16.mxu0 %v1516
    %2143 = vmatpush1.bf16.msra.mxu0 %v1515
    %2144 = vmatprep.subr.bf16.mxu0 %v1512
    %2145 = vmatpush1.bf16.msra.mxu0 %v1511
    %2146 = vmatprep.subr.bf16.mxu0 %v1572
    %2147 = vmatpush2.bf16.msra.mxu0 %v1571
    %2148 = vmatprep.subr.bf16.mxu0 %v1568
    %2149 = vmatpush2.bf16.msra.mxu0 %v1567
    %2150 = vmatprep.subr.bf16.mxu0 %v1564
    %2151 = vmatpush2.bf16.msra.mxu0 %v1563
    %2152 = vmatprep.subr.bf16.mxu0 %v1560
    %2153 = vmatpush2.bf16.msra.mxu0 %v1559
    %2154 = vmatprep.subr.bf16.mxu0 %v1556
    %2155 = vmatpush2.bf16.msra.mxu0 %v1555
    %2156 = vmatprep.subr.bf16.mxu0 %v1552
    %2157 = vmatpush2.bf16.msra.mxu0 %v1551
    %2158 = vmatprep.subr.bf16.mxu0 %v1548
    %2159 = vmatpush2.bf16.msra.mxu0 %v1547
    %2160 = vmatprep.subr.bf16.mxu0 %v1544
    %2161 = vmatpush2.bf16.msra.mxu0 %v1543
    %2162 = vmatprep.mubr.bf16.mxu0 %v270
    %2163 = vmatmul.mubr.bf16.gmra.mxu0 %v269
    %v2164 = vpop.f32.mrf.mxu0
    %v2165 = vadd.f32 %v2122, %v2164
    %v2166 = vpop.f32.mrf.mxu0
    %v2167 = vadd.f32 %v2124, %v2166
    %v2168 = vpop.f32.mrf.mxu0
    %v2169 = vadd.f32 %v2126, %v2168
    %v2170 = vpop.f32.mrf.mxu0
    %v2171 = vadd.f32 %v2128, %v2170
    %2172 = vdwg.mxu0
    %v2173 = vmul.f32 %v1993, 0.2
    %v2174 = vmul.f32 %v1995, 0.2
    %v2175 = vmul.f32 %v2165, 0.2
    %v2176 = vmul.f32 %v2167, 0.2
    %v2177 = vmul.f32 %v1997, 0.2
    %v2178 = vmul.f32 %v1999, 0.2
    %v2179 = vmul.f32 %v2169, 0.2
    %v2180 = vmul.f32 %v2171, 0.2
    %v2181 = vmax.f32 %v1993, %v2173
    %v2182 = vmax.f32 %v1995, %v2174
    %v2183 = vmax.f32 %v2165, %v2175
    %v2184 = vmax.f32 %v2167, %v2176
    %v2185 = vmax.f32 %v1997, %v2177
    %v2186 = vmax.f32 %v1999, %v2178
    %v2187 = vmax.f32 %v2169, %v2179
    %v2188 = vmax.f32 %v2171, %v2180
    %v2189 = vpack.c.bf16 %v2185, %v2181
    %v2190 = vpack.c.bf16 %v2186, %v2182
    %v2191 = vpack.c.bf16 %v2187, %v2183
    %v2192 = vpack.c.bf16 %v2188, %v2184
    %v2193 = vld [vmem:[#allocation8] sm:$0xff]
    %v2194 = vld [vmem:[#allocation8 + $0x8] sm:$0xff]
    %v2195 = vld [vmem:[#allocation8 + $0x10] sm:$0xff]
    %v2196 = vld [vmem:[#allocation8 + $0x18] sm:$0xff]
    %v2197 = vld [vmem:[#allocation8 + $0x20] sm:$0xff]
    %v2198 = vld [vmem:[#allocation8 + $0x28] sm:$0xff]
    %v2199 = vld [vmem:[#allocation8 + $0x30] sm:$0xff]
    %v2200 = vld [vmem:[#allocation8 + $0x38] sm:$0xff]
    %v2201 = vld [vmem:[#allocation8 + $0x40] sm:$0xff]
    %v2202 = vld [vmem:[#allocation8 + $0x48] sm:$0xff]
    %v2203 = vld [vmem:[#allocation8 + $0x50] sm:$0xff]
    %v2204 = vld [vmem:[#allocation8 + $0x58] sm:$0xff]
    %v2205 = vld [vmem:[#allocation8 + $0x60] sm:$0xff]
    %v2206 = vld [vmem:[#allocation8 + $0x68] sm:$0xff]
    %v2207 = vld [vmem:[#allocation8 + $0x70] sm:$0xff]
    %v2208 = vld [vmem:[#allocation8 + $0x78] sm:$0xff]
    %v2209 = vld [vmem:[#allocation8 + $0x80] sm:$0xff]
    %v2210 = vld [vmem:[#allocation8 + $0x88] sm:$0xff]
    %v2211 = vld [vmem:[#allocation8 + $0x90] sm:$0xff]
    %v2212 = vld [vmem:[#allocation8 + $0x98] sm:$0xff]
    %v2213 = vld [vmem:[#allocation8 + $0xa0] sm:$0xff]
    %v2214 = vld [vmem:[#allocation8 + $0xa8] sm:$0xff]
    %v2215 = vld [vmem:[#allocation8 + $0xb0] sm:$0xff]
    %v2216 = vld [vmem:[#allocation8 + $0xb8] sm:$0xff]
    %v2217 = vld [vmem:[#allocation8 + $0xc0] sm:$0xff]
    %v2218 = vld [vmem:[#allocation8 + $0xc8] sm:$0xff]
    %v2219 = vld [vmem:[#allocation8 + $0xd0] sm:$0xff]
    %v2220 = vld [vmem:[#allocation8 + $0xd8] sm:$0xff]
    %v2221 = vld [vmem:[#allocation8 + $0xe0] sm:$0xff]
    %v2222 = vld [vmem:[#allocation8 + $0xe8] sm:$0xff]
    %v2223 = vld [vmem:[#allocation8 + $0xf0] sm:$0xff]
    %v2224 = vld [vmem:[#allocation8 + $0xf8] sm:$0xff]
    %v2225 = vld [vmem:[#allocation8 + $0x100] sm:$0xff]
    %v2226 = vld [vmem:[#allocation8 + $0x108] sm:$0xff]
    %v2227 = vld [vmem:[#allocation8 + $0x110] sm:$0xff]
    %v2228 = vld [vmem:[#allocation8 + $0x118] sm:$0xff]
    %v2229 = vld [vmem:[#allocation8 + $0x120] sm:$0xff]
    %v2230 = vld [vmem:[#allocation8 + $0x128] sm:$0xff]
    %v2231 = vld [vmem:[#allocation8 + $0x130] sm:$0xff]
    %v2232 = vld [vmem:[#allocation8 + $0x138] sm:$0xff]
    %v2233 = vld [vmem:[#allocation8 + $0x140] sm:$0xff]
    %v2234 = vld [vmem:[#allocation8 + $0x148] sm:$0xff]
    %v2235 = vld [vmem:[#allocation8 + $0x150] sm:$0xff]
    %v2236 = vld [vmem:[#allocation8 + $0x158] sm:$0xff]
    %v2237 = vld [vmem:[#allocation8 + $0x160] sm:$0xff]
    %v2238 = vld [vmem:[#allocation8 + $0x168] sm:$0xff]
    %v2239 = vld [vmem:[#allocation8 + $0x170] sm:$0xff]
    %v2240 = vld [vmem:[#allocation8 + $0x178] sm:$0xff]
    %v2241 = vld [vmem:[#allocation8 + $0x180] sm:$0xff]
    %v2242 = vld [vmem:[#allocation8 + $0x188] sm:$0xff]
    %v2243 = vld [vmem:[#allocation8 + $0x190] sm:$0xff]
    %v2244 = vld [vmem:[#allocation8 + $0x198] sm:$0xff]
    %v2245 = vld [vmem:[#allocation8 + $0x1a0] sm:$0xff]
    %v2246 = vld [vmem:[#allocation8 + $0x1a8] sm:$0xff]
    %v2247 = vld [vmem:[#allocation8 + $0x1b0] sm:$0xff]
    %v2248 = vld [vmem:[#allocation8 + $0x1b8] sm:$0xff]
    %v2249 = vld [vmem:[#allocation8 + $0x1c0] sm:$0xff]
    %v2250 = vld [vmem:[#allocation8 + $0x1c8] sm:$0xff]
    %v2251 = vld [vmem:[#allocation8 + $0x1d0] sm:$0xff]
    %v2252 = vld [vmem:[#allocation8 + $0x1d8] sm:$0xff]
    %v2253 = vld [vmem:[#allocation8 + $0x1e0] sm:$0xff]
    %v2254 = vld [vmem:[#allocation8 + $0x1e8] sm:$0xff]
    %v2255 = vld [vmem:[#allocation8 + $0x1f0] sm:$0xff]
    %v2256 = vld [vmem:[#allocation8 + $0x1f8] sm:$0xff]
    %v2257 = vld [vmem:[%s4] sm:$0x3]
    %v2259 = vlaneseq
    %v2260 = vshrl.u32 %v2259, 7
    %v2261 = vsub.s32 0, %v2260
    %v2262 = vrot.slane %v2257, %v2261
    %v2263 = vlaneseq
    %v2264 = vshrl.u32 %v2263, 7
    %v2265 = vsub.s32 1, %v2264
    %v2266 = vrot.slane %v2257, %v2265
    %v2333 = vunpack.c.l.b16 %v2193
    %v2334 = vunpack.c.h.b16 %v2193
    %v2335 = vunpack.c.l.b16 %v2194
    %v2336 = vunpack.c.h.b16 %v2194
    %v2337 = vunpack.c.l.b16 %v2195
    %v2338 = vunpack.c.h.b16 %v2195
    %v2339 = vunpack.c.l.b16 %v2196
    %v2340 = vunpack.c.h.b16 %v2196
    %v2341 = vunpack.c.l.b16 %v2197
    %v2342 = vunpack.c.h.b16 %v2197
    %v2343 = vunpack.c.l.b16 %v2198
    %v2344 = vunpack.c.h.b16 %v2198
    %v2345 = vunpack.c.l.b16 %v2199
    %v2346 = vunpack.c.h.b16 %v2199
    %v2347 = vunpack.c.l.b16 %v2200
    %v2348 = vunpack.c.h.b16 %v2200
    %v2349 = vunpack.c.l.b16 %v2201
    %v2350 = vunpack.c.h.b16 %v2201
    %v2351 = vunpack.c.l.b16 %v2202
    %v2352 = vunpack.c.h.b16 %v2202
    %v2353 = vunpack.c.l.b16 %v2203
    %v2354 = vunpack.c.h.b16 %v2203
    %v2355 = vunpack.c.l.b16 %v2204
    %v2356 = vunpack.c.h.b16 %v2204
    %v2357 = vunpack.c.l.b16 %v2205
    %v2358 = vunpack.c.h.b16 %v2205
    %v2359 = vunpack.c.l.b16 %v2206
    %v2360 = vunpack.c.h.b16 %v2206
    %v2361 = vunpack.c.l.b16 %v2207
    %v2362 = vunpack.c.h.b16 %v2207
    %v2363 = vunpack.c.l.b16 %v2208
    %v2364 = vunpack.c.h.b16 %v2208
    %v2365 = vunpack.c.l.b16 %v2209
    %v2366 = vunpack.c.h.b16 %v2209
    %v2367 = vunpack.c.l.b16 %v2210
    %v2368 = vunpack.c.h.b16 %v2210
    %v2369 = vunpack.c.l.b16 %v2211
    %v2370 = vunpack.c.h.b16 %v2211
    %v2371 = vunpack.c.l.b16 %v2212
    %v2372 = vunpack.c.h.b16 %v2212
    %v2373 = vunpack.c.l.b16 %v2213
    %v2374 = vunpack.c.h.b16 %v2213
    %v2375 = vunpack.c.l.b16 %v2214
    %v2376 = vunpack.c.h.b16 %v2214
    %v2377 = vunpack.c.l.b16 %v2215
    %v2378 = vunpack.c.h.b16 %v2215
    %v2379 = vunpack.c.l.b16 %v2216
    %v2380 = vunpack.c.h.b16 %v2216
    %v2381 = vunpack.c.l.b16 %v2217
    %v2382 = vunpack.c.h.b16 %v2217
    %v2383 = vunpack.c.l.b16 %v2218
    %v2384 = vunpack.c.h.b16 %v2218
    %v2385 = vunpack.c.l.b16 %v2219
    %v2386 = vunpack.c.h.b16 %v2219
    %v2387 = vunpack.c.l.b16 %v2220
    %v2388 = vunpack.c.h.b16 %v2220
    %v2389 = vunpack.c.l.b16 %v2221
    %v2390 = vunpack.c.h.b16 %v2221
    %v2391 = vunpack.c.l.b16 %v2222
    %v2392 = vunpack.c.h.b16 %v2222
    %v2393 = vunpack.c.l.b16 %v2223
    %v2394 = vunpack.c.h.b16 %v2223
    %v2395 = vunpack.c.l.b16 %v2224
    %v2396 = vunpack.c.h.b16 %v2224
    %v2397 = vunpack.c.l.b16 %v2225
    %v2398 = vunpack.c.h.b16 %v2225
    %v2399 = vunpack.c.l.b16 %v2226
    %v2400 = vunpack.c.h.b16 %v2226
    %v2401 = vunpack.c.l.b16 %v2227
    %v2402 = vunpack.c.h.b16 %v2227
    %v2403 = vunpack.c.l.b16 %v2228
    %v2404 = vunpack.c.h.b16 %v2228
    %v2405 = vunpack.c.l.b16 %v2229
    %v2406 = vunpack.c.h.b16 %v2229
    %v2407 = vunpack.c.l.b16 %v2230
    %v2408 = vunpack.c.h.b16 %v2230
    %v2409 = vunpack.c.l.b16 %v2231
    %v2410 = vunpack.c.h.b16 %v2231
    %v2411 = vunpack.c.l.b16 %v2232
    %v2412 = vunpack.c.h.b16 %v2232
    %v2413 = vunpack.c.l.b16 %v2233
    %v2414 = vunpack.c.h.b16 %v2233
    %v2415 = vunpack.c.l.b16 %v2234
    %v2416 = vunpack.c.h.b16 %v2234
    %v2417 = vunpack.c.l.b16 %v2235
    %v2418 = vunpack.c.h.b16 %v2235
    %v2419 = vunpack.c.l.b16 %v2236
    %v2420 = vunpack.c.h.b16 %v2236
    %v2421 = vunpack.c.l.b16 %v2237
    %v2422 = vunpack.c.h.b16 %v2237
    %v2423 = vunpack.c.l.b16 %v2238
    %v2424 = vunpack.c.h.b16 %v2238
    %v2425 = vunpack.c.l.b16 %v2239
    %v2426 = vunpack.c.h.b16 %v2239
    %v2427 = vunpack.c.l.b16 %v2240
    %v2428 = vunpack.c.h.b16 %v2240
    %v2429 = vunpack.c.l.b16 %v2241
    %v2430 = vunpack.c.h.b16 %v2241
    %v2431 = vunpack.c.l.b16 %v2242
    %v2432 = vunpack.c.h.b16 %v2242
    %v2433 = vunpack.c.l.b16 %v2243
    %v2434 = vunpack.c.h.b16 %v2243
    %v2435 = vunpack.c.l.b16 %v2244
    %v2436 = vunpack.c.h.b16 %v2244
    %v2437 = vunpack.c.l.b16 %v2245
    %v2438 = vunpack.c.h.b16 %v2245
    %v2439 = vunpack.c.l.b16 %v2246
    %v2440 = vunpack.c.h.b16 %v2246
    %v2441 = vunpack.c.l.b16 %v2247
    %v2442 = vunpack.c.h.b16 %v2247
    %v2443 = vunpack.c.l.b16 %v2248
    %v2444 = vunpack.c.h.b16 %v2248
    %v2445 = vunpack.c.l.b16 %v2249
    %v2446 = vunpack.c.h.b16 %v2249
    %v2447 = vunpack.c.l.b16 %v2250
    %v2448 = vunpack.c.h.b16 %v2250
    %v2449 = vunpack.c.l.b16 %v2251
    %v2450 = vunpack.c.h.b16 %v2251
    %v2451 = vunpack.c.l.b16 %v2252
    %v2452 = vunpack.c.h.b16 %v2252
    %v2453 = vunpack.c.l.b16 %v2253
    %v2454 = vunpack.c.h.b16 %v2253
    %v2455 = vunpack.c.l.b16 %v2254
    %v2456 = vunpack.c.h.b16 %v2254
    %v2457 = vunpack.c.l.b16 %v2255
    %v2458 = vunpack.c.h.b16 %v2255
    %v2459 = vunpack.c.l.b16 %v2256
    %v2460 = vunpack.c.h.b16 %v2256
    %v2461 = vpack.c.b16 %v2335, %v2333
    %v2462 = vpack.c.b16 %v2336, %v2334
    %v2463 = vpack.c.b16 %v2339, %v2337
    %v2464 = vpack.c.b16 %v2340, %v2338
    %v2465 = vpack.c.b16 %v2343, %v2341
    %v2466 = vpack.c.b16 %v2344, %v2342
    %v2467 = vpack.c.b16 %v2347, %v2345
    %v2468 = vpack.c.b16 %v2348, %v2346
    %v2469 = vpack.c.b16 %v2351, %v2349
    %v2470 = vpack.c.b16 %v2352, %v2350
    %v2471 = vpack.c.b16 %v2355, %v2353
    %v2472 = vpack.c.b16 %v2356, %v2354
    %v2473 = vpack.c.b16 %v2359, %v2357
    %v2474 = vpack.c.b16 %v2360, %v2358
    %v2475 = vpack.c.b16 %v2363, %v2361
    %v2476 = vpack.c.b16 %v2364, %v2362
    %v2477 = vpack.c.b16 %v2367, %v2365
    %v2478 = vpack.c.b16 %v2368, %v2366
    %v2479 = vpack.c.b16 %v2371, %v2369
    %v2480 = vpack.c.b16 %v2372, %v2370
    %v2481 = vpack.c.b16 %v2375, %v2373
    %v2482 = vpack.c.b16 %v2376, %v2374
    %v2483 = vpack.c.b16 %v2379, %v2377
    %v2484 = vpack.c.b16 %v2380, %v2378
    %v2485 = vpack.c.b16 %v2383, %v2381
    %v2486 = vpack.c.b16 %v2384, %v2382
    %v2487 = vpack.c.b16 %v2387, %v2385
    %v2488 = vpack.c.b16 %v2388, %v2386
    %v2489 = vpack.c.b16 %v2391, %v2389
    %v2490 = vpack.c.b16 %v2392, %v2390
    %v2491 = vpack.c.b16 %v2395, %v2393
    %v2492 = vpack.c.b16 %v2396, %v2394
    %v2493 = vpack.c.b16 %v2399, %v2397
    %v2494 = vpack.c.b16 %v2400, %v2398
    %v2495 = vpack.c.b16 %v2403, %v2401
    %v2496 = vpack.c.b16 %v2404, %v2402
    %v2497 = vpack.c.b16 %v2407, %v2405
    %v2498 = vpack.c.b16 %v2408, %v2406
    %v2499 = vpack.c.b16 %v2411, %v2409
    %v2500 = vpack.c.b16 %v2412, %v2410
    %v2501 = vpack.c.b16 %v2415, %v2413
    %v2502 = vpack.c.b16 %v2416, %v2414
    %v2503 = vpack.c.b16 %v2419, %v2417
    %v2504 = vpack.c.b16 %v2420, %v2418
    %v2505 = vpack.c.b16 %v2423, %v2421
    %v2506 = vpack.c.b16 %v2424, %v2422
    %v2507 = vpack.c.b16 %v2427, %v2425
    %v2508 = vpack.c.b16 %v2428, %v2426
    %v2509 = vpack.c.b16 %v2431, %v2429
    %v2510 = vpack.c.b16 %v2432, %v2430
    %v2511 = vpack.c.b16 %v2435, %v2433
    %v2512 = vpack.c.b16 %v2436, %v2434
    %v2513 = vpack.c.b16 %v2439, %v2437
    %v2514 = vpack.c.b16 %v2440, %v2438
    %v2515 = vpack.c.b16 %v2443, %v2441
    %v2516 = vpack.c.b16 %v2444, %v2442
    %v2517 = vpack.c.b16 %v2447, %v2445
    %v2518 = vpack.c.b16 %v2448, %v2446
    %v2519 = vpack.c.b16 %v2451, %v2449
    %v2520 = vpack.c.b16 %v2452, %v2450
    %v2521 = vpack.c.b16 %v2455, %v2453
    %v2522 = vpack.c.b16 %v2456, %v2454
    %v2523 = vpack.c.b16 %v2459, %v2457
    %v2524 = vpack.c.b16 %v2460, %v2458
    %2589 = vmatprep.subr.bf16.mxu0 %v2476
    %2590 = vmatpush1.bf16.msra.mxu0 %v2475
    %2591 = vmatprep.subr.bf16.mxu0 %v2474
    %2592 = vmatpush1.bf16.msra.mxu0 %v2473
    %2593 = vmatprep.subr.bf16.mxu0 %v2472
    %2594 = vmatpush1.bf16.msra.mxu0 %v2471
    %2595 = vmatprep.subr.bf16.mxu0 %v2470
    %2596 = vmatpush1.bf16.msra.mxu0 %v2469
    %2597 = vmatprep.subr.bf16.mxu0 %v2468
    %2598 = vmatpush1.bf16.msra.mxu0 %v2467
    %2599 = vmatprep.subr.bf16.mxu0 %v2466
    %2600 = vmatpush1.bf16.msra.mxu0 %v2465
    %2601 = vmatprep.subr.bf16.mxu0 %v2464
    %2602 = vmatpush1.bf16.msra.mxu0 %v2463
    %2603 = vmatprep.subr.bf16.mxu0 %v2462
    %2604 = vmatpush1.bf16.msra.mxu0 %v2461
    %2605 = vmatprep.subr.bf16.mxu0 %v2492
    %2606 = vmatpush2.bf16.msra.mxu0 %v2491
    %2607 = vmatprep.subr.bf16.mxu0 %v2490
    %2608 = vmatpush2.bf16.msra.mxu0 %v2489
    %2609 = vmatprep.subr.bf16.mxu0 %v2488
    %2610 = vmatpush2.bf16.msra.mxu0 %v2487
    %2611 = vmatprep.subr.bf16.mxu0 %v2486
    %2612 = vmatpush2.bf16.msra.mxu0 %v2485
    %2613 = vmatprep.subr.bf16.mxu0 %v2484
    %2614 = vmatpush2.bf16.msra.mxu0 %v2483
    %2615 = vmatprep.subr.bf16.mxu0 %v2482
    %2616 = vmatpush2.bf16.msra.mxu0 %v2481
    %2617 = vmatprep.subr.bf16.mxu0 %v2480
    %2618 = vmatpush2.bf16.msra.mxu0 %v2479
    %2619 = vmatprep.subr.bf16.mxu0 %v2478
    %2620 = vmatpush2.bf16.msra.mxu0 %v2477
    %2621 = vmatprep.mubr.bf16.mxu0 %v2190
    %2622 = vmatmul.mubr.bf16.gmra.mxu0 %v2189
    %v2623 = vpop.f32.mrf.mxu0
    %v2624 = vadd.f32 %v2262, %v2623
    %v2625 = vpop.f32.mrf.mxu0
    %v2626 = vadd.f32 %v2266, %v2625
    %v2627 = vpop.f32.mrf.mxu0
    %v2628 = vadd.f32 %v2262, %v2627
    %v2629 = vpop.f32.mrf.mxu0
    %v2630 = vadd.f32 %v2266, %v2629
    %2631 = vdwg.mxu0
    %2632 = vmatprep.subr.bf16.mxu0 %v2508
    %2633 = vmatpush1.bf16.msra.mxu0 %v2507
    %2634 = vmatprep.subr.bf16.mxu0 %v2506
    %2635 = vmatpush1.bf16.msra.mxu0 %v2505
    %2636 = vmatprep.subr.bf16.mxu0 %v2504
    %2637 = vmatpush1.bf16.msra.mxu0 %v2503
    %2638 = vmatprep.subr.bf16.mxu0 %v2502
    %2639 = vmatpush1.bf16.msra.mxu0 %v2501
    %2640 = vmatprep.subr.bf16.mxu0 %v2500
    %2641 = vmatpush1.bf16.msra.mxu0 %v2499
    %2642 = vmatprep.subr.bf16.mxu0 %v2498
    %2643 = vmatpush1.bf16.msra.mxu0 %v2497
    %2644 = vmatprep.subr.bf16.mxu0 %v2496
    %2645 = vmatpush1.bf16.msra.mxu0 %v2495
    %2646 = vmatprep.subr.bf16.mxu0 %v2494
    %2647 = vmatpush1.bf16.msra.mxu0 %v2493
    %2648 = vmatprep.subr.bf16.mxu0 %v2524
    %2649 = vmatpush2.bf16.msra.mxu0 %v2523
    %2650 = vmatprep.subr.bf16.mxu0 %v2522
    %2651 = vmatpush2.bf16.msra.mxu0 %v2521
    %2652 = vmatprep.subr.bf16.mxu0 %v2520
    %2653 = vmatpush2.bf16.msra.mxu0 %v2519
    %2654 = vmatprep.subr.bf16.mxu0 %v2518
    %2655 = vmatpush2.bf16.msra.mxu0 %v2517
    %2656 = vmatprep.subr.bf16.mxu0 %v2516
    %2657 = vmatpush2.bf16.msra.mxu0 %v2515
    %2658 = vmatprep.subr.bf16.mxu0 %v2514
    %2659 = vmatpush2.bf16.msra.mxu0 %v2513
    %2660 = vmatprep.subr.bf16.mxu0 %v2512
    %2661 = vmatpush2.bf16.msra.mxu0 %v2511
    %2662 = vmatprep.subr.bf16.mxu0 %v2510
    %2663 = vmatpush2.bf16.msra.mxu0 %v2509
    %2664 = vmatprep.mubr.bf16.mxu0 %v2192
    %2665 = vmatmul.mubr.bf16.gmra.mxu0 %v2191
    %v2666 = vpop.f32.mrf.mxu0
    %v2667 = vadd.f32 %v2624, %v2666
    %v2668 = vpop.f32.mrf.mxu0
    %v2669 = vadd.f32 %v2626, %v2668
    %v2670 = vpop.f32.mrf.mxu0
    %v2671 = vadd.f32 %v2628, %v2670
    %v2672 = vpop.f32.mrf.mxu0
    %v2673 = vadd.f32 %v2630, %v2672
    %2674 = vdwg.mxu0
    %v2675 = vmul.f32 %v2667, 0.2
    %v2676 = vmul.f32 %v2669, 0.2
    %v2677 = vmul.f32 %v2671, 0.2
    %v2678 = vmul.f32 %v2673, 0.2
    %v2679 = vmax.f32 %v2667, %v2675
    %v2680 = vmax.f32 %v2669, %v2676
    %v2681 = vmax.f32 %v2671, %v2677
    %v2682 = vmax.f32 %v2673, %v2678
    %v2683 = vld [vmem:[%s5] sm:$0x3]
    %v2684 = vpack.c.bf16 %v2681, %v2679
    %v2685 = vpack.c.bf16 %v2682, %v2680
    %v2686 = vld [vmem:[#allocation2] sm:$0x1]
    %2688 = vset.pattern.permute.xlu0 0
    %2689 = vperm.xlu0 %2688, %v2686
    %v2690 = vpop.permute.xlu0 %2689
    %v2692 = vlaneseq
    %v2693 = vshrl.u32 %v2692, 7
    %v2694 = vsub.s32 0, %v2693
    %v2695 = vrot.slane %v2690, %v2694
    %v2698 = vunpack.c.l.s4 1966171168
    %v2699 = vunpack.c.0.s8 %v2698
    %v2700 = vlaneseq
    %v2701 = vshrl.u32 %v2700, 7
    %v2702 = vsub.s32 %v2699, %v2701
    %v2703 = vrot.slane %v2683, %v2702
    %v2704 = vcombine.high %v2703, %v2703
    %v2706 = vunpack.c.l.s4 1966171168
    %v2707 = vunpack.c.0.s8 %v2706
    %v2708 = vlaneseq
    %v2709 = vshrl.u32 %v2708, 7
    %v2710 = vsub.s32 %v2707, %v2709
    %v2711 = vrot.slane %v2703, %v2710
    %v2713 = vunpack.c.l.s4 1966171168
    %v2714 = vunpack.c.0.s8 %v2713
    %v2715 = vlaneseq
    %v2716 = vshrl.u32 %v2715, 7
    %v2717 = vsub.s32 %v2714, %v2716
    %v2718 = vrot.slane %v2704, %v2717
    %2721 = vmatprep.subr.bf16.mxu0 0
    %2722 = vmatpush1.bf16.xpose.msra.mxu0 0
    %2723 = vmatprep.subr.bf16.mxu0 0
    %2724 = vmatpush1.bf16.xpose.msra.mxu0 0
    %2725 = vmatprep.subr.bf16.mxu0 0
    %2726 = vmatpush1.bf16.xpose.msra.mxu0 0
    %2727 = vmatprep.subr.bf16.mxu0 0
    %2728 = vmatpush1.bf16.xpose.msra.mxu0 0
    %2729 = vmatprep.subr.bf16.mxu0 0
    %2730 = vmatpush1.bf16.xpose.msra.mxu0 0
    %2731 = vmatprep.subr.bf16.mxu0 0
    %2732 = vmatpush1.bf16.xpose.msra.mxu0 0
    %2733 = vmatprep.subr.bf16.mxu0 0
    %2734 = vmatpush1.bf16.xpose.msra.mxu0 0
    %2735 = vmatprep.subr.bf16.mxu0 %v2685
    %2736 = vmatpush1.bf16.xpose.msra.mxu0 %v2684
    %2737 = vmatprep.subr.bf16.mxu0 0
    %2738 = vmatpush2.bf16.xpose.msra.mxu0 0
    %2739 = vmatprep.subr.bf16.mxu0 0
    %2740 = vmatpush2.bf16.xpose.msra.mxu0 0
    %2741 = vmatprep.subr.bf16.mxu0 0
    %2742 = vmatpush2.bf16.xpose.msra.mxu0 0
    %2743 = vmatprep.subr.bf16.mxu0 0
    %2744 = vmatpush2.bf16.xpose.msra.mxu0 0
    %2745 = vmatprep.subr.bf16.mxu0 0
    %2746 = vmatpush2.bf16.xpose.msra.mxu0 0
    %2747 = vmatprep.subr.bf16.mxu0 0
    %2748 = vmatpush2.bf16.xpose.msra.mxu0 0
    %2749 = vmatprep.subr.bf16.mxu0 0
    %2750 = vmatpush2.bf16.xpose.msra.mxu0 0
    %2751 = vmatprep.subr.bf16.mxu0 0
    %2752 = vmatpush2.bf16.xpose.msra.mxu0 0
    %2753 = vmatprep.mubr.bf16.mxu0 %v2718
    %2754 = vmatmul.mubr.bf16.gmra.mxu0 %v2711
    %v2755 = vpop.f32.mrf.mxu0
    %v2756 = vadd.f32 %v2695, %v2755
    %v2757 = vpop.f32.mrf.mxu0
    %v2758 = vpop.f32.mrf.mxu0
    %v2759 = vpop.f32.mrf.mxu0
    %2760 = vdwg.mxu0
    %v2761 = vsub.f32 0.0, %v2756
    %v2762 = vmul.f32 %v2761, 1.442695
    %v2763 = vpow.pop %v2762
    %v2764 = vadd.f32 %v2763, 1.0
    %v2765 = vrcp.pop %v2764
    %v2766 = vmul.f32 1.0, %v2765
    %vm2767 = vcmask 122880
    %2768 = vst.msk [vmem:[#allocation9] sm:$0x1] %vm2767, %v2766
    // Predicated region
    $region42: #{tpu_custom_call.1} parent=1 // pred_check
      _
    $region43: #{tpu_custom_call.1} parent=1 // pred_check_branch
      %2770 = sbr.rel (0) target = $region45
    $region44: #{tpu_custom_call.1} parent=1 // pred_region
      %s2772 = ssub.s32 16, 16
      %2773 = vsyncadd [#allocation5], %s2772
      %s2775 = sshll.u32 [#allocation9], 4
      %s2776 = int_to_ptr.vmem [resolvable:$true] %s2775
      %2778 = dma.vmem_to_hbm [thread:$0]  %s2776, 16, %s7, [#allocation5]
    $region45: #{tpu_custom_call.1} parent=1 // pred_fallthru
      _
    // Predicated region
    $region46: #{tpu_custom_call.1} parent=1 // pred_check
      _
    $region47: #{tpu_custom_call.1} parent=1 // pred_check_branch
      %2780 = sbr.rel (0) target = $region49
    $region48: #{tpu_custom_call.1} parent=1 // pred_region
      %2781 = dma.done [#allocation5], 16
    $region49: #{tpu_custom_call.1} parent=1 // pred_fallthru
      _
    %2782 = vsyncpa [#allocation4], 1
    %2783 = vsyncpa [#allocation7], 1
    %2784 = vsyncpa [#allocation5], 1

// kernel: tpu_custom_call.1
$region0: #{tpu_custom_call.1}
  #allocation0 [shape = 'u32[]', space=smem, size = 0x4, offset = 0x4, fixed_abs, tag = 'smem constant byte address 0x4 - core index']
  #allocation1 [shape = 'u32[144,128]{1,0:T(1,128)}', space=vmem, size = 0x12000, scoped, tag = 'internal scratch']
  #allocation2 [shape = 'f32[1,1]{1,0:T(1,128)S(1)}', space=vmem, size = 0x200, scoped, tag = 'scoped memory for tpu_custom_call.1']
  %s0 = inlined_call_operand.hbm [shape: f32[2,1024], index: 0, kind: input, shape index: {}]
  %s1 = inlined_call_operand.hbm [shape: bf16[1024,512], index: 1, kind: input, shape index: {}]
  %s2 = inlined_call_operand.vmem [shape: f32[1,512], index: 2, kind: input, shape index: {}]
  %s3 = inlined_call_operand.hbm [shape: bf16[512,256], index: 3, kind: input, shape index: {}]
  %s4 = inlined_call_operand.vmem [shape: f32[1,256], index: 4, kind: input, shape index: {}]
  %s5 = inlined_call_operand.vmem [shape: bf16[1,256], index: 5, kind: input, shape index: {}]
  %s6 = inlined_call_operand.<no memory space> [shape: f32[1,1], index: 6, kind: input, shape index: {}]
  %s7 = inlined_call_operand.hbm [shape: f32[1,16], index: 7, kind: output, shape index: {}]
  %s8 = sld [smem:[#allocation0]]
  $region50: #{tpu_custom_call.1} parent=0
    _
  %s10 = ssub.s32 1, %s8
  %s11 = scalar_select 0, %s10, %s8
  %v12 = vstv %s6
  %13 = vst [vmem:[#allocation2] sm:$0x1] %v12
  $region1: #{tpu_custom_call.1} parent=0
    #allocation3 [shape = 'u8[65536]{0}', space=vmem, size = 0x10000, scoped, tag = 'input window, operand 0, single buffered']
    #allocation4 [shape = 's32[1]{0}', space=sflag, size = 0x4, scoped, tag = 'scoped memory for tpu_custom_call.1']
    #allocation5 [shape = 's32[1]{0}', space=sflag, size = 0x4, scoped, tag = 'scoped memory for tpu_custom_call.1']
    #allocation6 [shape = 'u8[1048576]{0}', space=vmem, size = 0x100000, scoped, tag = 'input window, operand 1, single buffered']
    #allocation7 [shape = 's32[1]{0}', space=sflag, size = 0x4, scoped, tag = 'scoped memory for tpu_custom_call.1']
    #allocation8 [shape = 'u8[262144]{0}', space=vmem, size = 0x40000, scoped, tag = 'input window, operand 3, single buffered']
    #allocation9 [shape = 'u8[512]{0}', space=vmem, size = 0x400, scoped, tag = 'output window, operand 0, single buffered']
    %14 = vsyncpa [#allocation4], 0
    %15 = vsyncpa [#allocation7], 0
    %16 = vsyncpa [#allocation5], 0
    // Predicated region
    $region2: #{tpu_custom_call.1} parent=1 // pred_check
      _
    $region3: #{tpu_custom_call.1} parent=1 // pred_check_branch
      %18 = sbr.rel (0) target = $region5
    $region4: #{tpu_custom_call.1} parent=1 // pred_region
      %s20 = ssub.s32 2048, 256
      %21 = vsyncadd [#allocation4], %s20
      %s22 = sshll.u32 [#allocation3], 4
      %s23 = int_to_ptr.vmem [resolvable:$true] %s22
      %28 = dma.hbm_to_vmem [thread:$0]  %s0, 256, %s23, [#allocation4], 256, 256, 16
    $region5: #{tpu_custom_call.1} parent=1 // pred_fallthru
      _
    // Predicated region
    $region6: #{tpu_custom_call.1} parent=1 // pred_check
      _
    $region7: #{tpu_custom_call.1} parent=1 // pred_check_branch
      %30 = sbr.rel (0) target = $region9
    $region8: #{tpu_custom_call.1} parent=1 // pred_region
      %s32 = ssub.s32 32768, 32768
      %33 = vsyncadd [#allocation7], %s32
      %s34 = sshll.u32 [#allocation6], 4
      %s35 = int_to_ptr.vmem [resolvable:$true] %s34
      %40 = dma.hbm_to_vmem [thread:$0]  %s1, 32768, %s35, [#allocation7], 256, 256, 16
    $region9: #{tpu_custom_call.1} parent=1 // pred_fallthru
      _
    // Predicated region
    $region10: #{tpu_custom_call.1} parent=1 // pred_check
      _
    $region11: #{tpu_custom_call.1} parent=1 // pred_check_branch
      %42 = sbr.rel (0) target = $region13
    $region12: #{tpu_custom_call.1} parent=1 // pred_region
      _
    $region13: #{tpu_custom_call.1} parent=1 // pred_fallthru
      _
    // Predicated region
    $region14: #{tpu_custom_call.1} parent=1 // pred_check
      _
    $region15: #{tpu_custom_call.1} parent=1 // pred_check_branch
      %44 = sbr.rel (0) target = $region17
    $region16: #{tpu_custom_call.1} parent=1 // pred_region
      %s46 = ssub.s32 8192, 8192
      %47 = vsyncadd [#allocation7], %s46
      %s48 = sshll.u32 [#allocation8], 4
      %s49 = int_to_ptr.vmem [resolvable:$true] %s48
      %54 = dma.hbm_to_vmem [thread:$0]  %s3, 8192, %s49, [#allocation7], 128, 128, 8
    $region17: #{tpu_custom_call.1} parent=1 // pred_fallthru
      _
    // Predicated region
    $region18: #{tpu_custom_call.1} parent=1 // pred_check
      _
    $region19: #{tpu_custom_call.1} parent=1 // pred_check_branch
      %56 = sbr.rel (0) target = $region21
    $region20: #{tpu_custom_call.1} parent=1 // pred_region
      _
    $region21: #{tpu_custom_call.1} parent=1 // pred_fallthru
      _
    // Predicated region
    $region22: #{tpu_custom_call.1} parent=1 // pred_check
      _
    $region23: #{tpu_custom_call.1} parent=1 // pred_check_branch
      %58 = sbr.rel (0) target = $region25
    $region24: #{tpu_custom_call.1} parent=1 // pred_region
      _
    $region25: #{tpu_custom_call.1} parent=1 // pred_fallthru
      _
    // Predicated region
    $region26: #{tpu_custom_call.1} parent=1 // pred_check
      _
    $region27: #{tpu_custom_call.1} parent=1 // pred_check_branch
      %60 = sbr.rel (0) target = $region29
    $region28: #{tpu_custom_call.1} parent=1 // pred_region
      _
    $region29: #{tpu_custom_call.1} parent=1 // pred_fallthru
      _
    // Predicated region
    $region30: #{tpu_custom_call.1} parent=1 // pred_check
      _
    $region31: #{tpu_custom_call.1} parent=1 // pred_check_branch
      %62 = sbr.rel (0) target = $region33
    $region32: #{tpu_custom_call.1} parent=1 // pred_region
      %63 = dma.done [#allocation4], 2048
    $region33: #{tpu_custom_call.1} parent=1 // pred_fallthru
      _
    // Predicated region
    $region34: #{tpu_custom_call.1} parent=1 // pred_check
      _
    $region35: #{tpu_custom_call.1} parent=1 // pred_check_branch
      %65 = sbr.rel (0) target = $region37
    $region36: #{tpu_custom_call.1} parent=1 // pred_region
      %66 = dma.done [#allocation7], 32768
    $region37: #{tpu_custom_call.1} parent=1 // pred_fallthru
      _
    // Predicated region
    $region38: #{tpu_custom_call.1} parent=1 // pred_check
      _
    $region39: #{tpu_custom_call.1} parent=1 // pred_check_branch
      %68 = sbr.rel (0) target = $region41
    $region40: #{tpu_custom_call.1} parent=1 // pred_region
      %69 = dma.done [#allocation7], 8192
    $region41: #{tpu_custom_call.1} parent=1 // pred_fallthru
      _
    %v71 = vld [vmem:[#allocation3] sm:$0xff]
    %v72 = vld [vmem:[#allocation3 + $0x8] sm:$0xff]
    %v73 = vld [vmem:[#allocation3 + $0x10] sm:$0xff]
    %v74 = vld [vmem:[#allocation3 + $0x18] sm:$0xff]
    %v75 = vld [vmem:[#allocation3 + $0x20] sm:$0xff]
    %v76 = vld [vmem:[#allocation3 + $0x28] sm:$0xff]
    %v77 = vld [vmem:[#allocation3 + $0x30] sm:$0xff]
    %v78 = vld [vmem:[#allocation3 + $0x38] sm:$0xff]
    %v79 = vld [vmem:[#allocation3 + $0x40] sm:$0xff]
    %v80 = vld [vmem:[#allocation3 + $0x48] sm:$0xff]
    %v81 = vld [vmem:[#allocation3 + $0x50] sm:$0xff]
    %v82 = vld [vmem:[#allocation3 + $0x58] sm:$0xff]
    %v83 = vld [vmem:[#allocation3 + $0x60] sm:$0xff]
    %v84 = vld [vmem:[#allocation3 + $0x68] sm:$0xff]
    %v85 = vld [vmem:[#allocation3 + $0x70] sm:$0xff]
    %v86 = vld [vmem:[#allocation3 + $0x78] sm:$0xff]
    %v103 = vcombine.low %v71, %v73
    %v104 = vcombine.high %v71, %v73
    %v105 = vcombine.low %v75, %v77
    %v106 = vcombine.high %v75, %v77
    %v108 = vunpack.c.l.s4 1983009808
    %v109 = vunpack.c.0.s8 %v108
    %v110 = vlaneseq
    %v111 = vshrl.u32 %v110, 7
    %v112 = vsub.s32 %v109, %v111
    %v113 = vrot.slane %v103, %v112
    %v115 = vunpack.c.l.s4 1983009808
    %v116 = vunpack.c.0.s8 %v115
    %v117 = vlaneseq
    %v118 = vshrl.u32 %v117, 7
    %v119 = vsub.s32 %v116, %v118
    %v120 = vrot.slane %v104, %v119
    %v122 = vunpack.c.l.s4 1983009808
    %v123 = vunpack.c.0.s8 %v122
    %v124 = vlaneseq
    %v125 = vshrl.u32 %v124, 7
    %v126 = vsub.s32 %v123, %v125
    %v127 = vrot.slane %v105, %v126
    %v129 = vunpack.c.l.s4 1983009808
    %v130 = vunpack.c.0.s8 %v129
    %v131 = vlaneseq
    %v132 = vshrl.u32 %v131, 7
    %v133 = vsub.s32 %v130, %v132
    %v134 = vrot.slane %v106, %v133
    %v135 = vcombine.low %v113, %v127
    %v136 = vcombine.high %v113, %v127
    %v137 = vcombine.low %v120, %v134
    %v138 = vcombine.high %v120, %v134
    %v139 = vcombine.low %v72, %v74
    %v140 = vcombine.high %v72, %v74
    %v141 = vcombine.low %v76, %v78
    %v142 = vcombine.high %v76, %v78
    %v144 = vunpack.c.l.s4 1983009808
    %v145 = vunpack.c.0.s8 %v144
    %v146 = vlaneseq
    %v147 = vshrl.u32 %v146, 7
    %v148 = vsub.s32 %v145, %v147
    %v149 = vrot.slane %v139, %v148
    %v151 = vunpack.c.l.s4 1983009808
    %v152 = vunpack.c.0.s8 %v151
    %v153 = vlaneseq
    %v154 = vshrl.u32 %v153, 7
    %v155 = vsub.s32 %v152, %v154
    %v156 = vrot.slane %v140, %v155
    %v158 = vunpack.c.l.s4 1983009808
    %v159 = vunpack.c.0.s8 %v158
    %v160 = vlaneseq
    %v161 = vshrl.u32 %v160, 7
    %v162 = vsub.s32 %v159, %v161
    %v163 = vrot.slane %v141, %v162
    %v165 = vunpack.c.l.s4 1983009808
    %v166 = vunpack.c.0.s8 %v165
    %v167 = vlaneseq
    %v168 = vshrl.u32 %v167, 7
    %v169 = vsub.s32 %v166, %v168
    %v170 = vrot.slane %v142, %v169
    %v171 = vcombine.low %v149, %v163
    %v172 = vcombine.high %v149, %v163
    %v173 = vcombine.low %v156, %v170
    %v174 = vcombine.high %v156, %v170
    %v175 = vcombine.low %v79, %v81
    %v176 = vcombine.high %v79, %v81
    %v177 = vcombine.low %v83, %v85
    %v178 = vcombine.high %v83, %v85
    %v180 = vunpack.c.l.s4 1983009808
    %v181 = vunpack.c.0.s8 %v180
    %v182 = vlaneseq
    %v183 = vshrl.u32 %v182, 7
    %v184 = vsub.s32 %v181, %v183
    %v185 = vrot.slane %v175, %v184
    %v187 = vunpack.c.l.s4 1983009808
    %v188 = vunpack.c.0.s8 %v187
    %v189 = vlaneseq
    %v190 = vshrl.u32 %v189, 7
    %v191 = vsub.s32 %v188, %v190
    %v192 = vrot.slane %v176, %v191
    %v194 = vunpack.c.l.s4 1983009808
    %v195 = vunpack.c.0.s8 %v194
    %v196 = vlaneseq
    %v197 = vshrl.u32 %v196, 7
    %v198 = vsub.s32 %v195, %v197
    %v199 = vrot.slane %v177, %v198
    %v201 = vunpack.c.l.s4 1983009808
    %v202 = vunpack.c.0.s8 %v201
    %v203 = vlaneseq
    %v204 = vshrl.u32 %v203, 7
    %v205 = vsub.s32 %v202, %v204
    %v206 = vrot.slane %v178, %v205
    %v207 = vcombine.low %v185, %v199
    %v208 = vcombine.high %v185, %v199
    %v209 = vcombine.low %v192, %v206
    %v210 = vcombine.high %v192, %v206
    %v211 = vcombine.low %v80, %v82
    %v212 = vcombine.high %v80, %v82
    %v213 = vcombine.low %v84, %v86
    %v214 = vcombine.high %v84, %v86
    %v216 = vunpack.c.l.s4 1983009808
    %v217 = vunpack.c.0.s8 %v216
    %v218 = vlaneseq
    %v219 = vshrl.u32 %v218, 7
    %v220 = vsub.s32 %v217, %v219
    %v221 = vrot.slane %v211, %v220
    %v223 = vunpack.c.l.s4 1983009808
    %v224 = vunpack.c.0.s8 %v223
    %v225 = vlaneseq
    %v226 = vshrl.u32 %v225, 7
    %v227 = vsub.s32 %v224, %v226
    %v228 = vrot.slane %v212, %v227
    %v230 = vunpack.c.l.s4 1983009808
    %v231 = vunpack.c.0.s8 %v230
    %v232 = vlaneseq
    %v233 = vshrl.u32 %v232, 7
    %v234 = vsub.s32 %v231, %v233
    %v235 = vrot.slane %v213, %v234
    %v237 = vunpack.c.l.s4 1983009808
    %v238 = vunpack.c.0.s8 %v237
    %v239 = vlaneseq
    %v240 = vshrl.u32 %v239, 7
    %v241 = vsub.s32 %v238, %v240
    %v242 = vrot.slane %v214, %v241
    %v243 = vcombine.low %v221, %v235
    %v244 = vcombine.high %v221, %v235
    %v245 = vcombine.low %v228, %v242
    %v246 = vcombine.high %v228, %v242
    %v263 = vpack.c.bf16 %v207, %v135
    %v264 = vpack.c.bf16 %v208, %v136
    %v265 = vpack.c.bf16 %v209, %v137
    %v266 = vpack.c.bf16 %v210, %v138
    %v267 = vpack.c.bf16 %v243, %v171
    %v268 = vpack.c.bf16 %v244, %v172
    %v269 = vpack.c.bf16 %v245, %v173
    %v270 = vpack.c.bf16 %v246, %v174
    %v271 = vld [vmem:[#allocation6] sm:$0xff]
    %v272 = vld [vmem:[#allocation6 + $0x8] sm:$0xff]
    %v273 = vld [vmem:[#allocation6 + $0x10] sm:$0xff]
    %v274 = vld [vmem:[#allocation6 + $0x18] sm:$0xff]
    %v275 = vld [vmem:[#allocation6 + $0x20] sm:$0xff]
    %v276 = vld [vmem:[#allocation6 + $0x28] sm:$0xff]
    %v277 = vld [vmem:[#allocation6 + $0x30] sm:$0xff]
    %v278 = vld [vmem:[#allocation6 + $0x38] sm:$0xff]
    %v279 = vld [vmem:[#allocation6 + $0x40] sm:$0xff]
    %v280 = vld [vmem:[#allocation6 + $0x48] sm:$0xff]
    %v281 = vld [vmem:[#allocation6 + $0x50] sm:$0xff]
    %v282 = vld [vmem:[#allocation6 + $0x58] sm:$0xff]
    %v283 = vld [vmem:[#allocation6 + $0x60] sm:$0xff]
    %v284 = vld [vmem:[#allocation6 + $0x68] sm:$0xff]
    %v285 = vld [vmem:[#allocation6 + $0x70] sm:$0xff]
    %v286 = vld [vmem:[#allocation6 + $0x78] sm:$0xff]
    %v287 = vld [vmem:[#allocation6 + $0x80] sm:$0xff]
    %v288 = vld [vmem:[#allocation6 + $0x88] sm:$0xff]
    %v289 = vld [vmem:[#allocation6 + $0x90] sm:$0xff]
    %v290 = vld [vmem:[#allocation6 + $0x98] sm:$0xff]
    %v291 = vld [vmem:[#allocation6 + $0xa0] sm:$0xff]
    %v292 = vld [vmem:[#allocation6 + $0xa8] sm:$0xff]
    %v293 = vld [vmem:[#allocation6 + $0xb0] sm:$0xff]
    %v294 = vld [vmem:[#allocation6 + $0xb8] sm:$0xff]
    %v295 = vld [vmem:[#allocation6 + $0xc0] sm:$0xff]
    %v296 = vld [vmem:[#allocation6 + $0xc8] sm:$0xff]
    %v297 = vld [vmem:[#allocation6 + $0xd0] sm:$0xff]
    %v298 = vld [vmem:[#allocation6 + $0xd8] sm:$0xff]
    %v299 = vld [vmem:[#allocation6 + $0xe0] sm:$0xff]
    %v300 = vld [vmem:[#allocation6 + $0xe8] sm:$0xff]
    %v301 = vld [vmem:[#allocation6 + $0xf0] sm:$0xff]
    %v302 = vld [vmem:[#allocation6 + $0xf8] sm:$0xff]
    %v303 = vld [vmem:[#allocation6 + $0x100] sm:$0xff]
    %v304 = vld [vmem:[#allocation6 + $0x108] sm:$0xff]
    %v305 = vld [vmem:[#allocation6 + $0x110] sm:$0xff]
    %v306 = vld [vmem:[#allocation6 + $0x118] sm:$0xff]
    %v307 = vld [vmem:[#allocation6 + $0x120] sm:$0xff]
    %v308 = vld [vmem:[#allocation6 + $0x128] sm:$0xff]
    %v309 = vld [vmem:[#allocation6 + $0x130] sm:$0xff]
    %v310 = vld [vmem:[#allocation6 + $0x138] sm:$0xff]
    %v311 = vld [vmem:[#allocation6 + $0x140] sm:$0xff]
    %v312 = vld [vmem:[#allocation6 + $0x148] sm:$0xff]
    %v313 = vld [vmem:[#allocation6 + $0x150] sm:$0xff]
    %v314 = vld [vmem:[#allocation6 + $0x158] sm:$0xff]
    %v315 = vld [vmem:[#allocation6 + $0x160] sm:$0xff]
    %v316 = vld [vmem:[#allocation6 + $0x168] sm:$0xff]
    %v317 = vld [vmem:[#allocation6 + $0x170] sm:$0xff]
    %v318 = vld [vmem:[#allocation6 + $0x178] sm:$0xff]
    %v319 = vld [vmem:[#allocation6 + $0x180] sm:$0xff]
    %v320 = vld [vmem:[#allocation6 + $0x188] sm:$0xff]
    %v321 = vld [vmem:[#allocation6 + $0x190] sm:$0xff]
    %v322 = vld [vmem:[#allocation6 + $0x198] sm:$0xff]
    %v323 = vld [vmem:[#allocation6 + $0x1a0] sm:$0xff]
    %v324 = vld [vmem:[#allocation6 + $0x1a8] sm:$0xff]
    %v325 = vld [vmem:[#allocation6 + $0x1b0] sm:$0xff]
    %v326 = vld [vmem:[#allocation6 + $0x1b8] sm:$0xff]
    %v327 = vld [vmem:[#allocation6 + $0x1c0] sm:$0xff]
    %v328 = vld [vmem:[#allocation6 + $0x1c8] sm:$0xff]
    %v329 = vld [vmem:[#allocation6 + $0x1d0] sm:$0xff]
    %v330 = vld [vmem:[#allocation6 + $0x1d8] sm:$0xff]
    %v331 = vld [vmem:[#allocation6 + $0x1e0] sm:$0xff]
    %v332 = vld [vmem:[#allocation6 + $0x1e8] sm:$0xff]
    %v333 = vld [vmem:[#allocation6 + $0x1f0] sm:$0xff]
    %v334 = vld [vmem:[#allocation6 + $0x1f8] sm:$0xff]
    %v335 = vld [vmem:[#allocation6 + $0x200] sm:$0xff]
    %v336 = vld [vmem:[#allocation6 + $0x208] sm:$0xff]
    %v337 = vld [vmem:[#allocation6 + $0x210] sm:$0xff]
    %v338 = vld [vmem:[#allocation6 + $0x218] sm:$0xff]
    %v339 = vld [vmem:[#allocation6 + $0x220] sm:$0xff]
    %v340 = vld [vmem:[#allocation6 + $0x228] sm:$0xff]
    %v341 = vld [vmem:[#allocation6 + $0x230] sm:$0xff]
    %v342 = vld [vmem:[#allocation6 + $0x238] sm:$0xff]
    %v343 = vld [vmem:[#allocation6 + $0x240] sm:$0xff]
    %v344 = vld [vmem:[#allocation6 + $0x248] sm:$0xff]
    %v345 = vld [vmem:[#allocation6 + $0x250] sm:$0xff]
    %v346 = vld [vmem:[#allocation6 + $0x258] sm:$0xff]
    %v347 = vld [vmem:[#allocation6 + $0x260] sm:$0xff]
    %v348 = vld [vmem:[#allocation6 + $0x268] sm:$0xff]
    %v349 = vld [vmem:[#allocation6 + $0x270] sm:$0xff]
    %v350 = vld [vmem:[#allocation6 + $0x278] sm:$0xff]
    %v351 = vld [vmem:[#allocation6 + $0x280] sm:$0xff]
    %v352 = vld [vmem:[#allocation6 + $0x288] sm:$0xff]
    %v353 = vld [vmem:[#allocation6 + $0x290] sm:$0xff]
    %v354 = vld [vmem:[#allocation6 + $0x298] sm:$0xff]
    %v355 = vld [vmem:[#allocation6 + $0x2a0] sm:$0xff]
    %v356 = vld [vmem:[#allocation6 + $0x2a8] sm:$0xff]
    %v357 = vld [vmem:[#allocation6 + $0x2b0] sm:$0xff]
    %v358 = vld [vmem:[#allocation6 + $0x2b8] sm:$0xff]
    %v359 = vld [vmem:[#allocation6 + $0x2c0] sm:$0xff]
    %v360 = vld [vmem:[#allocation6 + $0x2c8] sm:$0xff]
    %v361 = vld [vmem:[#allocation6 + $0x2d0] sm:$0xff]
    %v362 = vld [vmem:[#allocation6 + $0x2d8] sm:$0xff]
    %v363 = vld [vmem:[#allocation6 + $0x2e0] sm:$0xff]
    %v364 = vld [vmem:[#allocation6 + $0x2e8] sm:$0xff]
    %v365 = vld [vmem:[#allocation6 + $0x2f0] sm:$0xff]
    %v366 = vld [vmem:[#allocation6 + $0x2f8] sm:$0xff]
    %v367 = vld [vmem:[#allocation6 + $0x300] sm:$0xff]
    %v368 = vld [vmem:[#allocation6 + $0x308] sm:$0xff]
    %v369 = vld [vmem:[#allocation6 + $0x310] sm:$0xff]
    %v370 = vld [vmem:[#allocation6 + $0x318] sm:$0xff]
    %v371 = vld [vmem:[#allocation6 + $0x320] sm:$0xff]
    %v372 = vld [vmem:[#allocation6 + $0x328] sm:$0xff]
    %v373 = vld [vmem:[#allocation6 + $0x330] sm:$0xff]
    %v374 = vld [vmem:[#allocation6 + $0x338] sm:$0xff]
    %v375 = vld [vmem:[#allocation6 + $0x340] sm:$0xff]
    %v376 = vld [vmem:[#allocation6 + $0x348] sm:$0xff]
    %v377 = vld [vmem:[#allocation6 + $0x350] sm:$0xff]
    %v378 = vld [vmem:[#allocation6 + $0x358] sm:$0xff]
    %v379 = vld [vmem:[#allocation6 + $0x360] sm:$0xff]
    %v380 = vld [vmem:[#allocation6 + $0x368] sm:$0xff]
    %v381 = vld [vmem:[#allocation6 + $0x370] sm:$0xff]
    %v382 = vld [vmem:[#allocation6 + $0x378] sm:$0xff]
    %v383 = vld [vmem:[#allocation6 + $0x380] sm:$0xff]
    %v384 = vld [vmem:[#allocation6 + $0x388] sm:$0xff]
    %v385 = vld [vmem:[#allocation6 + $0x390] sm:$0xff]
    %v386 = vld [vmem:[#allocation6 + $0x398] sm:$0xff]
    %v387 = vld [vmem:[#allocation6 + $0x3a0] sm:$0xff]
    %v388 = vld [vmem:[#allocation6 + $0x3a8] sm:$0xff]
    %v389 = vld [vmem:[#allocation6 + $0x3b0] sm:$0xff]
    %v390 = vld [vmem:[#allocation6 + $0x3b8] sm:$0xff]
    %v391 = vld [vmem:[#allocation6 + $0x3c0] sm:$0xff]
    %v392 = vld [vmem:[#allocation6 + $0x3c8] sm:$0xff]
    %v393 = vld [vmem:[#allocation6 + $0x3d0] sm:$0xff]
    %v394 = vld [vmem:[#allocation6 + $0x3d8] sm:$0xff]
    %v395 = vld [vmem:[#allocation6 + $0x3e0] sm:$0xff]
    %v396 = vld [vmem:[#allocation6 + $0x3e8] sm:$0xff]
    %v397 = vld [vmem:[#allocation6 + $0x3f0] sm:$0xff]
    %v398 = vld [vmem:[#allocation6 + $0x3f8] sm:$0xff]
    %v399 = vld [vmem:[#allocation6 + $0x400] sm:$0xff]
    %v400 = vld [vmem:[#allocation6 + $0x408] sm:$0xff]
    %v401 = vld [vmem:[#allocation6 + $0x410] sm:$0xff]
    %v402 = vld [vmem:[#allocation6 + $0x418] sm:$0xff]
    %v403 = vld [vmem:[#allocation6 + $0x420] sm:$0xff]
    %v404 = vld [vmem:[#allocation6 + $0x428] sm:$0xff]
    %v405 = vld [vmem:[#allocation6 + $0x430] sm:$0xff]
    %v406 = vld [vmem:[#allocation6 + $0x438] sm:$0xff]
    %v407 = vld [vmem:[#allocation6 + $0x440] sm:$0xff]
    %v408 = vld [vmem:[#allocation6 + $0x448] sm:$0xff]
    %v409 = vld [vmem:[#allocation6 + $0x450] sm:$0xff]
    %v410 = vld [vmem:[#allocation6 + $0x458] sm:$0xff]
    %v411 = vld [vmem:[#allocation6 + $0x460] sm:$0xff]
    %v412 = vld [vmem:[#allocation6 + $0x468] sm:$0xff]
    %v413 = vld [vmem:[#allocation6 + $0x470] sm:$0xff]
    %v414 = vld [vmem:[#allocation6 + $0x478] sm:$0xff]
    %v415 = vld [vmem:[#allocation6 + $0x480] sm:$0xff]
    %v416 = vld [vmem:[#allocation6 + $0x488] sm:$0xff]
    %v417 = vld [vmem:[#allocation6 + $0x490] sm:$0xff]
    %v418 = vld [vmem:[#allocation6 + $0x498] sm:$0xff]
    %v419 = vld [vmem:[#allocation6 + $0x4a0] sm:$0xff]
    %v420 = vld [vmem:[#allocation6 + $0x4a8] sm:$0xff]
    %v421 = vld [vmem:[#allocation6 + $0x4b0] sm:$0xff]
    %v422 = vld [vmem:[#allocation6 + $0x4b8] sm:$0xff]
    %v423 = vld [vmem:[#allocation6 + $0x4c0] sm:$0xff]
    %v424 = vld [vmem:[#allocation6 + $0x4c8] sm:$0xff]
    %v425 = vld [vmem:[#allocation6 + $0x4d0] sm:$0xff]
    %v426 = vld [vmem:[#allocation6 + $0x4d8] sm:$0xff]
    %v427 = vld [vmem:[#allocation6 + $0x4e0] sm:$0xff]
    %v428 = vld [vmem:[#allocation6 + $0x4e8] sm:$0xff]
    %v429 = vld [vmem:[#allocation6 + $0x4f0] sm:$0xff]
    %v430 = vld [vmem:[#allocation6 + $0x4f8] sm:$0xff]
    %v431 = vld [vmem:[#allocation6 + $0x500] sm:$0xff]
    %v432 = vld [vmem:[#allocation6 + $0x508] sm:$0xff]
    %v433 = vld [vmem:[#allocation6 + $0x510] sm:$0xff]
    %v434 = vld [vmem:[#allocation6 + $0x518] sm:$0xff]
    %v435 = vld [vmem:[#allocation6 + $0x520] sm:$0xff]
    %v436 = vld [vmem:[#allocation6 + $0x528] sm:$0xff]
    %v437 = vld [vmem:[#allocation6 + $0x530] sm:$0xff]
    %v438 = vld [vmem:[#allocation6 + $0x538] sm:$0xff]
    %v439 = vld [vmem:[#allocation6 + $0x540] sm:$0xff]
    %v440 = vld [vmem:[#allocation6 + $0x548] sm:$0xff]
    %v441 = vld [vmem:[#allocation6 + $0x550] sm:$0xff]
    %v442 = vld [vmem:[#allocation6 + $0x558] sm:$0xff]
    %v443 = vld [vmem:[#allocation6 + $0x560] sm:$0xff]
    %v444 = vld [vmem:[#allocation6 + $0x568] sm:$0xff]
    %v445 = vld [vmem:[#allocation6 + $0x570] sm:$0xff]
    %v446 = vld [vmem:[#allocation6 + $0x578] sm:$0xff]
    %v447 = vld [vmem:[#allocation6 + $0x580] sm:$0xff]
    %v448 = vld [vmem:[#allocation6 + $0x588] sm:$0xff]
    %v449 = vld [vmem:[#allocation6 + $0x590] sm:$0xff]
    %v450 = vld [vmem:[#allocation6 + $0x598] sm:$0xff]
    %v451 = vld [vmem:[#allocation6 + $0x5a0] sm:$0xff]
    %v452 = vld [vmem:[#allocation6 + $0x5a8] sm:$0xff]
    %v453 = vld [vmem:[#allocation6 + $0x5b0] sm:$0xff]
    %v454 = vld [vmem:[#allocation6 + $0x5b8] sm:$0xff]
    %v455 = vld [vmem:[#allocation6 + $0x5c0] sm:$0xff]
    %v456 = vld [vmem:[#allocation6 + $0x5c8] sm:$0xff]
    %v457 = vld [vmem:[#allocation6 + $0x5d0] sm:$0xff]
    %v458 = vld [vmem:[#allocation6 + $0x5d8] sm:$0xff]
    %v459 = vld [vmem:[#allocation6 + $0x5e0] sm:$0xff]
    %v460 = vld [vmem:[#allocation6 + $0x5e8] sm:$0xff]
    %v461 = vld [vmem:[#allocation6 + $0x5f0] sm:$0xff]
    %v462 = vld [vmem:[#allocation6 + $0x5f8] sm:$0xff]
    %v463 = vld [vmem:[#allocation6 + $0x600] sm:$0xff]
    %v464 = vld [vmem:[#allocation6 + $0x608] sm:$0xff]
    %v465 = vld [vmem:[#allocation6 + $0x610] sm:$0xff]
    %v466 = vld [vmem:[#allocation6 + $0x618] sm:$0xff]
    %v467 = vld [vmem:[#allocation6 + $0x620] sm:$0xff]
    %v468 = vld [vmem:[#allocation6 + $0x628] sm:$0xff]
    %v469 = vld [vmem:[#allocation6 + $0x630] sm:$0xff]
    %v470 = vld [vmem:[#allocation6 + $0x638] sm:$0xff]
    %v471 = vld [vmem:[#allocation6 + $0x640] sm:$0xff]
    %v472 = vld [vmem:[#allocation6 + $0x648] sm:$0xff]
    %v473 = vld [vmem:[#allocation6 + $0x650] sm:$0xff]
    %v474 = vld [vmem:[#allocation6 + $0x658] sm:$0xff]
    %v475 = vld [vmem:[#allocation6 + $0x660] sm:$0xff]
    %v476 = vld [vmem:[#allocation6 + $0x668] sm:$0xff]
    %v477 = vld [vmem:[#allocation6 + $0x670] sm:$0xff]
    %v478 = vld [vmem:[#allocation6 + $0x678] sm:$0xff]
    %v479 = vld [vmem:[#allocation6 + $0x680] sm:$0xff]
    %v480 = vld [vmem:[#allocation6 + $0x688] sm:$0xff]
    %v481 = vld [vmem:[#allocation6 + $0x690] sm:$0xff]
    %v482 = vld [vmem:[#allocation6 + $0x698] sm:$0xff]
    %v483 = vld [vmem:[#allocation6 + $0x6a0] sm:$0xff]
    %v484 = vld [vmem:[#allocation6 + $0x6a8] sm:$0xff]
    %v485 = vld [vmem:[#allocation6 + $0x6b0] sm:$0xff]
    %v486 = vld [vmem:[#allocation6 + $0x6b8] sm:$0xff]
    %v487 = vld [vmem:[#allocation6 + $0x6c0] sm:$0xff]
    %v488 = vld [vmem:[#allocation6 + $0x6c8] sm:$0xff]
    %v489 = vld [vmem:[#allocation6 + $0x6d0] sm:$0xff]
    %v490 = vld [vmem:[#allocation6 + $0x6d8] sm:$0xff]
    %v491 = vld [vmem:[#allocation6 + $0x6e0] sm:$0xff]
    %v492 = vld [vmem:[#allocation6 + $0x6e8] sm:$0xff]
    %v493 = vld [vmem:[#allocation6 + $0x6f0] sm:$0xff]
    %v494 = vld [vmem:[#allocation6 + $0x6f8] sm:$0xff]
    %v495 = vld [vmem:[#allocation6 + $0x700] sm:$0xff]
    %v496 = vld [vmem:[#allocation6 + $0x708] sm:$0xff]
    %v497 = vld [vmem:[#allocation6 + $0x710] sm:$0xff]
    %v498 = vld [vmem:[#allocation6 + $0x718] sm:$0xff]
    %v499 = vld [vmem:[#allocation6 + $0x720] sm:$0xff]
    %v500 = vld [vmem:[#allocation6 + $0x728] sm:$0xff]
    %v501 = vld [vmem:[#allocation6 + $0x730] sm:$0xff]
    %v502 = vld [vmem:[#allocation6 + $0x738] sm:$0xff]
    %v503 = vld [vmem:[#allocation6 + $0x740] sm:$0xff]
    %v504 = vld [vmem:[#allocation6 + $0x748] sm:$0xff]
    %v505 = vld [vmem:[#allocation6 + $0x750] sm:$0xff]
    %v506 = vld [vmem:[#allocation6 + $0x758] sm:$0xff]
    %v507 = vld [vmem:[#allocation6 + $0x760] sm:$0xff]
    %v508 = vld [vmem:[#allocation6 + $0x768] sm:$0xff]
    %v509 = vld [vmem:[#allocation6 + $0x770] sm:$0xff]
    %v510 = vld [vmem:[#allocation6 + $0x778] sm:$0xff]
    %v511 = vld [vmem:[#allocation6 + $0x780] sm:$0xff]
    %v512 = vld [vmem:[#allocation6 + $0x788] sm:$0xff]
    %v513 = vld [vmem:[#allocation6 + $0x790] sm:$0xff]
    %v514 = vld [vmem:[#allocation6 + $0x798] sm:$0xff]
    %v515 = vld [vmem:[#allocation6 + $0x7a0] sm:$0xff]
    %v516 = vld [vmem:[#allocation6 + $0x7a8] sm:$0xff]
    %v517 = vld [vmem:[#allocation6 + $0x7b0] sm:$0xff]
    %v518 = vld [vmem:[#allocation6 + $0x7b8] sm:$0xff]
    %v519 = vld [vmem:[#allocation6 + $0x7c0] sm:$0xff]
    %v520 = vld [vmem:[#allocation6 + $0x7c8] sm:$0xff]
    %v521 = vld [vmem:[#allocation6 + $0x7d0] sm:$0xff]
    %v522 = vld [vmem:[#allocation6 + $0x7d8] sm:$0xff]
    %v523 = vld [vmem:[#allocation6 + $0x7e0] sm:$0xff]
    %v524 = vld [vmem:[#allocation6 + $0x7e8] sm:$0xff]
    %v525 = vld [vmem:[#allocation6 + $0x7f0] sm:$0xff]
    %v526 = vld [vmem:[#allocation6 + $0x7f8] sm:$0xff]
    %v527 = vld [vmem:[%s2] sm:$0xf]
    %v529 = vlaneseq
    %v530 = vshrl.u32 %v529, 7
    %v531 = vsub.s32 0, %v530
    %v532 = vrot.slane %v527, %v531
    %v533 = vlaneseq
    %v534 = vshrl.u32 %v533, 7
    %v535 = vsub.s32 1, %v534
    %v536 = vrot.slane %v527, %v535
    %v537 = vlaneseq
    %v538 = vshrl.u32 %v537, 7
    %v539 = vsub.s32 2, %v538
    %v540 = vrot.slane %v527, %v539
    %v541 = vlaneseq
    %v542 = vshrl.u32 %v541, 7
    %v543 = vsub.s32 3, %v542
    %v544 = vrot.slane %v527, %v543
    %v805 = vunpack.c.l.b16 %v271
    %v806 = vunpack.c.h.b16 %v271
    %v807 = vunpack.c.l.b16 %v272
    %v808 = vunpack.c.h.b16 %v272
    %v809 = vunpack.c.l.b16 %v273
    %v810 = vunpack.c.h.b16 %v273
    %v811 = vunpack.c.l.b16 %v274
    %v812 = vunpack.c.h.b16 %v274
    %v813 = vunpack.c.l.b16 %v275
    %v814 = vunpack.c.h.b16 %v275
    %v815 = vunpack.c.l.b16 %v276
    %v816 = vunpack.c.h.b16 %v276
    %v817 = vunpack.c.l.b16 %v277
    %v818 = vunpack.c.h.b16 %v277
    %v819 = vunpack.c.l.b16 %v278
    %v820 = vunpack.c.h.b16 %v278
    %v821 = vunpack.c.l.b16 %v279
    %v822 = vunpack.c.h.b16 %v279
    %v823 = vunpack.c.l.b16 %v280
    %v824 = vunpack.c.h.b16 %v280
    %v825 = vunpack.c.l.b16 %v281
    %v826 = vunpack.c.h.b16 %v281
    %v827 = vunpack.c.l.b16 %v282
    %v828 = vunpack.c.h.b16 %v282
    %v829 = vunpack.c.l.b16 %v283
    %v830 = vunpack.c.h.b16 %v283
    %v831 = vunpack.c.l.b16 %v284
    %v832 = vunpack.c.h.b16 %v284
    %v833 = vunpack.c.l.b16 %v285
    %v834 = vunpack.c.h.b16 %v285
    %v835 = vunpack.c.l.b16 %v286
    %v836 = vunpack.c.h.b16 %v286
    %v837 = vunpack.c.l.b16 %v287
    %v838 = vunpack.c.h.b16 %v287
    %v839 = vunpack.c.l.b16 %v288
    %v840 = vunpack.c.h.b16 %v288
    %v841 = vunpack.c.l.b16 %v289
    %v842 = vunpack.c.h.b16 %v289
    %v843 = vunpack.c.l.b16 %v290
    %v844 = vunpack.c.h.b16 %v290
    %v845 = vunpack.c.l.b16 %v291
    %v846 = vunpack.c.h.b16 %v291
    %v847 = vunpack.c.l.b16 %v292
    %v848 = vunpack.c.h.b16 %v292
    %v849 = vunpack.c.l.b16 %v293
    %v850 = vunpack.c.h.b16 %v293
    %v851 = vunpack.c.l.b16 %v294
    %v852 = vunpack.c.h.b16 %v294
    %v853 = vunpack.c.l.b16 %v295
    %v854 = vunpack.c.h.b16 %v295
    %v855 = vunpack.c.l.b16 %v296
    %v856 = vunpack.c.h.b16 %v296
    %v857 = vunpack.c.l.b16 %v297
    %v858 = vunpack.c.h.b16 %v297
    %v859 = vunpack.c.l.b16 %v298
    %v860 = vunpack.c.h.b16 %v298
    %v861 = vunpack.c.l.b16 %v299
    %v862 = vunpack.c.h.b16 %v299
    %v863 = vunpack.c.l.b16 %v300
    %v864 = vunpack.c.h.b16 %v300
    %v865 = vunpack.c.l.b16 %v301
    %v866 = vunpack.c.h.b16 %v301
    %v867 = vunpack.c.l.b16 %v302
    %v868 = vunpack.c.h.b16 %v302
    %v869 = vunpack.c.l.b16 %v303
    %v870 = vunpack.c.h.b16 %v303
    %v871 = vunpack.c.l.b16 %v304
    %v872 = vunpack.c.h.b16 %v304
    %v873 = vunpack.c.l.b16 %v305
    %v874 = vunpack.c.h.b16 %v305
    %v875 = vunpack.c.l.b16 %v306
    %v876 = vunpack.c.h.b16 %v306
    %v877 = vunpack.c.l.b16 %v307
    %v878 = vunpack.c.h.b16 %v307
    %v879 = vunpack.c.l.b16 %v308
    %v880 = vunpack.c.h.b16 %v308
    %v881 = vunpack.c.l.b16 %v309
    %v882 = vunpack.c.h.b16 %v309
    %v883 = vunpack.c.l.b16 %v310
    %v884 = vunpack.c.h.b16 %v310
    %v885 = vunpack.c.l.b16 %v311
    %v886 = vunpack.c.h.b16 %v311
    %v887 = vunpack.c.l.b16 %v312
    %v888 = vunpack.c.h.b16 %v312
    %v889 = vunpack.c.l.b16 %v313
    %v890 = vunpack.c.h.b16 %v313
    %v891 = vunpack.c.l.b16 %v314
    %v892 = vunpack.c.h.b16 %v314
    %v893 = vunpack.c.l.b16 %v315
    %v894 = vunpack.c.h.b16 %v315
    %v895 = vunpack.c.l.b16 %v316
    %v896 = vunpack.c.h.b16 %v316
    %v897 = vunpack.c.l.b16 %v317
    %v898 = vunpack.c.h.b16 %v317
    %v899 = vunpack.c.l.b16 %v318
    %v900 = vunpack.c.h.b16 %v318
    %v901 = vunpack.c.l.b16 %v319
    %v902 = vunpack.c.h.b16 %v319
    %v903 = vunpack.c.l.b16 %v320
    %v904 = vunpack.c.h.b16 %v320
    %v905 = vunpack.c.l.b16 %v321
    %v906 = vunpack.c.h.b16 %v321
    %v907 = vunpack.c.l.b16 %v322
    %v908 = vunpack.c.h.b16 %v322
    %v909 = vunpack.c.l.b16 %v323
    %v910 = vunpack.c.h.b16 %v323
    %v911 = vunpack.c.l.b16 %v324
    %v912 = vunpack.c.h.b16 %v324
    %v913 = vunpack.c.l.b16 %v325
    %v914 = vunpack.c.h.b16 %v325
    %v915 = vunpack.c.l.b16 %v326
    %v916 = vunpack.c.h.b16 %v326
    %v917 = vunpack.c.l.b16 %v327
    %v918 = vunpack.c.h.b16 %v327
    %v919 = vunpack.c.l.b16 %v328
    %v920 = vunpack.c.h.b16 %v328
    %v921 = vunpack.c.l.b16 %v329
    %v922 = vunpack.c.h.b16 %v329
    %v923 = vunpack.c.l.b16 %v330
    %v924 = vunpack.c.h.b16 %v330
    %v925 = vunpack.c.l.b16 %v331
    %v926 = vunpack.c.h.b16 %v331
    %v927 = vunpack.c.l.b16 %v332
    %v928 = vunpack.c.h.b16 %v332
    %v929 = vunpack.c.l.b16 %v333
    %v930 = vunpack.c.h.b16 %v333
    %v931 = vunpack.c.l.b16 %v334
    %v932 = vunpack.c.h.b16 %v334
    %v933 = vunpack.c.l.b16 %v335
    %v934 = vunpack.c.h.b16 %v335
    %v935 = vunpack.c.l.b16 %v336
    %v936 = vunpack.c.h.b16 %v336
    %v937 = vunpack.c.l.b16 %v337
    %v938 = vunpack.c.h.b16 %v337
    %v939 = vunpack.c.l.b16 %v338
    %v940 = vunpack.c.h.b16 %v338
    %v941 = vunpack.c.l.b16 %v339
    %v942 = vunpack.c.h.b16 %v339
    %v943 = vunpack.c.l.b16 %v340
    %v944 = vunpack.c.h.b16 %v340
    %v945 = vunpack.c.l.b16 %v341
    %v946 = vunpack.c.h.b16 %v341
    %v947 = vunpack.c.l.b16 %v342
    %v948 = vunpack.c.h.b16 %v342
    %v949 = vunpack.c.l.b16 %v343
    %v950 = vunpack.c.h.b16 %v343
    %v951 = vunpack.c.l.b16 %v344
    %v952 = vunpack.c.h.b16 %v344
    %v953 = vunpack.c.l.b16 %v345
    %v954 = vunpack.c.h.b16 %v345
    %v955 = vunpack.c.l.b16 %v346
    %v956 = vunpack.c.h.b16 %v346
    %v957 = vunpack.c.l.b16 %v347
    %v958 = vunpack.c.h.b16 %v347
    %v959 = vunpack.c.l.b16 %v348
    %v960 = vunpack.c.h.b16 %v348
    %v961 = vunpack.c.l.b16 %v349
    %v962 = vunpack.c.h.b16 %v349
    %v963 = vunpack.c.l.b16 %v350
    %v964 = vunpack.c.h.b16 %v350
    %v965 = vunpack.c.l.b16 %v351
    %v966 = vunpack.c.h.b16 %v351
    %v967 = vunpack.c.l.b16 %v352
    %v968 = vunpack.c.h.b16 %v352
    %v969 = vunpack.c.l.b16 %v353
    %v970 = vunpack.c.h.b16 %v353
    %v971 = vunpack.c.l.b16 %v354
    %v972 = vunpack.c.h.b16 %v354
    %v973 = vunpack.c.l.b16 %v355
    %v974 = vunpack.c.h.b16 %v355
    %v975 = vunpack.c.l.b16 %v356
    %v976 = vunpack.c.h.b16 %v356
    %v977 = vunpack.c.l.b16 %v357
    %v978 = vunpack.c.h.b16 %v357
    %v979 = vunpack.c.l.b16 %v358
    %v980 = vunpack.c.h.b16 %v358
    %v981 = vunpack.c.l.b16 %v359
    %v982 = vunpack.c.h.b16 %v359
    %v983 = vunpack.c.l.b16 %v360
    %v984 = vunpack.c.h.b16 %v360
    %v985 = vunpack.c.l.b16 %v361
    %v986 = vunpack.c.h.b16 %v361
    %v987 = vunpack.c.l.b16 %v362
    %v988 = vunpack.c.h.b16 %v362
    %v989 = vunpack.c.l.b16 %v363
    %v990 = vunpack.c.h.b16 %v363
    %v991 = vunpack.c.l.b16 %v364
    %v992 = vunpack.c.h.b16 %v364
    %v993 = vunpack.c.l.b16 %v365
    %v994 = vunpack.c.h.b16 %v365
    %v995 = vunpack.c.l.b16 %v366
    %v996 = vunpack.c.h.b16 %v366
    %v997 = vunpack.c.l.b16 %v367
    %v998 = vunpack.c.h.b16 %v367
    %v999 = vunpack.c.l.b16 %v368
    %v1000 = vunpack.c.h.b16 %v368
    %v1001 = vunpack.c.l.b16 %v369
    %v1002 = vunpack.c.h.b16 %v369
    %v1003 = vunpack.c.l.b16 %v370
    %v1004 = vunpack.c.h.b16 %v370
    %v1005 = vunpack.c.l.b16 %v371
    %v1006 = vunpack.c.h.b16 %v371
    %v1007 = vunpack.c.l.b16 %v372
    %v1008 = vunpack.c.h.b16 %v372
    %v1009 = vunpack.c.l.b16 %v373
    %v1010 = vunpack.c.h.b16 %v373
    %v1011 = vunpack.c.l.b16 %v374
    %v1012 = vunpack.c.h.b16 %v374
    %v1013 = vunpack.c.l.b16 %v375
    %v1014 = vunpack.c.h.b16 %v375
    %v1015 = vunpack.c.l.b16 %v376
    %v1016 = vunpack.c.h.b16 %v376
    %v1017 = vunpack.c.l.b16 %v377
    %v1018 = vunpack.c.h.b16 %v377
    %v1019 = vunpack.c.l.b16 %v378
    %v1020 = vunpack.c.h.b16 %v378
    %v1021 = vunpack.c.l.b16 %v379
    %v1022 = vunpack.c.h.b16 %v379
    %v1023 = vunpack.c.l.b16 %v380
    %v1024 = vunpack.c.h.b16 %v380
    %v1025 = vunpack.c.l.b16 %v381
    %v1026 = vunpack.c.h.b16 %v381
    %v1027 = vunpack.c.l.b16 %v382
    %v1028 = vunpack.c.h.b16 %v382
    %v1029 = vunpack.c.l.b16 %v383
    %v1030 = vunpack.c.h.b16 %v383
    %v1031 = vunpack.c.l.b16 %v384
    %v1032 = vunpack.c.h.b16 %v384
    %v1033 = vunpack.c.l.b16 %v385
    %v1034 = vunpack.c.h.b16 %v385
    %v1035 = vunpack.c.l.b16 %v386
    %v1036 = vunpack.c.h.b16 %v386
    %v1037 = vunpack.c.l.b16 %v387
    %v1038 = vunpack.c.h.b16 %v387
    %v1039 = vunpack.c.l.b16 %v388
    %v1040 = vunpack.c.h.b16 %v388
    %v1041 = vunpack.c.l.b16 %v389
    %v1042 = vunpack.c.h.b16 %v389
    %v1043 = vunpack.c.l.b16 %v390
    %v1044 = vunpack.c.h.b16 %v390
    %v1045 = vunpack.c.l.b16 %v391
    %v1046 = vunpack.c.h.b16 %v391
    %v1047 = vunpack.c.l.b16 %v392
    %v1048 = vunpack.c.h.b16 %v392
    %v1049 = vunpack.c.l.b16 %v393
    %v1050 = vunpack.c.h.b16 %v393
    %v1051 = vunpack.c.l.b16 %v394
    %v1052 = vunpack.c.h.b16 %v394
    %v1053 = vunpack.c.l.b16 %v395
    %v1054 = vunpack.c.h.b16 %v395
    %v1055 = vunpack.c.l.b16 %v396
    %v1056 = vunpack.c.h.b16 %v396
    %v1057 = vunpack.c.l.b16 %v397
    %v1058 = vunpack.c.h.b16 %v397
    %v1059 = vunpack.c.l.b16 %v398
    %v1060 = vunpack.c.h.b16 %v398
    %v1061 = vunpack.c.l.b16 %v399
    %v1062 = vunpack.c.h.b16 %v399
    %v1063 = vunpack.c.l.b16 %v400
    %v1064 = vunpack.c.h.b16 %v400
    %v1065 = vunpack.c.l.b16 %v401
    %v1066 = vunpack.c.h.b16 %v401
    %v1067 = vunpack.c.l.b16 %v402
    %v1068 = vunpack.c.h.b16 %v402
    %v1069 = vunpack.c.l.b16 %v403
    %v1070 = vunpack.c.h.b16 %v403
    %v1071 = vunpack.c.l.b16 %v404
    %v1072 = vunpack.c.h.b16 %v404
    %v1073 = vunpack.c.l.b16 %v405
    %v1074 = vunpack.c.h.b16 %v405
    %v1075 = vunpack.c.l.b16 %v406
    %v1076 = vunpack.c.h.b16 %v406
    %v1077 = vunpack.c.l.b16 %v407
    %v1078 = vunpack.c.h.b16 %v407
    %v1079 = vunpack.c.l.b16 %v408
    %v1080 = vunpack.c.h.b16 %v408
    %v1081 = vunpack.c.l.b16 %v409
    %v1082 = vunpack.c.h.b16 %v409
    %v1083 = vunpack.c.l.b16 %v410
    %v1084 = vunpack.c.h.b16 %v410
    %v1085 = vunpack.c.l.b16 %v411
    %v1086 = vunpack.c.h.b16 %v411
    %v1087 = vunpack.c.l.b16 %v412
    %v1088 = vunpack.c.h.b16 %v412
    %v1089 = vunpack.c.l.b16 %v413
    %v1090 = vunpack.c.h.b16 %v413
    %v1091 = vunpack.c.l.b16 %v414
    %v1092 = vunpack.c.h.b16 %v414
    %v1093 = vunpack.c.l.b16 %v415
    %v1094 = vunpack.c.h.b16 %v415
    %v1095 = vunpack.c.l.b16 %v416
    %v1096 = vunpack.c.h.b16 %v416
    %v1097 = vunpack.c.l.b16 %v417
    %v1098 = vunpack.c.h.b16 %v417
    %v1099 = vunpack.c.l.b16 %v418
    %v1100 = vunpack.c.h.b16 %v418
    %v1101 = vunpack.c.l.b16 %v419
    %v1102 = vunpack.c.h.b16 %v419
    %v1103 = vunpack.c.l.b16 %v420
    %v1104 = vunpack.c.h.b16 %v420
    %v1105 = vunpack.c.l.b16 %v421
    %v1106 = vunpack.c.h.b16 %v421
    %v1107 = vunpack.c.l.b16 %v422
    %v1108 = vunpack.c.h.b16 %v422
    %v1109 = vunpack.c.l.b16 %v423
    %v1110 = vunpack.c.h.b16 %v423
    %v1111 = vunpack.c.l.b16 %v424
    %v1112 = vunpack.c.h.b16 %v424
    %v1113 = vunpack.c.l.b16 %v425
    %v1114 = vunpack.c.h.b16 %v425
    %v1115 = vunpack.c.l.b16 %v426
    %v1116 = vunpack.c.h.b16 %v426
    %v1117 = vunpack.c.l.b16 %v427
    %v1118 = vunpack.c.h.b16 %v427
    %v1119 = vunpack.c.l.b16 %v428
    %v1120 = vunpack.c.h.b16 %v428
    %v1121 = vunpack.c.l.b16 %v429
    %v1122 = vunpack.c.h.b16 %v429
    %v1123 = vunpack.c.l.b16 %v430
    %v1124 = vunpack.c.h.b16 %v430
    %v1125 = vunpack.c.l.b16 %v431
    %v1126 = vunpack.c.h.b16 %v431
    %v1127 = vunpack.c.l.b16 %v432
    %v1128 = vunpack.c.h.b16 %v432
    %v1129 = vunpack.c.l.b16 %v433
    %v1130 = vunpack.c.h.b16 %v433
    %v1131 = vunpack.c.l.b16 %v434
    %v1132 = vunpack.c.h.b16 %v434
    %v1133 = vunpack.c.l.b16 %v435
    %v1134 = vunpack.c.h.b16 %v435
    %v1135 = vunpack.c.l.b16 %v436
    %v1136 = vunpack.c.h.b16 %v436
    %v1137 = vunpack.c.l.b16 %v437
    %v1138 = vunpack.c.h.b16 %v437
    %v1139 = vunpack.c.l.b16 %v438
    %v1140 = vunpack.c.h.b16 %v438
    %v1141 = vunpack.c.l.b16 %v439
    %v1142 = vunpack.c.h.b16 %v439
    %v1143 = vunpack.c.l.b16 %v440
    %v1144 = vunpack.c.h.b16 %v440
    %v1145 = vunpack.c.l.b16 %v441
    %v1146 = vunpack.c.h.b16 %v441
    %v1147 = vunpack.c.l.b16 %v442
    %v1148 = vunpack.c.h.b16 %v442
    %v1149 = vunpack.c.l.b16 %v443
    %v1150 = vunpack.c.h.b16 %v443
    %v1151 = vunpack.c.l.b16 %v444
    %v1152 = vunpack.c.h.b16 %v444
    %v1153 = vunpack.c.l.b16 %v445
    %v1154 = vunpack.c.h.b16 %v445
    %v1155 = vunpack.c.l.b16 %v446
    %v1156 = vunpack.c.h.b16 %v446
    %v1157 = vunpack.c.l.b16 %v447
    %v1158 = vunpack.c.h.b16 %v447
    %v1159 = vunpack.c.l.b16 %v448
    %v1160 = vunpack.c.h.b16 %v448
    %v1161 = vunpack.c.l.b16 %v449
    %v1162 = vunpack.c.h.b16 %v449
    %v1163 = vunpack.c.l.b16 %v450
    %v1164 = vunpack.c.h.b16 %v450
    %v1165 = vunpack.c.l.b16 %v451
    %v1166 = vunpack.c.h.b16 %v451
    %v1167 = vunpack.c.l.b16 %v452
    %v1168 = vunpack.c.h.b16 %v452
    %v1169 = vunpack.c.l.b16 %v453
    %v1170 = vunpack.c.h.b16 %v453
    %v1171 = vunpack.c.l.b16 %v454
    %v1172 = vunpack.c.h.b16 %v454
    %v1173 = vunpack.c.l.b16 %v455
    %v1174 = vunpack.c.h.b16 %v455
    %v1175 = vunpack.c.l.b16 %v456
    %v1176 = vunpack.c.h.b16 %v456
    %v1177 = vunpack.c.l.b16 %v457
    %v1178 = vunpack.c.h.b16 %v457
    %v1179 = vunpack.c.l.b16 %v458
    %v1180 = vunpack.c.h.b16 %v458
    %v1181 = vunpack.c.l.b16 %v459
    %v1182 = vunpack.c.h.b16 %v459
    %v1183 = vunpack.c.l.b16 %v460
    %v1184 = vunpack.c.h.b16 %v460
    %v1185 = vunpack.c.l.b16 %v461
    %v1186 = vunpack.c.h.b16 %v461
    %v1187 = vunpack.c.l.b16 %v462
    %v1188 = vunpack.c.h.b16 %v462
    %v1189 = vunpack.c.l.b16 %v463
    %v1190 = vunpack.c.h.b16 %v463
    %v1191 = vunpack.c.l.b16 %v464
    %v1192 = vunpack.c.h.b16 %v464
    %v1193 = vunpack.c.l.b16 %v465
    %v1194 = vunpack.c.h.b16 %v465
    %v1195 = vunpack.c.l.b16 %v466
    %v1196 = vunpack.c.h.b16 %v466
    %v1197 = vunpack.c.l.b16 %v467
    %v1198 = vunpack.c.h.b16 %v467
    %v1199 = vunpack.c.l.b16 %v468
    %v1200 = vunpack.c.h.b16 %v468
    %v1201 = vunpack.c.l.b16 %v469
    %v1202 = vunpack.c.h.b16 %v469
    %v1203 = vunpack.c.l.b16 %v470
    %v1204 = vunpack.c.h.b16 %v470
    %v1205 = vunpack.c.l.b16 %v471
    %v1206 = vunpack.c.h.b16 %v471
    %v1207 = vunpack.c.l.b16 %v472
    %v1208 = vunpack.c.h.b16 %v472
    %v1209 = vunpack.c.l.b16 %v473
    %v1210 = vunpack.c.h.b16 %v473
    %v1211 = vunpack.c.l.b16 %v474
    %v1212 = vunpack.c.h.b16 %v474
    %v1213 = vunpack.c.l.b16 %v475
    %v1214 = vunpack.c.h.b16 %v475
    %v1215 = vunpack.c.l.b16 %v476
    %v1216 = vunpack.c.h.b16 %v476
    %v1217 = vunpack.c.l.b16 %v477
    %v1218 = vunpack.c.h.b16 %v477
    %v1219 = vunpack.c.l.b16 %v478
    %v1220 = vunpack.c.h.b16 %v478
    %v1221 = vunpack.c.l.b16 %v479
    %v1222 = vunpack.c.h.b16 %v479
    %v1223 = vunpack.c.l.b16 %v480
    %v1224 = vunpack.c.h.b16 %v480
    %v1225 = vunpack.c.l.b16 %v481
    %v1226 = vunpack.c.h.b16 %v481
    %v1227 = vunpack.c.l.b16 %v482
    %v1228 = vunpack.c.h.b16 %v482
    %v1229 = vunpack.c.l.b16 %v483
    %v1230 = vunpack.c.h.b16 %v483
    %v1231 = vunpack.c.l.b16 %v484
    %v1232 = vunpack.c.h.b16 %v484
    %v1233 = vunpack.c.l.b16 %v485
    %v1234 = vunpack.c.h.b16 %v485
    %v1235 = vunpack.c.l.b16 %v486
    %v1236 = vunpack.c.h.b16 %v486
    %v1237 = vunpack.c.l.b16 %v487
    %v1238 = vunpack.c.h.b16 %v487
    %v1239 = vunpack.c.l.b16 %v488
    %v1240 = vunpack.c.h.b16 %v488
    %v1241 = vunpack.c.l.b16 %v489
    %v1242 = vunpack.c.h.b16 %v489
    %v1243 = vunpack.c.l.b16 %v490
    %v1244 = vunpack.c.h.b16 %v490
    %v1245 = vunpack.c.l.b16 %v491
    %v1246 = vunpack.c.h.b16 %v491
    %v1247 = vunpack.c.l.b16 %v492
    %v1248 = vunpack.c.h.b16 %v492
    %v1249 = vunpack.c.l.b16 %v493
    %v1250 = vunpack.c.h.b16 %v493
    %v1251 = vunpack.c.l.b16 %v494
    %v1252 = vunpack.c.h.b16 %v494
    %v1253 = vunpack.c.l.b16 %v495
    %v1254 = vunpack.c.h.b16 %v495
    %v1255 = vunpack.c.l.b16 %v496
    %v1256 = vunpack.c.h.b16 %v496
    %v1257 = vunpack.c.l.b16 %v497
    %v1258 = vunpack.c.h.b16 %v497
    %v1259 = vunpack.c.l.b16 %v498
    %v1260 = vunpack.c.h.b16 %v498
    %v1261 = vunpack.c.l.b16 %v499
    %v1262 = vunpack.c.h.b16 %v499
    %v1263 = vunpack.c.l.b16 %v500
    %v1264 = vunpack.c.h.b16 %v500
    %v1265 = vunpack.c.l.b16 %v501
    %v1266 = vunpack.c.h.b16 %v501
    %v1267 = vunpack.c.l.b16 %v502
    %v1268 = vunpack.c.h.b16 %v502
    %v1269 = vunpack.c.l.b16 %v503
    %v1270 = vunpack.c.h.b16 %v503
    %v1271 = vunpack.c.l.b16 %v504
    %v1272 = vunpack.c.h.b16 %v504
    %v1273 = vunpack.c.l.b16 %v505
    %v1274 = vunpack.c.h.b16 %v505
    %v1275 = vunpack.c.l.b16 %v506
    %v1276 = vunpack.c.h.b16 %v506
    %v1277 = vunpack.c.l.b16 %v507
    %v1278 = vunpack.c.h.b16 %v507
    %v1279 = vunpack.c.l.b16 %v508
    %v1280 = vunpack.c.h.b16 %v508
    %v1281 = vunpack.c.l.b16 %v509
    %v1282 = vunpack.c.h.b16 %v509
    %v1283 = vunpack.c.l.b16 %v510
    %v1284 = vunpack.c.h.b16 %v510
    %v1285 = vunpack.c.l.b16 %v511
    %v1286 = vunpack.c.h.b16 %v511
    %v1287 = vunpack.c.l.b16 %v512
    %v1288 = vunpack.c.h.b16 %v512
    %v1289 = vunpack.c.l.b16 %v513
    %v1290 = vunpack.c.h.b16 %v513
    %v1291 = vunpack.c.l.b16 %v514
    %v1292 = vunpack.c.h.b16 %v514
    %v1293 = vunpack.c.l.b16 %v515
    %v1294 = vunpack.c.h.b16 %v515
    %v1295 = vunpack.c.l.b16 %v516
    %v1296 = vunpack.c.h.b16 %v516
    %v1297 = vunpack.c.l.b16 %v517
    %v1298 = vunpack.c.h.b16 %v517
    %v1299 = vunpack.c.l.b16 %v518
    %v1300 = vunpack.c.h.b16 %v518
    %v1301 = vunpack.c.l.b16 %v519
    %v1302 = vunpack.c.h.b16 %v519
    %v1303 = vunpack.c.l.b16 %v520
    %v1304 = vunpack.c.h.b16 %v520
    %v1305 = vunpack.c.l.b16 %v521
    %v1306 = vunpack.c.h.b16 %v521
    %v1307 = vunpack.c.l.b16 %v522
    %v1308 = vunpack.c.h.b16 %v522
    %v1309 = vunpack.c.l.b16 %v523
    %v1310 = vunpack.c.h.b16 %v523
    %v1311 = vunpack.c.l.b16 %v524
    %v1312 = vunpack.c.h.b16 %v524
    %v1313 = vunpack.c.l.b16 %v525
    %v1314 = vunpack.c.h.b16 %v525
    %v1315 = vunpack.c.l.b16 %v526
    %v1316 = vunpack.c.h.b16 %v526
    %v1317 = vpack.c.b16 %v809, %v805
    %v1318 = vpack.c.b16 %v810, %v806
    %v1319 = vpack.c.b16 %v811, %v807
    %v1320 = vpack.c.b16 %v812, %v808
    %v1321 = vpack.c.b16 %v817, %v813
    %v1322 = vpack.c.b16 %v818, %v814
    %v1323 = vpack.c.b16 %v819, %v815
    %v1324 = vpack.c.b16 %v820, %v816
    %v1325 = vpack.c.b16 %v825, %v821
    %v1326 = vpack.c.b16 %v826, %v822
    %v1327 = vpack.c.b16 %v827, %v823
    %v1328 = vpack.c.b16 %v828, %v824
    %v1329 = vpack.c.b16 %v833, %v829
    %v1330 = vpack.c.b16 %v834, %v830
    %v1331 = vpack.c.b16 %v835, %v831
    %v1332 = vpack.c.b16 %v836, %v832
    %v1333 = vpack.c.b16 %v841, %v837
    %v1334 = vpack.c.b16 %v842, %v838
    %v1335 = vpack.c.b16 %v843, %v839
    %v1336 = vpack.c.b16 %v844, %v840
    %v1337 = vpack.c.b16 %v849, %v845
    %v1338 = vpack.c.b16 %v850, %v846
    %v1339 = vpack.c.b16 %v851, %v847
    %v1340 = vpack.c.b16 %v852, %v848
    %v1341 = vpack.c.b16 %v857, %v853
    %v1342 = vpack.c.b16 %v858, %v854
    %v1343 = vpack.c.b16 %v859, %v855
    %v1344 = vpack.c.b16 %v860, %v856
    %v1345 = vpack.c.b16 %v865, %v861
    %v1346 = vpack.c.b16 %v866, %v862
    %v1347 = vpack.c.b16 %v867, %v863
    %v1348 = vpack.c.b16 %v868, %v864
    %v1349 = vpack.c.b16 %v873, %v869
    %v1350 = vpack.c.b16 %v874, %v870
    %v1351 = vpack.c.b16 %v875, %v871
    %v1352 = vpack.c.b16 %v876, %v872
    %v1353 = vpack.c.b16 %v881, %v877
    %v1354 = vpack.c.b16 %v882, %v878
    %v1355 = vpack.c.b16 %v883, %v879
    %v1356 = vpack.c.b16 %v884, %v880
    %v1357 = vpack.c.b16 %v889, %v885
    %v1358 = vpack.c.b16 %v890, %v886
    %v1359 = vpack.c.b16 %v891, %v887
    %v1360 = vpack.c.b16 %v892, %v888
    %v1361 = vpack.c.b16 %v897, %v893
    %v1362 = vpack.c.b16 %v898, %v894
    %v1363 = vpack.c.b16 %v899, %v895
    %v1364 = vpack.c.b16 %v900, %v896
    %v1365 = vpack.c.b16 %v905, %v901
    %v1366 = vpack.c.b16 %v906, %v902
    %v1367 = vpack.c.b16 %v907, %v903
    %v1368 = vpack.c.b16 %v908, %v904
    %v1369 = vpack.c.b16 %v913, %v909
    %v1370 = vpack.c.b16 %v914, %v910
    %v1371 = vpack.c.b16 %v915, %v911
    %v1372 = vpack.c.b16 %v916, %v912
    %v1373 = vpack.c.b16 %v921, %v917
    %v1374 = vpack.c.b16 %v922, %v918
    %v1375 = vpack.c.b16 %v923, %v919
    %v1376 = vpack.c.b16 %v924, %v920
    %v1377 = vpack.c.b16 %v929, %v925
    %v1378 = vpack.c.b16 %v930, %v926
    %v1379 = vpack.c.b16 %v931, %v927
    %v1380 = vpack.c.b16 %v932, %v928
    %v1381 = vpack.c.b16 %v937, %v933
    %v1382 = vpack.c.b16 %v938, %v934
    %v1383 = vpack.c.b16 %v939, %v935
    %v1384 = vpack.c.b16 %v940, %v936
    %v1385 = vpack.c.b16 %v945, %v941
    %v1386 = vpack.c.b16 %v946, %v942
    %v1387 = vpack.c.b16 %v947, %v943
    %v1388 = vpack.c.b16 %v948, %v944
    %v1389 = vpack.c.b16 %v953, %v949
    %v1390 = vpack.c.b16 %v954, %v950
    %v1391 = vpack.c.b16 %v955, %v951
    %v1392 = vpack.c.b16 %v956, %v952
    %v1393 = vpack.c.b16 %v961, %v957
    %v1394 = vpack.c.b16 %v962, %v958
    %v1395 = vpack.c.b16 %v963, %v959
    %v1396 = vpack.c.b16 %v964, %v960
    %v1397 = vpack.c.b16 %v969, %v965
    %v1398 = vpack.c.b16 %v970, %v966
    %v1399 = vpack.c.b16 %v971, %v967
    %v1400 = vpack.c.b16 %v972, %v968
    %v1401 = vpack.c.b16 %v977, %v973
    %v1402 = vpack.c.b16 %v978, %v974
    %v1403 = vpack.c.b16 %v979, %v975
    %v1404 = vpack.c.b16 %v980, %v976
    %v1405 = vpack.c.b16 %v985, %v981
    %v1406 = vpack.c.b16 %v986, %v982
    %v1407 = vpack.c.b16 %v987, %v983
    %v1408 = vpack.c.b16 %v988, %v984
    %v1409 = vpack.c.b16 %v993, %v989
    %v1410 = vpack.c.b16 %v994, %v990
    %v1411 = vpack.c.b16 %v995, %v991
    %v1412 = vpack.c.b16 %v996, %v992
    %v1413 = vpack.c.b16 %v1001, %v997
    %v1414 = vpack.c.b16 %v1002, %v998
    %v1415 = vpack.c.b16 %v1003, %v999
    %v1416 = vpack.c.b16 %v1004, %v1000
    %v1417 = vpack.c.b16 %v1009, %v1005
    %v1418 = vpack.c.b16 %v1010, %v1006
    %v1419 = vpack.c.b16 %v1011, %v1007
    %v1420 = vpack.c.b16 %v1012, %v1008
    %v1421 = vpack.c.b16 %v1017, %v1013
    %v1422 = vpack.c.b16 %v1018, %v1014
    %v1423 = vpack.c.b16 %v1019, %v1015
    %v1424 = vpack.c.b16 %v1020, %v1016
    %v1425 = vpack.c.b16 %v1025, %v1021
    %v1426 = vpack.c.b16 %v1026, %v1022
    %v1427 = vpack.c.b16 %v1027, %v1023
    %v1428 = vpack.c.b16 %v1028, %v1024
    %v1429 = vpack.c.b16 %v1033, %v1029
    %v1430 = vpack.c.b16 %v1034, %v1030
    %v1431 = vpack.c.b16 %v1035, %v1031
    %v1432 = vpack.c.b16 %v1036, %v1032
    %v1433 = vpack.c.b16 %v1041, %v1037
    %v1434 = vpack.c.b16 %v1042, %v1038
    %v1435 = vpack.c.b16 %v1043, %v1039
    %v1436 = vpack.c.b16 %v1044, %v1040
    %v1437 = vpack.c.b16 %v1049, %v1045
    %v1438 = vpack.c.b16 %v1050, %v1046
    %v1439 = vpack.c.b16 %v1051, %v1047
    %v1440 = vpack.c.b16 %v1052, %v1048
    %v1441 = vpack.c.b16 %v1057, %v1053
    %v1442 = vpack.c.b16 %v1058, %v1054
    %v1443 = vpack.c.b16 %v1059, %v1055
    %v1444 = vpack.c.b16 %v1060, %v1056
    %v1445 = vpack.c.b16 %v1065, %v1061
    %v1446 = vpack.c.b16 %v1066, %v1062
    %v1447 = vpack.c.b16 %v1067, %v1063
    %v1448 = vpack.c.b16 %v1068, %v1064
    %v1449 = vpack.c.b16 %v1073, %v1069
    %v1450 = vpack.c.b16 %v1074, %v1070
    %v1451 = vpack.c.b16 %v1075, %v1071
    %v1452 = vpack.c.b16 %v1076, %v1072
    %v1453 = vpack.c.b16 %v1081, %v1077
    %v1454 = vpack.c.b16 %v1082, %v1078
    %v1455 = vpack.c.b16 %v1083, %v1079
    %v1456 = vpack.c.b16 %v1084, %v1080
    %v1457 = vpack.c.b16 %v1089, %v1085
    %v1458 = vpack.c.b16 %v1090, %v1086
    %v1459 = vpack.c.b16 %v1091, %v1087
    %v1460 = vpack.c.b16 %v1092, %v1088
    %v1461 = vpack.c.b16 %v1097, %v1093
    %v1462 = vpack.c.b16 %v1098, %v1094
    %v1463 = vpack.c.b16 %v1099, %v1095
    %v1464 = vpack.c.b16 %v1100, %v1096
    %v1465 = vpack.c.b16 %v1105, %v1101
    %v1466 = vpack.c.b16 %v1106, %v1102
    %v1467 = vpack.c.b16 %v1107, %v1103
    %v1468 = vpack.c.b16 %v1108, %v1104
    %v1469 = vpack.c.b16 %v1113, %v1109
    %v1470 = vpack.c.b16 %v1114, %v1110
    %v1471 = vpack.c.b16 %v1115, %v1111
    %v1472 = vpack.c.b16 %v1116, %v1112
    %v1473 = vpack.c.b16 %v1121, %v1117
    %v1474 = vpack.c.b16 %v1122, %v1118
    %v1475 = vpack.c.b16 %v1123, %v1119
    %v1476 = vpack.c.b16 %v1124, %v1120
    %v1477 = vpack.c.b16 %v1129, %v1125
    %v1478 = vpack.c.b16 %v1130, %v1126
    %v1479 = vpack.c.b16 %v1131, %v1127
    %v1480 = vpack.c.b16 %v1132, %v1128
    %v1481 = vpack.c.b16 %v1137, %v1133
    %v1482 = vpack.c.b16 %v1138, %v1134
    %v1483 = vpack.c.b16 %v1139, %v1135
    %v1484 = vpack.c.b16 %v1140, %v1136
    %v1485 = vpack.c.b16 %v1145, %v1141
    %v1486 = vpack.c.b16 %v1146, %v1142
    %v1487 = vpack.c.b16 %v1147, %v1143
    %v1488 = vpack.c.b16 %v1148, %v1144
    %v1489 = vpack.c.b16 %v1153, %v1149
    %v1490 = vpack.c.b16 %v1154, %v1150
    %v1491 = vpack.c.b16 %v1155, %v1151
    %v1492 = vpack.c.b16 %v1156, %v1152
    %v1493 = vpack.c.b16 %v1161, %v1157
    %v1494 = vpack.c.b16 %v1162, %v1158
    %v1495 = vpack.c.b16 %v1163, %v1159
    %v1496 = vpack.c.b16 %v1164, %v1160
    %v1497 = vpack.c.b16 %v1169, %v1165
    %v1498 = vpack.c.b16 %v1170, %v1166
    %v1499 = vpack.c.b16 %v1171, %v1167
    %v1500 = vpack.c.b16 %v1172, %v1168
    %v1501 = vpack.c.b16 %v1177, %v1173
    %v1502 = vpack.c.b16 %v1178, %v1174
    %v1503 = vpack.c.b16 %v1179, %v1175
    %v1504 = vpack.c.b16 %v1180, %v1176
    %v1505 = vpack.c.b16 %v1185, %v1181
    %v1506 = vpack.c.b16 %v1186, %v1182
    %v1507 = vpack.c.b16 %v1187, %v1183
    %v1508 = vpack.c.b16 %v1188, %v1184
    %v1509 = vpack.c.b16 %v1193, %v1189
    %v1510 = vpack.c.b16 %v1194, %v1190
    %v1511 = vpack.c.b16 %v1195, %v1191
    %v1512 = vpack.c.b16 %v1196, %v1192
    %v1513 = vpack.c.b16 %v1201, %v1197
    %v1514 = vpack.c.b16 %v1202, %v1198
    %v1515 = vpack.c.b16 %v1203, %v1199
    %v1516 = vpack.c.b16 %v1204, %v1200
    %v1517 = vpack.c.b16 %v1209, %v1205
    %v1518 = vpack.c.b16 %v1210, %v1206
    %v1519 = vpack.c.b16 %v1211, %v1207
    %v1520 = vpack.c.b16 %v1212, %v1208
    %v1521 = vpack.c.b16 %v1217, %v1213
    %v1522 = vpack.c.b16 %v1218, %v1214
    %v1523 = vpack.c.b16 %v1219, %v1215
    %v1524 = vpack.c.b16 %v1220, %v1216
    %v1525 = vpack.c.b16 %v1225, %v1221
    %v1526 = vpack.c.b16 %v1226, %v1222
    %v1527 = vpack.c.b16 %v1227, %v1223
    %v1528 = vpack.c.b16 %v1228, %v1224
    %v1529 = vpack.c.b16 %v1233, %v1229
    %v1530 = vpack.c.b16 %v1234, %v1230
    %v1531 = vpack.c.b16 %v1235, %v1231
    %v1532 = vpack.c.b16 %v1236, %v1232
    %v1533 = vpack.c.b16 %v1241, %v1237
    %v1534 = vpack.c.b16 %v1242, %v1238
    %v1535 = vpack.c.b16 %v1243, %v1239
    %v1536 = vpack.c.b16 %v1244, %v1240
    %v1537 = vpack.c.b16 %v1249, %v1245
    %v1538 = vpack.c.b16 %v1250, %v1246
    %v1539 = vpack.c.b16 %v1251, %v1247
    %v1540 = vpack.c.b16 %v1252, %v1248
    %v1541 = vpack.c.b16 %v1257, %v1253
    %v1542 = vpack.c.b16 %v1258, %v1254
    %v1543 = vpack.c.b16 %v1259, %v1255
    %v1544 = vpack.c.b16 %v1260, %v1256
    %v1545 = vpack.c.b16 %v1265, %v1261
    %v1546 = vpack.c.b16 %v1266, %v1262
    %v1547 = vpack.c.b16 %v1267, %v1263
    %v1548 = vpack.c.b16 %v1268, %v1264
    %v1549 = vpack.c.b16 %v1273, %v1269
    %v1550 = vpack.c.b16 %v1274, %v1270
    %v1551 = vpack.c.b16 %v1275, %v1271
    %v1552 = vpack.c.b16 %v1276, %v1272
    %v1553 = vpack.c.b16 %v1281, %v1277
    %v1554 = vpack.c.b16 %v1282, %v1278
    %v1555 = vpack.c.b16 %v1283, %v1279
    %v1556 = vpack.c.b16 %v1284, %v1280
    %v1557 = vpack.c.b16 %v1289, %v1285
    %v1558 = vpack.c.b16 %v1290, %v1286
    %v1559 = vpack.c.b16 %v1291, %v1287
    %v1560 = vpack.c.b16 %v1292, %v1288
    %v1561 = vpack.c.b16 %v1297, %v1293
    %v1562 = vpack.c.b16 %v1298, %v1294
    %v1563 = vpack.c.b16 %v1299, %v1295
    %v1564 = vpack.c.b16 %v1300, %v1296
    %v1565 = vpack.c.b16 %v1305, %v1301
    %v1566 = vpack.c.b16 %v1306, %v1302
    %v1567 = vpack.c.b16 %v1307, %v1303
    %v1568 = vpack.c.b16 %v1308, %v1304
    %v1569 = vpack.c.b16 %v1313, %v1309
    %v1570 = vpack.c.b16 %v1314, %v1310
    %v1571 = vpack.c.b16 %v1315, %v1311
    %v1572 = vpack.c.b16 %v1316, %v1312
    %1829 = vmatprep.subr.bf16.mxu0 %v1346
    %1830 = vmatpush1.bf16.msra.mxu0 %v1345
    %1831 = vmatprep.subr.bf16.mxu0 %v1342
    %1832 = vmatpush1.bf16.msra.mxu0 %v1341
    %1833 = vmatprep.subr.bf16.mxu0 %v1338
    %1834 = vmatpush1.bf16.msra.mxu0 %v1337
    %1835 = vmatprep.subr.bf16.mxu0 %v1334
    %1836 = vmatpush1.bf16.msra.mxu0 %v1333
    %1837 = vmatprep.subr.bf16.mxu0 %v1330
    %1838 = vmatpush1.bf16.msra.mxu0 %v1329
    %1839 = vmatprep.subr.bf16.mxu0 %v1326
    %1840 = vmatpush1.bf16.msra.mxu0 %v1325
    %1841 = vmatprep.subr.bf16.mxu0 %v1322
    %1842 = vmatpush1.bf16.msra.mxu0 %v1321
    %1843 = vmatprep.subr.bf16.mxu0 %v1318
    %1844 = vmatpush1.bf16.msra.mxu0 %v1317
    %1845 = vmatprep.subr.bf16.mxu0 %v1378
    %1846 = vmatpush2.bf16.msra.mxu0 %v1377
    %1847 = vmatprep.subr.bf16.mxu0 %v1374
    %1848 = vmatpush2.bf16.msra.mxu0 %v1373
    %1849 = vmatprep.subr.bf16.mxu0 %v1370
    %1850 = vmatpush2.bf16.msra.mxu0 %v1369
    %1851 = vmatprep.subr.bf16.mxu0 %v1366
    %1852 = vmatpush2.bf16.msra.mxu0 %v1365
    %1853 = vmatprep.subr.bf16.mxu0 %v1362
    %1854 = vmatpush2.bf16.msra.mxu0 %v1361
    %1855 = vmatprep.subr.bf16.mxu0 %v1358
    %1856 = vmatpush2.bf16.msra.mxu0 %v1357
    %1857 = vmatprep.subr.bf16.mxu0 %v1354
    %1858 = vmatpush2.bf16.msra.mxu0 %v1353
    %1859 = vmatprep.subr.bf16.mxu0 %v1350
    %1860 = vmatpush2.bf16.msra.mxu0 %v1349
    %1861 = vmatprep.mubr.bf16.mxu0 %v264
    %1862 = vmatmul.mubr.bf16.gmra.mxu0 %v263
    %v1863 = vpop.f32.mrf.mxu0
    %v1864 = vadd.f32 %v532, %v1863
    %v1865 = vpop.f32.mrf.mxu0
    %v1866 = vadd.f32 %v536, %v1865
    %v1867 = vpop.f32.mrf.mxu0
    %v1868 = vadd.f32 %v532, %v1867
    %v1869 = vpop.f32.mrf.mxu0
    %v1870 = vadd.f32 %v536, %v1869
    %1871 = vdwg.mxu0
    %1872 = vmatprep.subr.bf16.mxu0 %v1410
    %1873 = vmatpush1.bf16.msra.mxu0 %v1409
    %1874 = vmatprep.subr.bf16.mxu0 %v1406
    %1875 = vmatpush1.bf16.msra.mxu0 %v1405
    %1876 = vmatprep.subr.bf16.mxu0 %v1402
    %1877 = vmatpush1.bf16.msra.mxu0 %v1401
    %1878 = vmatprep.subr.bf16.mxu0 %v1398
    %1879 = vmatpush1.bf16.msra.mxu0 %v1397
    %1880 = vmatprep.subr.bf16.mxu0 %v1394
    %1881 = vmatpush1.bf16.msra.mxu0 %v1393
    %1882 = vmatprep.subr.bf16.mxu0 %v1390
    %1883 = vmatpush1.bf16.msra.mxu0 %v1389
    %1884 = vmatprep.subr.bf16.mxu0 %v1386
    %1885 = vmatpush1.bf16.msra.mxu0 %v1385
    %1886 = vmatprep.subr.bf16.mxu0 %v1382
    %1887 = vmatpush1.bf16.msra.mxu0 %v1381
    %1888 = vmatprep.subr.bf16.mxu0 %v1442
    %1889 = vmatpush2.bf16.msra.mxu0 %v1441
    %1890 = vmatprep.subr.bf16.mxu0 %v1438
    %1891 = vmatpush2.bf16.msra.mxu0 %v1437
    %1892 = vmatprep.subr.bf16.mxu0 %v1434
    %1893 = vmatpush2.bf16.msra.mxu0 %v1433
    %1894 = vmatprep.subr.bf16.mxu0 %v1430
    %1895 = vmatpush2.bf16.msra.mxu0 %v1429
    %1896 = vmatprep.subr.bf16.mxu0 %v1426
    %1897 = vmatpush2.bf16.msra.mxu0 %v1425
    %1898 = vmatprep.subr.bf16.mxu0 %v1422
    %1899 = vmatpush2.bf16.msra.mxu0 %v1421
    %1900 = vmatprep.subr.bf16.mxu0 %v1418
    %1901 = vmatpush2.bf16.msra.mxu0 %v1417
    %1902 = vmatprep.subr.bf16.mxu0 %v1414
    %1903 = vmatpush2.bf16.msra.mxu0 %v1413
    %1904 = vmatprep.mubr.bf16.mxu0 %v266
    %1905 = vmatmul.mubr.bf16.gmra.mxu0 %v265
    %v1906 = vpop.f32.mrf.mxu0
    %v1907 = vadd.f32 %v1864, %v1906
    %v1908 = vpop.f32.mrf.mxu0
    %v1909 = vadd.f32 %v1866, %v1908
    %v1910 = vpop.f32.mrf.mxu0
    %v1911 = vadd.f32 %v1868, %v1910
    %v1912 = vpop.f32.mrf.mxu0
    %v1913 = vadd.f32 %v1870, %v1912
    %1914 = vdwg.mxu0
    %1915 = vmatprep.subr.bf16.mxu0 %v1474
    %1916 = vmatpush1.bf16.msra.mxu0 %v1473
    %1917 = vmatprep.subr.bf16.mxu0 %v1470
    %1918 = vmatpush1.bf16.msra.mxu0 %v1469
    %1919 = vmatprep.subr.bf16.mxu0 %v1466
    %1920 = vmatpush1.bf16.msra.mxu0 %v1465
    %1921 = vmatprep.subr.bf16.mxu0 %v1462
    %1922 = vmatpush1.bf16.msra.mxu0 %v1461
    %1923 = vmatprep.subr.bf16.mxu0 %v1458
    %1924 = vmatpush1.bf16.msra.mxu0 %v1457
    %1925 = vmatprep.subr.bf16.mxu0 %v1454
    %1926 = vmatpush1.bf16.msra.mxu0 %v1453
    %1927 = vmatprep.subr.bf16.mxu0 %v1450
    %1928 = vmatpush1.bf16.msra.mxu0 %v1449
    %1929 = vmatprep.subr.bf16.mxu0 %v1446
    %1930 = vmatpush1.bf16.msra.mxu0 %v1445
    %1931 = vmatprep.subr.bf16.mxu0 %v1506
    %1932 = vmatpush2.bf16.msra.mxu0 %v1505
    %1933 = vmatprep.subr.bf16.mxu0 %v1502
    %1934 = vmatpush2.bf16.msra.mxu0 %v1501
    %1935 = vmatprep.subr.bf16.mxu0 %v1498
    %1936 = vmatpush2.bf16.msra.mxu0 %v1497
    %1937 = vmatprep.subr.bf16.mxu0 %v1494
    %1938 = vmatpush2.bf16.msra.mxu0 %v1493
    %1939 = vmatprep.subr.bf16.mxu0 %v1490
    %1940 = vmatpush2.bf16.msra.mxu0 %v1489
    %1941 = vmatprep.subr.bf16.mxu0 %v1486
    %1942 = vmatpush2.bf16.msra.mxu0 %v1485
    %1943 = vmatprep.subr.bf16.mxu0 %v1482
    %1944 = vmatpush2.bf16.msra.mxu0 %v1481
    %1945 = vmatprep.subr.bf16.mxu0 %v1478
    %1946 = vmatpush2.bf16.msra.mxu0 %v1477
    %1947 = vmatprep.mubr.bf16.mxu0 %v268
    %1948 = vmatmul.mubr.bf16.gmra.mxu0 %v267
    %v1949 = vpop.f32.mrf.mxu0
    %v1950 = vadd.f32 %v1907, %v1949
    %v1951 = vpop.f32.mrf.mxu0
    %v1952 = vadd.f32 %v1909, %v1951
    %v1953 = vpop.f32.mrf.mxu0
    %v1954 = vadd.f32 %v1911, %v1953
    %v1955 = vpop.f32.mrf.mxu0
    %v1956 = vadd.f32 %v1913, %v1955
    %1957 = vdwg.mxu0
    %1958 = vmatprep.subr.bf16.mxu0 %v1538
    %1959 = vmatpush1.bf16.msra.mxu0 %v1537
    %1960 = vmatprep.subr.bf16.mxu0 %v1534
    %1961 = vmatpush1.bf16.msra.mxu0 %v1533
    %1962 = vmatprep.subr.bf16.mxu0 %v1530
    %1963 = vmatpush1.bf16.msra.mxu0 %v1529
    %1964 = vmatprep.subr.bf16.mxu0 %v1526
    %1965 = vmatpush1.bf16.msra.mxu0 %v1525
    %1966 = vmatprep.subr.bf16.mxu0 %v1522
    %1967 = vmatpush1.bf16.msra.mxu0 %v1521
    %1968 = vmatprep.subr.bf16.mxu0 %v1518
    %1969 = vmatpush1.bf16.msra.mxu0 %v1517
    %1970 = vmatprep.subr.bf16.mxu0 %v1514
    %1971 = vmatpush1.bf16.msra.mxu0 %v1513
    %1972 = vmatprep.subr.bf16.mxu0 %v1510
    %1973 = vmatpush1.bf16.msra.mxu0 %v1509
    %1974 = vmatprep.subr.bf16.mxu0 %v1570
    %1975 = vmatpush2.bf16.msra.mxu0 %v1569
    %1976 = vmatprep.subr.bf16.mxu0 %v1566
    %1977 = vmatpush2.bf16.msra.mxu0 %v1565
    %1978 = vmatprep.subr.bf16.mxu0 %v1562
    %1979 = vmatpush2.bf16.msra.mxu0 %v1561
    %1980 = vmatprep.subr.bf16.mxu0 %v1558
    %1981 = vmatpush2.bf16.msra.mxu0 %v1557
    %1982 = vmatprep.subr.bf16.mxu0 %v1554
    %1983 = vmatpush2.bf16.msra.mxu0 %v1553
    %1984 = vmatprep.subr.bf16.mxu0 %v1550
    %1985 = vmatpush2.bf16.msra.mxu0 %v1549
    %1986 = vmatprep.subr.bf16.mxu0 %v1546
    %1987 = vmatpush2.bf16.msra.mxu0 %v1545
    %1988 = vmatprep.subr.bf16.mxu0 %v1542
    %1989 = vmatpush2.bf16.msra.mxu0 %v1541
    %1990 = vmatprep.mubr.bf16.mxu0 %v270
    %1991 = vmatmul.mubr.bf16.gmra.mxu0 %v269
    %v1992 = vpop.f32.mrf.mxu0
    %v1993 = vadd.f32 %v1950, %v1992
    %v1994 = vpop.f32.mrf.mxu0
    %v1995 = vadd.f32 %v1952, %v1994
    %v1996 = vpop.f32.mrf.mxu0
    %v1997 = vadd.f32 %v1954, %v1996
    %v1998 = vpop.f32.mrf.mxu0
    %v1999 = vadd.f32 %v1956, %v1998
    %2000 = vdwg.mxu0
    %2001 = vmatprep.subr.bf16.mxu0 %v1348
    %2002 = vmatpush1.bf16.msra.mxu0 %v1347
    %2003 = vmatprep.subr.bf16.mxu0 %v1344
    %2004 = vmatpush1.bf16.msra.mxu0 %v1343
    %2005 = vmatprep.subr.bf16.mxu0 %v1340
    %2006 = vmatpush1.bf16.msra.mxu0 %v1339
    %2007 = vmatprep.subr.bf16.mxu0 %v1336
    %2008 = vmatpush1.bf16.msra.mxu0 %v1335
    %2009 = vmatprep.subr.bf16.mxu0 %v1332
    %2010 = vmatpush1.bf16.msra.mxu0 %v1331
    %2011 = vmatprep.subr.bf16.mxu0 %v1328
    %2012 = vmatpush1.bf16.msra.mxu0 %v1327
    %2013 = vmatprep.subr.bf16.mxu0 %v1324
    %2014 = vmatpush1.bf16.msra.mxu0 %v1323
    %2015 = vmatprep.subr.bf16.mxu0 %v1320
    %2016 = vmatpush1.bf16.msra.mxu0 %v1319
    %2017 = vmatprep.subr.bf16.mxu0 %v1380
    %2018 = vmatpush2.bf16.msra.mxu0 %v1379
    %2019 = vmatprep.subr.bf16.mxu0 %v1376
    %2020 = vmatpush2.bf16.msra.mxu0 %v1375
    %2021 = vmatprep.subr.bf16.mxu0 %v1372
    %2022 = vmatpush2.bf16.msra.mxu0 %v1371
    %2023 = vmatprep.subr.bf16.mxu0 %v1368
    %2024 = vmatpush2.bf16.msra.mxu0 %v1367
    %2025 = vmatprep.subr.bf16.mxu0 %v1364
    %2026 = vmatpush2.bf16.msra.mxu0 %v1363
    %2027 = vmatprep.subr.bf16.mxu0 %v1360
    %2028 = vmatpush2.bf16.msra.mxu0 %v1359
    %2029 = vmatprep.subr.bf16.mxu0 %v1356
    %2030 = vmatpush2.bf16.msra.mxu0 %v1355
    %2031 = vmatprep.subr.bf16.mxu0 %v1352
    %2032 = vmatpush2.bf16.msra.mxu0 %v1351
    %2033 = vmatprep.mubr.bf16.mxu0 %v264
    %2034 = vmatmul.mubr.bf16.gmra.mxu0 %v263
    %v2035 = vpop.f32.mrf.mxu0
    %v2036 = vadd.f32 %v540, %v2035
    %v2037 = vpop.f32.mrf.mxu0
    %v2038 = vadd.f32 %v544, %v2037
    %v2039 = vpop.f32.mrf.mxu0
    %v2040 = vadd.f32 %v540, %v2039
    %v2041 = vpop.f32.mrf.mxu0
    %v2042 = vadd.f32 %v544, %v2041
    %2043 = vdwg.mxu0
    %2044 = vmatprep.subr.bf16.mxu0 %v1412
    %2045 = vmatpush1.bf16.msra.mxu0 %v1411
    %2046 = vmatprep.subr.bf16.mxu0 %v1408
    %2047 = vmatpush1.bf16.msra.mxu0 %v1407
    %2048 = vmatprep.subr.bf16.mxu0 %v1404
    %2049 = vmatpush1.bf16.msra.mxu0 %v1403
    %2050 = vmatprep.subr.bf16.mxu0 %v1400
    %2051 = vmatpush1.bf16.msra.mxu0 %v1399
    %2052 = vmatprep.subr.bf16.mxu0 %v1396
    %2053 = vmatpush1.bf16.msra.mxu0 %v1395
    %2054 = vmatprep.subr.bf16.mxu0 %v1392
    %2055 = vmatpush1.bf16.msra.mxu0 %v1391
    %2056 = vmatprep.subr.bf16.mxu0 %v1388
    %2057 = vmatpush1.bf16.msra.mxu0 %v1387
    %2058 = vmatprep.subr.bf16.mxu0 %v1384
    %2059 = vmatpush1.bf16.msra.mxu0 %v1383
    %2060 = vmatprep.subr.bf16.mxu0 %v1444
    %2061 = vmatpush2.bf16.msra.mxu0 %v1443
    %2062 = vmatprep.subr.bf16.mxu0 %v1440
    %2063 = vmatpush2.bf16.msra.mxu0 %v1439
    %2064 = vmatprep.subr.bf16.mxu0 %v1436
    %2065 = vmatpush2.bf16.msra.mxu0 %v1435
    %2066 = vmatprep.subr.bf16.mxu0 %v1432
    %2067 = vmatpush2.bf16.msra.mxu0 %v1431
    %2068 = vmatprep.subr.bf16.mxu0 %v1428
    %2069 = vmatpush2.bf16.msra.mxu0 %v1427
    %2070 = vmatprep.subr.bf16.mxu0 %v1424
    %2071 = vmatpush2.bf16.msra.mxu0 %v1423
    %2072 = vmatprep.subr.bf16.mxu0 %v1420
    %2073 = vmatpush2.bf16.msra.mxu0 %v1419
    %2074 = vmatprep.subr.bf16.mxu0 %v1416
    %2075 = vmatpush2.bf16.msra.mxu0 %v1415
    %2076 = vmatprep.mubr.bf16.mxu0 %v266
    %2077 = vmatmul.mubr.bf16.gmra.mxu0 %v265
    %v2078 = vpop.f32.mrf.mxu0
    %v2079 = vadd.f32 %v2036, %v2078
    %v2080 = vpop.f32.mrf.mxu0
    %v2081 = vadd.f32 %v2038, %v2080
    %v2082 = vpop.f32.mrf.mxu0
    %v2083 = vadd.f32 %v2040, %v2082
    %v2084 = vpop.f32.mrf.mxu0
    %v2085 = vadd.f32 %v2042, %v2084
    %2086 = vdwg.mxu0
    %2087 = vmatprep.subr.bf16.mxu0 %v1476
    %2088 = vmatpush1.bf16.msra.mxu0 %v1475
    %2089 = vmatprep.subr.bf16.mxu0 %v1472
    %2090 = vmatpush1.bf16.msra.mxu0 %v1471
    %2091 = vmatprep.subr.bf16.mxu0 %v1468
    %2092 = vmatpush1.bf16.msra.mxu0 %v1467
    %2093 = vmatprep.subr.bf16.mxu0 %v1464
    %2094 = vmatpush1.bf16.msra.mxu0 %v1463
    %2095 = vmatprep.subr.bf16.mxu0 %v1460
    %2096 = vmatpush1.bf16.msra.mxu0 %v1459
    %2097 = vmatprep.subr.bf16.mxu0 %v1456
    %2098 = vmatpush1.bf16.msra.mxu0 %v1455
    %2099 = vmatprep.subr.bf16.mxu0 %v1452
    %2100 = vmatpush1.bf16.msra.mxu0 %v1451
    %2101 = vmatprep.subr.bf16.mxu0 %v1448
    %2102 = vmatpush1.bf16.msra.mxu0 %v1447
    %2103 = vmatprep.subr.bf16.mxu0 %v1508
    %2104 = vmatpush2.bf16.msra.mxu0 %v1507
    %2105 = vmatprep.subr.bf16.mxu0 %v1504
    %2106 = vmatpush2.bf16.msra.mxu0 %v1503
    %2107 = vmatprep.subr.bf16.mxu0 %v1500
    %2108 = vmatpush2.bf16.msra.mxu0 %v1499
    %2109 = vmatprep.subr.bf16.mxu0 %v1496
    %2110 = vmatpush2.bf16.msra.mxu0 %v1495
    %2111 = vmatprep.subr.bf16.mxu0 %v1492
    %2112 = vmatpush2.bf16.msra.mxu0 %v1491
    %2113 = vmatprep.subr.bf16.mxu0 %v1488
    %2114 = vmatpush2.bf16.msra.mxu0 %v1487
    %2115 = vmatprep.subr.bf16.mxu0 %v1484
    %2116 = vmatpush2.bf16.msra.mxu0 %v1483
    %2117 = vmatprep.subr.bf16.mxu0 %v1480
    %2118 = vmatpush2.bf16.msra.mxu0 %v1479
    %2119 = vmatprep.mubr.bf16.mxu0 %v268
    %2120 = vmatmul.mubr.bf16.gmra.mxu0 %v267
    %v2121 = vpop.f32.mrf.mxu0
    %v2122 = vadd.f32 %v2079, %v2121
    %v2123 = vpop.f32.mrf.mxu0
    %v2124 = vadd.f32 %v2081, %v2123
    %v2125 = vpop.f32.mrf.mxu0
    %v2126 = vadd.f32 %v2083, %v2125
    %v2127 = vpop.f32.mrf.mxu0
    %v2128 = vadd.f32 %v2085, %v2127
    %2129 = vdwg.mxu0
    %2130 = vmatprep.subr.bf16.mxu0 %v1540
    %2131 = vmatpush1.bf16.msra.mxu0 %v1539
    %2132 = vmatprep.subr.bf16.mxu0 %v1536
    %2133 = vmatpush1.bf16.msra.mxu0 %v1535
    %2134 = vmatprep.subr.bf16.mxu0 %v1532
    %2135 = vmatpush1.bf16.msra.mxu0 %v1531
    %2136 = vmatprep.subr.bf16.mxu0 %v1528
    %2137 = vmatpush1.bf16.msra.mxu0 %v1527
    %2138 = vmatprep.subr.bf16.mxu0 %v1524
    %2139 = vmatpush1.bf16.msra.mxu0 %v1523
    %2140 = vmatprep.subr.bf16.mxu0 %v1520
    %2141 = vmatpush1.bf16.msra.mxu0 %v1519
    %2142 = vmatprep.subr.bf16.mxu0 %v1516
    %2143 = vmatpush1.bf16.msra.mxu0 %v1515
    %2144 = vmatprep.subr.bf16.mxu0 %v1512
    %2145 = vmatpush1.bf16.msra.mxu0 %v1511
    %2146 = vmatprep.subr.bf16.mxu0 %v1572
    %2147 = vmatpush2.bf16.msra.mxu0 %v1571
    %2148 = vmatprep.subr.bf16.mxu0 %v1568
    %2149 = vmatpush2.bf16.msra.mxu0 %v1567
    %2150 = vmatprep.subr.bf16.mxu0 %v1564
    %2151 = vmatpush2.bf16.msra.mxu0 %v1563
    %2152 = vmatprep.subr.bf16.mxu0 %v1560
    %2153 = vmatpush2.bf16.msra.mxu0 %v1559
    %2154 = vmatprep.subr.bf16.mxu0 %v1556
    %2155 = vmatpush2.bf16.msra.mxu0 %v1555
    %2156 = vmatprep.subr.bf16.mxu0 %v1552
    %2157 = vmatpush2.bf16.msra.mxu0 %v1551
    %2158 = vmatprep.subr.bf16.mxu0 %v1548
    %2159 = vmatpush2.bf16.msra.mxu0 %v1547
    %2160 = vmatprep.subr.bf16.mxu0 %v1544
    %2161 = vmatpush2.bf16.msra.mxu0 %v1543
    %2162 = vmatprep.mubr.bf16.mxu0 %v270
    %2163 = vmatmul.mubr.bf16.gmra.mxu0 %v269
    %v2164 = vpop.f32.mrf.mxu0
    %v2165 = vadd.f32 %v2122, %v2164
    %v2166 = vpop.f32.mrf.mxu0
    %v2167 = vadd.f32 %v2124, %v2166
    %v2168 = vpop.f32.mrf.mxu0
    %v2169 = vadd.f32 %v2126, %v2168
    %v2170 = vpop.f32.mrf.mxu0
    %v2171 = vadd.f32 %v2128, %v2170
    %2172 = vdwg.mxu0
    %v2173 = vmul.f32 %v1993, 0.2
    %v2174 = vmul.f32 %v1995, 0.2
    %v2175 = vmul.f32 %v2165, 0.2
    %v2176 = vmul.f32 %v2167, 0.2
    %v2177 = vmul.f32 %v1997, 0.2
    %v2178 = vmul.f32 %v1999, 0.2
    %v2179 = vmul.f32 %v2169, 0.2
    %v2180 = vmul.f32 %v2171, 0.2
    %v2181 = vmax.f32 %v1993, %v2173
    %v2182 = vmax.f32 %v1995, %v2174
    %v2183 = vmax.f32 %v2165, %v2175
    %v2184 = vmax.f32 %v2167, %v2176
    %v2185 = vmax.f32 %v1997, %v2177
    %v2186 = vmax.f32 %v1999, %v2178
    %v2187 = vmax.f32 %v2169, %v2179
    %v2188 = vmax.f32 %v2171, %v2180
    %v2189 = vpack.c.bf16 %v2185, %v2181
    %v2190 = vpack.c.bf16 %v2186, %v2182
    %v2191 = vpack.c.bf16 %v2187, %v2183
    %v2192 = vpack.c.bf16 %v2188, %v2184
    %v2193 = vld [vmem:[#allocation8] sm:$0xff]
    %v2194 = vld [vmem:[#allocation8 + $0x8] sm:$0xff]
    %v2195 = vld [vmem:[#allocation8 + $0x10] sm:$0xff]
    %v2196 = vld [vmem:[#allocation8 + $0x18] sm:$0xff]
    %v2197 = vld [vmem:[#allocation8 + $0x20] sm:$0xff]
    %v2198 = vld [vmem:[#allocation8 + $0x28] sm:$0xff]
    %v2199 = vld [vmem:[#allocation8 + $0x30] sm:$0xff]
    %v2200 = vld [vmem:[#allocation8 + $0x38] sm:$0xff]
    %v2201 = vld [vmem:[#allocation8 + $0x40] sm:$0xff]
    %v2202 = vld [vmem:[#allocation8 + $0x48] sm:$0xff]
    %v2203 = vld [vmem:[#allocation8 + $0x50] sm:$0xff]
    %v2204 = vld [vmem:[#allocation8 + $0x58] sm:$0xff]
    %v2205 = vld [vmem:[#allocation8 + $0x60] sm:$0xff]
    %v2206 = vld [vmem:[#allocation8 + $0x68] sm:$0xff]
    %v2207 = vld [vmem:[#allocation8 + $0x70] sm:$0xff]
    %v2208 = vld [vmem:[#allocation8 + $0x78] sm:$0xff]
    %v2209 = vld [vmem:[#allocation8 + $0x80] sm:$0xff]
    %v2210 = vld [vmem:[#allocation8 + $0x88] sm:$0xff]
    %v2211 = vld [vmem:[#allocation8 + $0x90] sm:$0xff]
    %v2212 = vld [vmem:[#allocation8 + $0x98] sm:$0xff]
    %v2213 = vld [vmem:[#allocation8 + $0xa0] sm:$0xff]
    %v2214 = vld [vmem:[#allocation8 + $0xa8] sm:$0xff]
    %v2215 = vld [vmem:[#allocation8 + $0xb0] sm:$0xff]
    %v2216 = vld [vmem:[#allocation8 + $0xb8] sm:$0xff]
    %v2217 = vld [vmem:[#allocation8 + $0xc0] sm:$0xff]
    %v2218 = vld [vmem:[#allocation8 + $0xc8] sm:$0xff]
    %v2219 = vld [vmem:[#allocation8 + $0xd0] sm:$0xff]
    %v2220 = vld [vmem:[#allocation8 + $0xd8] sm:$0xff]
    %v2221 = vld [vmem:[#allocation8 + $0xe0] sm:$0xff]
    %v2222 = vld [vmem:[#allocation8 + $0xe8] sm:$0xff]
    %v2223 = vld [vmem:[#allocation8 + $0xf0] sm:$0xff]
    %v2224 = vld [vmem:[#allocation8 + $0xf8] sm:$0xff]
    %v2225 = vld [vmem:[#allocation8 + $0x100] sm:$0xff]
    %v2226 = vld [vmem:[#allocation8 + $0x108] sm:$0xff]
    %v2227 = vld [vmem:[#allocation8 + $0x110] sm:$0xff]
    %v2228 = vld [vmem:[#allocation8 + $0x118] sm:$0xff]
    %v2229 = vld [vmem:[#allocation8 + $0x120] sm:$0xff]
    %v2230 = vld [vmem:[#allocation8 + $0x128] sm:$0xff]
    %v2231 = vld [vmem:[#allocation8 + $0x130] sm:$0xff]
    %v2232 = vld [vmem:[#allocation8 + $0x138] sm:$0xff]
    %v2233 = vld [vmem:[#allocation8 + $0x140] sm:$0xff]
    %v2234 = vld [vmem:[#allocation8 + $0x148] sm:$0xff]
    %v2235 = vld [vmem:[#allocation8 + $0x150] sm:$0xff]
    %v2236 = vld [vmem:[#allocation8 + $0x158] sm:$0xff]
    %v2237 = vld [vmem:[#allocation8 + $0x160] sm:$0xff]
    %v2238 = vld [vmem:[#allocation8 + $0x168] sm:$0xff]
    %v2239 = vld [vmem:[#allocation8 + $0x170] sm:$0xff]
    %v2240 = vld [vmem:[#allocation8 + $0x178] sm:$0xff]
    %v2241 = vld [vmem:[#allocation8 + $0x180] sm:$0xff]
    %v2242 = vld [vmem:[#allocation8 + $0x188] sm:$0xff]
    %v2243 = vld [vmem:[#allocation8 + $0x190] sm:$0xff]
    %v2244 = vld [vmem:[#allocation8 + $0x198] sm:$0xff]
    %v2245 = vld [vmem:[#allocation8 + $0x1a0] sm:$0xff]
    %v2246 = vld [vmem:[#allocation8 + $0x1a8] sm:$0xff]
    %v2247 = vld [vmem:[#allocation8 + $0x1b0] sm:$0xff]
    %v2248 = vld [vmem:[#allocation8 + $0x1b8] sm:$0xff]
    %v2249 = vld [vmem:[#allocation8 + $0x1c0] sm:$0xff]
    %v2250 = vld [vmem:[#allocation8 + $0x1c8] sm:$0xff]
    %v2251 = vld [vmem:[#allocation8 + $0x1d0] sm:$0xff]
    %v2252 = vld [vmem:[#allocation8 + $0x1d8] sm:$0xff]
    %v2253 = vld [vmem:[#allocation8 + $0x1e0] sm:$0xff]
    %v2254 = vld [vmem:[#allocation8 + $0x1e8] sm:$0xff]
    %v2255 = vld [vmem:[#allocation8 + $0x1f0] sm:$0xff]
    %v2256 = vld [vmem:[#allocation8 + $0x1f8] sm:$0xff]
    %v2257 = vld [vmem:[%s4] sm:$0x3]
    %v2259 = vlaneseq
    %v2260 = vshrl.u32 %v2259, 7
    %v2261 = vsub.s32 0, %v2260
    %v2262 = vrot.slane %v2257, %v2261
    %v2263 = vlaneseq
    %v2264 = vshrl.u32 %v2263, 7
    %v2265 = vsub.s32 1, %v2264
    %v2266 = vrot.slane %v2257, %v2265
    %v2333 = vunpack.c.l.b16 %v2193
    %v2334 = vunpack.c.h.b16 %v2193
    %v2335 = vunpack.c.l.b16 %v2194
    %v2336 = vunpack.c.h.b16 %v2194
    %v2337 = vunpack.c.l.b16 %v2195
    %v2338 = vunpack.c.h.b16 %v2195
    %v2339 = vunpack.c.l.b16 %v2196
    %v2340 = vunpack.c.h.b16 %v2196
    %v2341 = vunpack.c.l.b16 %v2197
    %v2342 = vunpack.c.h.b16 %v2197
    %v2343 = vunpack.c.l.b16 %v2198
    %v2344 = vunpack.c.h.b16 %v2198
    %v2345 = vunpack.c.l.b16 %v2199
    %v2346 = vunpack.c.h.b16 %v2199
    %v2347 = vunpack.c.l.b16 %v2200
    %v2348 = vunpack.c.h.b16 %v2200
    %v2349 = vunpack.c.l.b16 %v2201
    %v2350 = vunpack.c.h.b16 %v2201
    %v2351 = vunpack.c.l.b16 %v2202
    %v2352 = vunpack.c.h.b16 %v2202
    %v2353 = vunpack.c.l.b16 %v2203
    %v2354 = vunpack.c.h.b16 %v2203
    %v2355 = vunpack.c.l.b16 %v2204
    %v2356 = vunpack.c.h.b16 %v2204
    %v2357 = vunpack.c.l.b16 %v2205
    %v2358 = vunpack.c.h.b16 %v2205
    %v2359 = vunpack.c.l.b16 %v2206
    %v2360 = vunpack.c.h.b16 %v2206
    %v2361 = vunpack.c.l.b16 %v2207
    %v2362 = vunpack.c.h.b16 %v2207
    %v2363 = vunpack.c.l.b16 %v2208
    %v2364 = vunpack.c.h.b16 %v2208
    %v2365 = vunpack.c.l.b16 %v2209
    %v2366 = vunpack.c.h.b16 %v2209
    %v2367 = vunpack.c.l.b16 %v2210
    %v2368 = vunpack.c.h.b16 %v2210
    %v2369 = vunpack.c.l.b16 %v2211
    %v2370 = vunpack.c.h.b16 %v2211
    %v2371 = vunpack.c.l.b16 %v2212
    %v2372 = vunpack.c.h.b16 %v2212
    %v2373 = vunpack.c.l.b16 %v2213
    %v2374 = vunpack.c.h.b16 %v2213
    %v2375 = vunpack.c.l.b16 %v2214
    %v2376 = vunpack.c.h.b16 %v2214
    %v2377 = vunpack.c.l.b16 %v2215
    %v2378 = vunpack.c.h.b16 %v2215
    %v2379 = vunpack.c.l.b16 %v2216
    %v2380 = vunpack.c.h.b16 %v2216
    %v2381 = vunpack.c.l.b16 %v2217
    %v2382 = vunpack.c.h.b16 %v2217
    %v2383 = vunpack.c.l.b16 %v2218
    %v2384 = vunpack.c.h.b16 %v2218
    %v2385 = vunpack.c.l.b16 %v2219
    %v2386 = vunpack.c.h.b16 %v2219
    %v2387 = vunpack.c.l.b16 %v2220
    %v2388 = vunpack.c.h.b16 %v2220
    %v2389 = vunpack.c.l.b16 %v2221
    %v2390 = vunpack.c.h.b16 %v2221
    %v2391 = vunpack.c.l.b16 %v2222
    %v2392 = vunpack.c.h.b16 %v2222
    %v2393 = vunpack.c.l.b16 %v2223
    %v2394 = vunpack.c.h.b16 %v2223
    %v2395 = vunpack.c.l.b16 %v2224
    %v2396 = vunpack.c.h.b16 %v2224
    %v2397 = vunpack.c.l.b16 %v2225
    %v2398 = vunpack.c.h.b16 %v2225
    %v2399 = vunpack.c.l.b16 %v2226
    %v2400 = vunpack.c.h.b16 %v2226
    %v2401 = vunpack.c.l.b16 %v2227
    %v2402 = vunpack.c.h.b16 %v2227
    %v2403 = vunpack.c.l.b16 %v2228
    %v2404 = vunpack.c.h.b16 %v2228
    %v2405 = vunpack.c.l.b16 %v2229
    %v2406 = vunpack.c.h.b16 %v2229
    %v2407 = vunpack.c.l.b16 %v2230
    %v2408 = vunpack.c.h.b16 %v2230
    %v2409 = vunpack.c.l.b16 %v2231
    %v2410 = vunpack.c.h.b16 %v2231
    %v2411 = vunpack.c.l.b16 %v2232
    %v2412 = vunpack.c.h.b16 %v2232
    %v2413 = vunpack.c.l.b16 %v2233
    %v2414 = vunpack.c.h.b16 %v2233
    %v2415 = vunpack.c.l.b16 %v2234
    %v2416 = vunpack.c.h.b16 %v2234
    %v2417 = vunpack.c.l.b16 %v2235
    %v2418 = vunpack.c.h.b16 %v2235
    %v2419 = vunpack.c.l.b16 %v2236
    %v2420 = vunpack.c.h.b16 %v2236
    %v2421 = vunpack.c.l.b16 %v2237
    %v2422 = vunpack.c.h.b16 %v2237
    %v2423 = vunpack.c.l.b16 %v2238
    %v2424 = vunpack.c.h.b16 %v2238
    %v2425 = vunpack.c.l.b16 %v2239
    %v2426 = vunpack.c.h.b16 %v2239
    %v2427 = vunpack.c.l.b16 %v2240
    %v2428 = vunpack.c.h.b16 %v2240
    %v2429 = vunpack.c.l.b16 %v2241
    %v2430 = vunpack.c.h.b16 %v2241
    %v2431 = vunpack.c.l.b16 %v2242
    %v2432 = vunpack.c.h.b16 %v2242
    %v2433 = vunpack.c.l.b16 %v2243
    %v2434 = vunpack.c.h.b16 %v2243
    %v2435 = vunpack.c.l.b16 %v2244
    %v2436 = vunpack.c.h.b16 %v2244
    %v2437 = vunpack.c.l.b16 %v2245
    %v2438 = vunpack.c.h.b16 %v2245
    %v2439 = vunpack.c.l.b16 %v2246
    %v2440 = vunpack.c.h.b16 %v2246
    %v2441 = vunpack.c.l.b16 %v2247
    %v2442 = vunpack.c.h.b16 %v2247
    %v2443 = vunpack.c.l.b16 %v2248
    %v2444 = vunpack.c.h.b16 %v2248
    %v2445 = vunpack.c.l.b16 %v2249
    %v2446 = vunpack.c.h.b16 %v2249
    %v2447 = vunpack.c.l.b16 %v2250
    %v2448 = vunpack.c.h.b16 %v2250
    %v2449 = vunpack.c.l.b16 %v2251
    %v2450 = vunpack.c.h.b16 %v2251
    %v2451 = vunpack.c.l.b16 %v2252
    %v2452 = vunpack.c.h.b16 %v2252
    %v2453 = vunpack.c.l.b16 %v2253
    %v2454 = vunpack.c.h.b16 %v2253
    %v2455 = vunpack.c.l.b16 %v2254
    %v2456 = vunpack.c.h.b16 %v2254
    %v2457 = vunpack.c.l.b16 %v2255
    %v2458 = vunpack.c.h.b16 %v2255
    %v2459 = vunpack.c.l.b16 %v2256
    %v2460 = vunpack.c.h.b16 %v2256
    %v2461 = vpack.c.b16 %v2335, %v2333
    %v2462 = vpack.c.b16 %v2336, %v2334
    %v2463 = vpack.c.b16 %v2339, %v2337
    %v2464 = vpack.c.b16 %v2340, %v2338
    %v2465 = vpack.c.b16 %v2343, %v2341
    %v2466 = vpack.c.b16 %v2344, %v2342
    %v2467 = vpack.c.b16 %v2347, %v2345
    %v2468 = vpack.c.b16 %v2348, %v2346
    %v2469 = vpack.c.b16 %v2351, %v2349
    %v2470 = vpack.c.b16 %v2352, %v2350
    %v2471 = vpack.c.b16 %v2355, %v2353
    %v2472 = vpack.c.b16 %v2356, %v2354
    %v2473 = vpack.c.b16 %v2359, %v2357
    %v2474 = vpack.c.b16 %v2360, %v2358
    %v2475 = vpack.c.b16 %v2363, %v2361
    %v2476 = vpack.c.b16 %v2364, %v2362
    %v2477 = vpack.c.b16 %v2367, %v2365
    %v2478 = vpack.c.b16 %v2368, %v2366
    %v2479 = vpack.c.b16 %v2371, %v2369
    %v2480 = vpack.c.b16 %v2372, %v2370
    %v2481 = vpack.c.b16 %v2375, %v2373
    %v2482 = vpack.c.b16 %v2376, %v2374
    %v2483 = vpack.c.b16 %v2379, %v2377
    %v2484 = vpack.c.b16 %v2380, %v2378
    %v2485 = vpack.c.b16 %v2383, %v2381
    %v2486 = vpack.c.b16 %v2384, %v2382
    %v2487 = vpack.c.b16 %v2387, %v2385
    %v2488 = vpack.c.b16 %v2388, %v2386
    %v2489 = vpack.c.b16 %v2391, %v2389
    %v2490 = vpack.c.b16 %v2392, %v2390
    %v2491 = vpack.c.b16 %v2395, %v2393
    %v2492 = vpack.c.b16 %v2396, %v2394
    %v2493 = vpack.c.b16 %v2399, %v2397
    %v2494 = vpack.c.b16 %v2400, %v2398
    %v2495 = vpack.c.b16 %v2403, %v2401
    %v2496 = vpack.c.b16 %v2404, %v2402
    %v2497 = vpack.c.b16 %v2407, %v2405
    %v2498 = vpack.c.b16 %v2408, %v2406
    %v2499 = vpack.c.b16 %v2411, %v2409
    %v2500 = vpack.c.b16 %v2412, %v2410
    %v2501 = vpack.c.b16 %v2415, %v2413
    %v2502 = vpack.c.b16 %v2416, %v2414
    %v2503 = vpack.c.b16 %v2419, %v2417
    %v2504 = vpack.c.b16 %v2420, %v2418
    %v2505 = vpack.c.b16 %v2423, %v2421
    %v2506 = vpack.c.b16 %v2424, %v2422
    %v2507 = vpack.c.b16 %v2427, %v2425
    %v2508 = vpack.c.b16 %v2428, %v2426
    %v2509 = vpack.c.b16 %v2431, %v2429
    %v2510 = vpack.c.b16 %v2432, %v2430
    %v2511 = vpack.c.b16 %v2435, %v2433
    %v2512 = vpack.c.b16 %v2436, %v2434
    %v2513 = vpack.c.b16 %v2439, %v2437
    %v2514 = vpack.c.b16 %v2440, %v2438
    %v2515 = vpack.c.b16 %v2443, %v2441
    %v2516 = vpack.c.b16 %v2444, %v2442
    %v2517 = vpack.c.b16 %v2447, %v2445
    %v2518 = vpack.c.b16 %v2448, %v2446
    %v2519 = vpack.c.b16 %v2451, %v2449
    %v2520 = vpack.c.b16 %v2452, %v2450
    %v2521 = vpack.c.b16 %v2455, %v2453
    %v2522 = vpack.c.b16 %v2456, %v2454
    %v2523 = vpack.c.b16 %v2459, %v2457
    %v2524 = vpack.c.b16 %v2460, %v2458
    %2589 = vmatprep.subr.bf16.mxu0 %v2476
    %2590 = vmatpush1.bf16.msra.mxu0 %v2475
    %2591 = vmatprep.subr.bf16.mxu0 %v2474
    %2592 = vmatpush1.bf16.msra.mxu0 %v2473
    %2593 = vmatprep.subr.bf16.mxu0 %v2472
    %2594 = vmatpush1.bf16.msra.mxu0 %v2471
    %2595 = vmatprep.subr.bf16.mxu0 %v2470
    %2596 = vmatpush1.bf16.msra.mxu0 %v2469
    %2597 = vmatprep.subr.bf16.mxu0 %v2468
    %2598 = vmatpush1.bf16.msra.mxu0 %v2467
    %2599 = vmatprep.subr.bf16.mxu0 %v2466
    %2600 = vmatpush1.bf16.msra.mxu0 %v2465
    %2601 = vmatprep.subr.bf16.mxu0 %v2464
    %2602 = vmatpush1.bf16.msra.mxu0 %v2463
    %2603 = vmatprep.subr.bf16.mxu0 %v2462
    %2604 = vmatpush1.bf16.msra.mxu0 %v2461
    %2605 = vmatprep.subr.bf16.mxu0 %v2492
    %2606 = vmatpush2.bf16.msra.mxu0 %v2491
    %2607 = vmatprep.subr.bf16.mxu0 %v2490
    %2608 = vmatpush2.bf16.msra.mxu0 %v2489
    %2609 = vmatprep.subr.bf16.mxu0 %v2488
    %2610 = vmatpush2.bf16.msra.mxu0 %v2487
    %2611 = vmatprep.subr.bf16.mxu0 %v2486
    %2612 = vmatpush2.bf16.msra.mxu0 %v2485
    %2613 = vmatprep.subr.bf16.mxu0 %v2484
    %2614 = vmatpush2.bf16.msra.mxu0 %v2483
    %2615 = vmatprep.subr.bf16.mxu0 %v2482
    %2616 = vmatpush2.bf16.msra.mxu0 %v2481
    %2617 = vmatprep.subr.bf16.mxu0 %v2480
    %2618 = vmatpush2.bf16.msra.mxu0 %v2479
    %2619 = vmatprep.subr.bf16.mxu0 %v2478
    %2620 = vmatpush2.bf16.msra.mxu0 %v2477
    %2621 = vmatprep.mubr.bf16.mxu0 %v2190
    %2622 = vmatmul.mubr.bf16.gmra.mxu0 %v2189
    %v2623 = vpop.f32.mrf.mxu0
    %v2624 = vadd.f32 %v2262, %v2623
    %v2625 = vpop.f32.mrf.mxu0
    %v2626 = vadd.f32 %v2266, %v2625
    %v2627 = vpop.f32.mrf.mxu0
    %v2628 = vadd.f32 %v2262, %v2627
    %v2629 = vpop.f32.mrf.mxu0
    %v2630 = vadd.f32 %v2266, %v2629
    %2631 = vdwg.mxu0
    %2632 = vmatprep.subr.bf16.mxu0 %v2508
    %2633 = vmatpush1.bf16.msra.mxu0 %v2507
    %2634 = vmatprep.subr.bf16.mxu0 %v2506
    %2635 = vmatpush1.bf16.msra.mxu0 %v2505
    %2636 = vmatprep.subr.bf16.mxu0 %v2504
    %2637 = vmatpush1.bf16.msra.mxu0 %v2503
    %2638 = vmatprep.subr.bf16.mxu0 %v2502
    %2639 = vmatpush1.bf16.msra.mxu0 %v2501
    %2640 = vmatprep.subr.bf16.mxu0 %v2500
    %2641 = vmatpush1.bf16.msra.mxu0 %v2499
    %2642 = vmatprep.subr.bf16.mxu0 %v2498
    %2643 = vmatpush1.bf16.msra.mxu0 %v2497
    %2644 = vmatprep.subr.bf16.mxu0 %v2496
    %2645 = vmatpush1.bf16.msra.mxu0 %v2495
    %2646 = vmatprep.subr.bf16.mxu0 %v2494
    %2647 = vmatpush1.bf16.msra.mxu0 %v2493
    %2648 = vmatprep.subr.bf16.mxu0 %v2524
    %2649 = vmatpush2.bf16.msra.mxu0 %v2523
    %2650 = vmatprep.subr.bf16.mxu0 %v2522
    %2651 = vmatpush2.bf16.msra.mxu0 %v2521
    %2652 = vmatprep.subr.bf16.mxu0 %v2520
    %2653 = vmatpush2.bf16.msra.mxu0 %v2519
    %2654 = vmatprep.subr.bf16.mxu0 %v2518
    %2655 = vmatpush2.bf16.msra.mxu0 %v2517
    %2656 = vmatprep.subr.bf16.mxu0 %v2516
    %2657 = vmatpush2.bf16.msra.mxu0 %v2515
    %2658 = vmatprep.subr.bf16.mxu0 %v2514
    %2659 = vmatpush2.bf16.msra.mxu0 %v2513
    %2660 = vmatprep.subr.bf16.mxu0 %v2512
    %2661 = vmatpush2.bf16.msra.mxu0 %v2511
    %2662 = vmatprep.subr.bf16.mxu0 %v2510
    %2663 = vmatpush2.bf16.msra.mxu0 %v2509
    %2664 = vmatprep.mubr.bf16.mxu0 %v2192
    %2665 = vmatmul.mubr.bf16.gmra.mxu0 %v2191
    %v2666 = vpop.f32.mrf.mxu0
    %v2667 = vadd.f32 %v2624, %v2666
    %v2668 = vpop.f32.mrf.mxu0
    %v2669 = vadd.f32 %v2626, %v2668
    %v2670 = vpop.f32.mrf.mxu0
    %v2671 = vadd.f32 %v2628, %v2670
    %v2672 = vpop.f32.mrf.mxu0
    %v2673 = vadd.f32 %v2630, %v2672
    %2674 = vdwg.mxu0
    %v2675 = vmul.f32 %v2667, 0.2
    %v2676 = vmul.f32 %v2669, 0.2
    %v2677 = vmul.f32 %v2671, 0.2
    %v2678 = vmul.f32 %v2673, 0.2
    %v2679 = vmax.f32 %v2667, %v2675
    %v2680 = vmax.f32 %v2669, %v2676
    %v2681 = vmax.f32 %v2671, %v2677
    %v2682 = vmax.f32 %v2673, %v2678
    %v2683 = vld [vmem:[%s5] sm:$0x3]
    %v2684 = vpack.c.bf16 %v2681, %v2679
    %v2685 = vpack.c.bf16 %v2682, %v2680
    %v2686 = vld [vmem:[#allocation2] sm:$0x1]
    %2688 = vset.pattern.permute.xlu0 0
    %2689 = vperm.xlu0 %2688, %v2686
    %v2690 = vpop.permute.xlu0 %2689
    %v2692 = vlaneseq
    %v2693 = vshrl.u32 %v2692, 7
    %v2694 = vsub.s32 0, %v2693
    %v2695 = vrot.slane %v2690, %v2694
    %v2698 = vunpack.c.l.s4 1966171168
    %v2699 = vunpack.c.0.s8 %v2698
    %v2700 = vlaneseq
    %v2701 = vshrl.u32 %v2700, 7
    %v2702 = vsub.s32 %v2699, %v2701
    %v2703 = vrot.slane %v2683, %v2702
    %v2704 = vcombine.high %v2703, %v2703
    %v2706 = vunpack.c.l.s4 1966171168
    %v2707 = vunpack.c.0.s8 %v2706
    %v2708 = vlaneseq
    %v2709 = vshrl.u32 %v2708, 7
    %v2710 = vsub.s32 %v2707, %v2709
    %v2711 = vrot.slane %v2703, %v2710
    %v2713 = vunpack.c.l.s4 1966171168
    %v2714 = vunpack.c.0.s8 %v2713
    %v2715 = vlaneseq
    %v2716 = vshrl.u32 %v2715, 7
    %v2717 = vsub.s32 %v2714, %v2716
    %v2718 = vrot.slane %v2704, %v2717
    %2721 = vmatprep.subr.bf16.mxu0 0
    %2722 = vmatpush1.bf16.xpose.msra.mxu0 0
    %2723 = vmatprep.subr.bf16.mxu0 0
    %2724 = vmatpush1.bf16.xpose.msra.mxu0 0
    %2725 = vmatprep.subr.bf16.mxu0 0
    %2726 = vmatpush1.bf16.xpose.msra.mxu0 0
    %2727 = vmatprep.subr.bf16.mxu0 0
    %2728 = vmatpush1.bf16.xpose.msra.mxu0 0
    %2729 = vmatprep.subr.bf16.mxu0 0
    %2730 = vmatpush1.bf16.xpose.msra.mxu0 0
    %2731 = vmatprep.subr.bf16.mxu0 0
    %2732 = vmatpush1.bf16.xpose.msra.mxu0 0
    %2733 = vmatprep.subr.bf16.mxu0 0
    %2734 = vmatpush1.bf16.xpose.msra.mxu0 0
    %2735 = vmatprep.subr.bf16.mxu0 %v2685
    %2736 = vmatpush1.bf16.xpose.msra.mxu0 %v2684
    %2737 = vmatprep.subr.bf16.mxu0 0
    %2738 = vmatpush2.bf16.xpose.msra.mxu0 0
    %2739 = vmatprep.subr.bf16.mxu0 0
    %2740 = vmatpush2.bf16.xpose.msra.mxu0 0
    %2741 = vmatprep.subr.bf16.mxu0 0
    %2742 = vmatpush2.bf16.xpose.msra.mxu0 0
    %2743 = vmatprep.subr.bf16.mxu0 0
    %2744 = vmatpush2.bf16.xpose.msra.mxu0 0
    %2745 = vmatprep.subr.bf16.mxu0 0
    %2746 = vmatpush2.bf16.xpose.msra.mxu0 0
    %2747 = vmatprep.subr.bf16.mxu0 0
    %2748 = vmatpush2.bf16.xpose.msra.mxu0 0
    %2749 = vmatprep.subr.bf16.mxu0 0
    %2750 = vmatpush2.bf16.xpose.msra.mxu0 0
    %2751 = vmatprep.subr.bf16.mxu0 0
    %2752 = vmatpush2.bf16.xpose.msra.mxu0 0
    %2753 = vmatprep.mubr.bf16.mxu0 %v2718
    %2754 = vmatmul.mubr.bf16.gmra.mxu0 %v2711
    %v2755 = vpop.f32.mrf.mxu0
    %v2756 = vadd.f32 %v2695, %v2755
    %v2757 = vpop.f32.mrf.mxu0
    %v2758 = vpop.f32.mrf.mxu0
    %v2759 = vpop.f32.mrf.mxu0
    %2760 = vdwg.mxu0
    %v2761 = vsub.f32 0.0, %v2756
    %v2762 = vmul.f32 %v2761, 1.442695
    %v2763 = vpow.pop %v2762
    %v2764 = vadd.f32 %v2763, 1.0
    %v2765 = vrcp.pop %v2764
    %v2766 = vmul.f32 1.0, %v2765
    %vm2767 = vcmask 122880
    %2768 = vst.msk [vmem:[#allocation9] sm:$0x1] %vm2767, %v2766
    // Predicated region
    $region42: #{tpu_custom_call.1} parent=1 // pred_check
      _
    $region43: #{tpu_custom_call.1} parent=1 // pred_check_branch
      %2770 = sbr.rel (0) target = $region45
    $region44: #{tpu_custom_call.1} parent=1 // pred_region
      %s2772 = ssub.s32 16, 16
      %2773 = vsyncadd [#allocation5], %s2772
      %s2775 = sshll.u32 [#allocation9], 4
      %s2776 = int_to_ptr.vmem [resolvable:$true] %s2775
      %2778 = dma.vmem_to_hbm [thread:$0]  %s2776, 16, %s7, [#allocation5]
    $region45: #{tpu_custom_call.1} parent=1 // pred_fallthru
      _
    // Predicated region
    $region46: #{tpu_custom_call.1} parent=1 // pred_check
      _
    $region47: #{tpu_custom_call.1} parent=1 // pred_check_branch
      %2780 = sbr.rel (0) target = $region49
    $region48: #{tpu_custom_call.1} parent=1 // pred_region
      %2781 = dma.done [#allocation5], 16
    $region49: #{tpu_custom_call.1} parent=1 // pred_fallthru
      _
    %2782 = vsyncpa [#allocation4], 1
    %2783 = vsyncpa [#allocation7], 1
    %2784 = vsyncpa [#allocation5], 1

</llo_original>
